<compile_context>
chip_gen: v5e
topology: v5e:2x2
jax: 0.10.0
libtpu: 0.0.40
codegen_flags: <defaults>
</compile_context>

<pallas_src>
import jax
import jax.numpy as jnp
import numpy as np
from jax.experimental import pallas as pl
from jax.experimental.pallas import tpu as pltpu

E = 20                      # n_electrodes (required by the architecture)
T = 243                     # time samples
OUTPUT = 3                  # number of regression outputs
B = 2                       # batch

T1 = T - 14                 # after Conv2d(1, 10, (1, 15))    -> 229
T2 = T1 - 19                # after Conv2d(10, 10, (20, 20))  -> 210
NTAP = 15 + 20 - 1          # taps of the host-fused FIR      -> 34
K_FIR = NTAP * E            # im2col contraction length       -> 680
TP = (T2 - 75) // 15 + 1    # after AvgPool2d((1,75),(1,15))  -> 10
SEG = 256                   # lane-aligned per-sample segment in the im2col scratch
CPK_W = 160                 # width of the packed constant slab
BN_EPS = 1e-5
assert TP == 10 and T2 <= SEG


# ----------------------------------------------------------------------------
# Pallas kernel
# ----------------------------------------------------------------------------
def make_kernel(GB):
    def kernel(x_ref, xt_ref, wc_ref, cpk_ref, o_ref, im_ref):
        # ---- constants for the pre-matmul phase (loaded once per grid step)
        Wm = cpk_ref[0:E, 10:10 + E]               # (E,E)  mean_net weight
        Ws = cpk_ref[0:E, 30:30 + E]               # (E,E)  std_net weight
        bm = cpk_ref[0:E, 50:51]                   # (E,1)
        bs = cpk_ref[0:E, 51:52]                   # (E,1)

        # ---- per sample: shift/scale on the VPU, then im2col into scratch
        for g in range(GB):                        # tiny static unroll
            xb = x_ref[g]                          # (E, T)  channels on sublanes
            xtb = xt_ref[g]                        # (T, E)  time on sublanes
            # per-electrode mean / unbiased std over time, lane-oriented (1,E)
            mu_row = jnp.mean(xtb, axis=0, keepdims=True)
            var_row = jnp.sum((xtb - mu_row) ** 2, axis=0,
                              keepdims=True) * (1.0 / (T - 1))
            std_row = jnp.sqrt(var_row)            # std(x) == std(x - shift)
            # mean_net / std_net: exact-f32 VPU multiply + lane reduction
            shift = jnp.sum(Wm * mu_row, axis=1, keepdims=True) + bm    # (E,1)
            scale = jnp.sum(Ws * std_row, axis=1, keepdims=True) + bs   # (E,1)
            x_sc = (xb - shift) * scale            # (E, T)

            base = g * SEG                         # 128-aligned sample segment
            for tau in range(NTAP):                # 34 shifted row-block stores
                im_ref[tau * E:(tau + 1) * E, base:base + T2] = \
                    x_sc[:, tau:tau + T2]

        # ---- fused conv1 o conv2 o BN: ONE (10,680)@(680,GB*SEG) MXU matmul
        acc = jnp.dot(wc_ref[...], im_ref[...],
                      preferred_element_type=jnp.float32)     # (10, GB*SEG)
        out2 = acc + cpk_ref[0:10, 52:53]          # fused conv bias + BN bias
        out2 = out2 * out2                         # out = out * out

        # ---- tail constants
        pmat = cpk_ref[0:T2, 0:TP]                 # (210,10)  AvgPool as matmul
        W3L = cpk_ref[0:10, 60:60 + 10 * TP]       # (10,100)  net_2, lane-dense
        b3 = cpk_ref[25:26, 10:20]                 # (1,10)
        Wf1 = cpk_ref[20:25, 10:20]                # (5,10)
        bf1 = cpk_ref[0:5, 53:54]                  # (5,1)
        Wf2T = cpk_ref[20:25, 20:20 + OUTPUT]      # (5,OUTPUT)
        bf2 = cpk_ref[26:27, 10:10 + OUTPUT]       # (1,OUTPUT)

        preds = []
        for g in range(GB):
            seg = out2[:, g * SEG:g * SEG + T2]    # (10, T2), aligned lane slice
            pooled = jnp.dot(seg, pmat,
                             preferred_element_type=jnp.float32)   # (10, TP)
            pooled = jnp.log(jnp.maximum(pooled, 1e-6))
            # TODO(synk): training-mode dropout (random mask) not implemented;
            # eval-mode identity.
            # net_2: Conv2d(10,10,(1,10)) == VPU broadcast-MAC + sublane reduce
            part = pooled[:, 0:1] * W3L[:, 0:10]
            for j in range(1, TP):
                part = part + pooled[:, j:j + 1] * W3L[:, 10 * j:10 * j + 10]
            out3 = jnp.sum(part, axis=0, keepdims=True) + b3        # (1,10)
            # full: Linear(10,5) -> Tanh -> Linear(5,OUTPUT), exact f32 on VPU
            h = jnp.tanh(jnp.sum(Wf1 * out3, axis=1, keepdims=True) + bf1)   # (5,1)
            preds.append(jnp.sum(Wf2T * h, axis=0, keepdims=True) + bf2)     # (1,OUT)

        o_ref[...] = jnp.concatenate(preds, axis=0)                 # (GB, OUTPUT)

    return kernel


# ----------------------------------------------------------------------------
# Wrapper
# ----------------------------------------------------------------------------
def _pick_group(batch):
    """One sample per grid step on multi-TC chips (v7x); whole batch otherwise."""
    try:
        kind = jax.devices()[0].device_kind.lower()
    except Exception:
        kind = ""
    if batch % 2 == 0 and ("v7" in kind or "7x" in kind):
        return batch // 2
    return batch


def build_forward(GB, batch):
    assert batch % GB == 0
    kernel = make_kernel(GB)
    grid_spec = pltpu.PrefetchScalarGridSpec(
        num_scalar_prefetch=0,
        grid=(batch // GB,),
        in_specs=[
            pl.BlockSpec((GB, E, T), lambda i: (i, 0, 0)),
            pl.BlockSpec((GB, T, E), lambda i: (i, 0, 0)),
            pl.BlockSpec((10, K_FIR), lambda i: (0, 0)),
            pl.BlockSpec((T2, CPK_W), lambda i: (0, 0)),
        ],
        out_specs=pl.BlockSpec((GB, OUTPUT), lambda i: (i, 0)),
        scratch_shapes=[pltpu.VMEM((K_FIR, GB * SEG), jnp.float32)],
    )
    call = pl.pallas_call(
        kernel,
        out_shape=jax.ShapeDtypeStruct((batch, OUTPUT), jnp.float32),
        grid_spec=grid_spec,
        compiler_params=pltpu.CompilerParams(
            dimension_semantics=("parallel",)),
    )

    @jax.jit
    def fwd(x, wc, cpk):
        x = x.astype(jnp.float32)
        xT = jnp.transpose(x, (0, 2, 1))   # layout plumbing: lane-row mean/std
        return call(x, xT, wc, cpk)

    return fwd


# ----------------------------------------------------------------------------
# Parameter initialization (deterministic, torch-default-like fan-in uniform).
# ----------------------------------------------------------------------------
def init_params(key):
    ks = jax.random.split(key, 18)

    def unif(k, shape, bound):
        return jax.random.uniform(k, shape, jnp.float32, -bound, bound)

    p = {}
    b_lin = 1.0 / np.sqrt(E)
    p['Wm'] = unif(ks[0], (E, E), b_lin); p['bm'] = unif(ks[1], (E,), b_lin)
    p['Ws'] = unif(ks[2], (E, E), b_lin); p['bs'] = unif(ks[3], (E,), b_lin)
    b1b = 1.0 / np.sqrt(15)
    p['w1'] = unif(ks[4], (10, 1, 1, 15), b1b); p['b1'] = unif(ks[5], (10,), b1b)
    b2b = 1.0 / np.sqrt(10 * 20 * 20)
    p['w2'] = unif(ks[6], (10, 10, 20, 20), b2b); p['b2'] = unif(ks[7], (10,), b2b)
    p['bn_gamma'] = jax.random.uniform(ks[8], (10,), jnp.float32, 0.8, 1.2)
    p['bn_beta'] = unif(ks[9], (10,), 0.1)
    p['bn_mean'] = unif(ks[10], (10,), 0.05)
    p['bn_var'] = jax.random.uniform(ks[11], (10,), jnp.float32, 0.9, 1.1)
    b3b = 1.0 / np.sqrt(10 * 10)
    p['w3'] = unif(ks[12], (10, 10, 1, 10), b3b); p['b3'] = unif(ks[13], (10,), b3b)
    bf1b = 1.0 / np.sqrt(10)
    p['Wf1'] = unif(ks[14], (5, 10), bf1b); p['bf1'] = unif(ks[15], (5,), bf1b)
    bf2b = 1.0 / np.sqrt(5)
    p['Wf2'] = unif(ks[16], (OUTPUT, 5), bf2b); p['bf2'] = unif(ks[17], (OUTPUT,), bf2b)
    return p


# ----------------------------------------------------------------------------
# Host-side packing: fuse conv1+conv2+BN into a (10,680) lane-dense FIR weight
# and coalesce every other constant into one lane-dense (210,160) slab.
# Done in float64 numpy so the fusion itself adds no rounding error.
# ----------------------------------------------------------------------------
def pack_params(p):
    pn = {k: np.asarray(v, np.float64) for k, v in p.items()}

    # Fuse Conv2d(1,10,(1,15)) and Conv2d(10,10,(20,20)) into a 34-tap FIR.
    w1 = pn['w1'].reshape(10, 15)                            # (oc1, k)
    w2 = pn['w2']                                            # (oc2, oc1, e, kw)
    comb = np.einsum('ik,oiew->kweo', w1, w2)                # (15, 20, E, 10)
    Wc = np.zeros((NTAP, E, 10))
    for k in range(15):
        Wc[k:k + 20] += comb[k]                              # tau = k + kw
    b_comb = pn['b2'] + np.einsum('oiew,i->o', w2, pn['b1'])

    # Fold eval-mode BatchNorm2d(10) (running stats) into the fused conv.
    inv = 1.0 / np.sqrt(pn['bn_var'] + BN_EPS)
    bns = pn['bn_gamma'] * inv
    bnb = pn['bn_beta'] - pn['bn_mean'] * bns
    Wc = Wc * bns[None, None, :]
    bnb2 = b_comb * bns + bnb                                # (10,)
    # lane-dense FIR weight: [oc, tau*E + e]
    wc_flat = np.transpose(Wc, (2, 0, 1)).reshape(10, K_FIR)

    # AvgPool2d((1,75),(1,15)) as a right-hand pooling matrix (T2, TP).
    t = np.arange(T2)[:, None]
    j = np.arange(TP)[None, :]
    pmat = ((t >= j * 15) & (t < j * 15 + 75)).astype(np.float64) / 75.0

    # net_2 Conv2d(10,10,(1,10)) weights lane-dense: [ic, j*10 + oc]
    W3L = np.transpose(pn['w3'][:, :, 0, :], (1, 2, 0)).reshape(10, 10 * TP)

    # One lane-dense constant slab (layout mirrored by the kernel reads).
    cpk = np.zeros((T2, CPK_W))
    cpk[0:T2, 0:TP] = pmat
    cpk[0:E, 10:10 + E] = pn['Wm']
    cpk[0:E, 30:30 + E] = pn['Ws']
    cpk[0:E, 50] = pn['bm']
    cpk[0:E, 51] = pn['bs']
    cpk[0:10, 52] = bnb2
    cpk[0:5, 53] = pn['bf1']
    cpk[20:25, 10:20] = pn['Wf1']
    cpk[20:25, 20:20 + OUTPUT] = pn['Wf2'].T
    cpk[25, 10:20] = pn['b3']
    cpk[26, 10:10 + OUTPUT] = pn['bf2']
    cpk[0:10, 60:60 + 10 * TP] = W3L

    return jnp.asarray(wc_flat, jnp.float32), jnp.asarray(cpk, jnp.float32)


# ----------------------------------------------------------------------------
# Float64 NumPy reference (mirrors the torch forward, unfused, NCHW order).
# ----------------------------------------------------------------------------
def reference_np(x, p):
    x = np.asarray(x, np.float64)
    pp = {k: np.asarray(v, np.float64) for k, v in p.items()}
    Bn = x.shape[0]

    mean_t = x.mean(axis=2)                                  # (B, E)
    shift = mean_t @ pp['Wm'].T + pp['bm']
    xs = x - shift[:, :, None]
    std = xs.std(axis=2, ddof=1)
    scale = std @ pp['Ws'].T + pp['bs']
    xsc = xs * scale[:, :, None]                             # (B, E, T)

    w1 = pp['w1'].reshape(10, 15)
    out1 = np.zeros((Bn, 10, E, T1))
    for k in range(15):
        out1 += xsc[:, None, :, k:k + T1] * w1[None, :, k, None, None]
    out1 += pp['b1'][None, :, None, None]

    out2 = np.zeros((Bn, 10, T2))
    for kw in range(20):
        out2 += np.einsum('bihT,oih->boT', out1[:, :, :, kw:kw + T2],
                          pp['w2'][:, :, :, kw])
    out2 += pp['b2'][None, :, None]

    inv = 1.0 / np.sqrt(pp['bn_var'] + BN_EPS)
    out2 = (out2 - pp['bn_mean'][None, :, None]) * (inv * pp['bn_gamma'])[None, :, None] \
        + pp['bn_beta'][None, :, None]
    out2 = out2 * out2

    pooled = np.stack([out2[:, :, j * 15:j * 15 + 75].mean(axis=2)
                       for j in range(TP)], axis=2)          # (B, 10, TP)
    pooled = np.log(np.clip(pooled, 1e-6, None))

    out3 = np.einsum('bik,oik->bo', pooled, pp['w3'][:, :, 0, :]) + pp['b3'][None, :]
    h = np.tanh(out3 @ pp['Wf1'].T + pp['bf1'])
    return h @ pp['Wf2'].T + pp['bf2']


if __name__ == "__main__":
    key = jax.random.PRNGKey(0)
    kx, kp = jax.random.split(key)
    # config = {'n_electrodes': 20, 'DROP_OUT': 0.5}  (dropout inactive in eval)
    x = jax.random.normal(kx, (B, E, T), jnp.float32)
    params = init_params(kp)
    wc, cpk = pack_params(params)

    GB = _pick_group(B)
    fwd = build_forward(GB, B)
    pred = jax.block_until_ready(fwd(x, wc, cpk))
    assert pred.shape == (B, OUTPUT)

    ref = reference_np(np.asarray(x), params)
    if not np.allclose(np.asarray(pred), ref, rtol=2e-2, atol=2e-2):
        raise AssertionError(
            f"kernel/reference mismatch:\n{np.asarray(pred)}\nvs\n{ref}")
    print("KERNEL_OK")
</pallas_src>

<mosaic_0001>
module attributes {stable_mosaic.version = 11 : i64} {
  func.func @kernel(%arg0: i32, %arg1: memref<2x20x243xf32, #tpu.memory_space<vmem>>, %arg2: memref<2x243x20xf32, #tpu.memory_space<vmem>>, %arg3: memref<10x680xf32, #tpu.memory_space<vmem>>, %arg4: memref<210x160xf32, #tpu.memory_space<vmem>>, %arg5: memref<2x3xf32, #tpu.memory_space<vmem>>, %arg6: memref<680x512xf32, #tpu.memory_space<vmem>>) attributes {dimension_semantics = [#tpu.dimension_semantics<parallel>], iteration_bounds = array<i64: 1>, scalar_prefetch = 0 : i64, scratch_operands = 1 : i64, tpu.core_type = #tpu.core_type<tc>, window_params = [{transform_indices = @transform_0, window_bounds = array<i64: 2, 20, 243>}, {transform_indices = @transform_1, window_bounds = array<i64: 2, 243, 20>}, {pipeline_mode = #tpu.pipeline_mode<synchronous>, transform_indices = @transform_2, window_bounds = array<i64: 10, 680>}, {pipeline_mode = #tpu.pipeline_mode<synchronous>, transform_indices = @transform_3, window_bounds = array<i64: 210, 160>}, {transform_indices = @transform_4, window_bounds = array<i64: 2, 3>}]} {
    %c0 = arith.constant 0 : index
    %c10 = arith.constant 10 : index
    %0 = vector.load %arg4[%c0, %c10] : memref<210x160xf32, #tpu.memory_space<vmem>>, vector<20x20xf32>
    %c0_0 = arith.constant 0 : index
    %c30 = arith.constant 30 : index
    %1 = vector.load %arg4[%c0_0, %c30] : memref<210x160xf32, #tpu.memory_space<vmem>>, vector<20x20xf32>
    %c0_1 = arith.constant 0 : index
    %c50 = arith.constant 50 : index
    %2 = vector.load %arg4[%c0_1, %c50] : memref<210x160xf32, #tpu.memory_space<vmem>>, vector<20x1xf32>
    %c0_2 = arith.constant 0 : index
    %c51 = arith.constant 51 : index
    %3 = vector.load %arg4[%c0_2, %c51] : memref<210x160xf32, #tpu.memory_space<vmem>>, vector<20x1xf32>
    %c0_3 = arith.constant 0 : index
    %c0_4 = arith.constant 0 : index
    %c0_5 = arith.constant 0 : index
    %4 = vector.load %arg1[%c0_3, %c0_4, %c0_5] : memref<2x20x243xf32, #tpu.memory_space<vmem>>, vector<1x20x243xf32>
    %5 = vector.shape_cast %4 : vector<1x20x243xf32> to vector<20x243xf32>
    %c0_6 = arith.constant 0 : index
    %c0_7 = arith.constant 0 : index
    %c0_8 = arith.constant 0 : index
    %6 = vector.load %arg2[%c0_6, %c0_7, %c0_8] : memref<2x243x20xf32, #tpu.memory_space<vmem>>, vector<1x243x20xf32>
    %7 = vector.shape_cast %6 : vector<1x243x20xf32> to vector<243x20xf32>
    %cst = arith.constant dense<0.000000e+00> : vector<20xf32>
    %8 = vector.multi_reduction <add>, %7, %cst [0] : vector<243x20xf32> to vector<20xf32>
    %9 = vector.shape_cast %8 : vector<20xf32> to vector<1x20xf32>
    %cst_9 = arith.constant 2.430000e+02 : f32
    %10 = vector.broadcast %cst_9 : f32 to vector<1x20xf32>
    %11 = arith.divf %9, %10 : vector<1x20xf32>
    %12 = vector.broadcast %11 : vector<1x20xf32> to vector<243x20xf32>
    %13 = arith.subf %7, %12 : vector<243x20xf32>
    %14 = arith.mulf %13, %13 : vector<243x20xf32>
    %cst_10 = arith.constant dense<0.000000e+00> : vector<20xf32>
    %15 = vector.multi_reduction <add>, %14, %cst_10 [0] : vector<243x20xf32> to vector<20xf32>
    %16 = vector.shape_cast %15 : vector<20xf32> to vector<1x20xf32>
    %cst_11 = arith.constant 0.00413223123 : f32
    %17 = vector.broadcast %cst_11 : f32 to vector<1x20xf32>
    %18 = arith.mulf %16, %17 : vector<1x20xf32>
    %19 = math.sqrt %18 : vector<1x20xf32>
    %20 = vector.broadcast %11 : vector<1x20xf32> to vector<20x20xf32>
    %21 = arith.mulf %0, %20 : vector<20x20xf32>
    %cst_12 = arith.constant dense<0.000000e+00> : vector<20xf32>
    %22 = vector.multi_reduction <add>, %21, %cst_12 [1] : vector<20x20xf32> to vector<20xf32>
    %23 = vector.shape_cast %22 : vector<20xf32> to vector<20x1xf32>
    %24 = arith.addf %23, %2 : vector<20x1xf32>
    %25 = vector.broadcast %19 : vector<1x20xf32> to vector<20x20xf32>
    %26 = arith.mulf %1, %25 : vector<20x20xf32>
    %cst_13 = arith.constant dense<0.000000e+00> : vector<20xf32>
    %27 = vector.multi_reduction <add>, %26, %cst_13 [1] : vector<20x20xf32> to vector<20xf32>
    %28 = vector.shape_cast %27 : vector<20xf32> to vector<20x1xf32>
    %29 = arith.addf %28, %3 : vector<20x1xf32>
    %30 = vector.broadcast %24 : vector<20x1xf32> to vector<20x243xf32>
    %31 = arith.subf %5, %30 : vector<20x243xf32>
    %32 = vector.broadcast %29 : vector<20x1xf32> to vector<20x243xf32>
    %33 = arith.mulf %31, %32 : vector<20x243xf32>
    %34 = vector.extract_strided_slice %33 {offsets = [0, 0], sizes = [20, 210], strides = [1, 1]} : vector<20x243xf32> to vector<20x210xf32>
    %c0_14 = arith.constant 0 : index
    %c0_15 = arith.constant 0 : index
    %35 = vector.load %arg6[%c0_14, %c0_15] : memref<680x512xf32, #tpu.memory_space<vmem>>, vector<20x210xf32>
    tpu.vector_store %arg6[%c0_14, %c0_15], %34 {strides = array<i32>} : memref<680x512xf32, #tpu.memory_space<vmem>>, vector<20x210xf32>,
    %36 = vector.extract_strided_slice %33 {offsets = [0, 1], sizes = [20, 210], strides = [1, 1]} : vector<20x243xf32> to vector<20x210xf32>
    %c20 = arith.constant 20 : index
    %c0_16 = arith.constant 0 : index
    %37 = vector.load %arg6[%c20, %c0_16] : memref<680x512xf32, #tpu.memory_space<vmem>>, vector<20x210xf32>
    tpu.vector_store %arg6[%c20, %c0_16], %36 {strides = array<i32>} : memref<680x512xf32, #tpu.memory_space<vmem>>, vector<20x210xf32>,
    %38 = vector.extract_strided_slice %33 {offsets = [0, 2], sizes = [20, 210], strides = [1, 1]} : vector<20x243xf32> to vector<20x210xf32>
    %c40 = arith.constant 40 : index
    %c0_17 = arith.constant 0 : index
    %39 = vector.load %arg6[%c40, %c0_17] : memref<680x512xf32, #tpu.memory_space<vmem>>, vector<20x210xf32>
    tpu.vector_store %arg6[%c40, %c0_17], %38 {strides = array<i32>} : memref<680x512xf32, #tpu.memory_space<vmem>>, vector<20x210xf32>,
    %40 = vector.extract_strided_slice %33 {offsets = [0, 3], sizes = [20, 210], strides = [1, 1]} : vector<20x243xf32> to vector<20x210xf32>
    %c60 = arith.constant 60 : index
    %c0_18 = arith.constant 0 : index
    %41 = vector.load %arg6[%c60, %c0_18] : memref<680x512xf32, #tpu.memory_space<vmem>>, vector<20x210xf32>
    tpu.vector_store %arg6[%c60, %c0_18], %40 {strides = array<i32>} : memref<680x512xf32, #tpu.memory_space<vmem>>, vector<20x210xf32>,
    %42 = vector.extract_strided_slice %33 {offsets = [0, 4], sizes = [20, 210], strides = [1, 1]} : vector<20x243xf32> to vector<20x210xf32>
    %c80 = arith.constant 80 : index
    %c0_19 = arith.constant 0 : index
    %43 = vector.load %arg6[%c80, %c0_19] : memref<680x512xf32, #tpu.memory_space<vmem>>, vector<20x210xf32>
    tpu.vector_store %arg6[%c80, %c0_19], %42 {strides = array<i32>} : memref<680x512xf32, #tpu.memory_space<vmem>>, vector<20x210xf32>,
    %44 = vector.extract_strided_slice %33 {offsets = [0, 5], sizes = [20, 210], strides = [1, 1]} : vector<20x243xf32> to vector<20x210xf32>
    %c100 = arith.constant 100 : index
    %c0_20 = arith.constant 0 : index
    %45 = vector.load %arg6[%c100, %c0_20] : memref<680x512xf32, #tpu.memory_space<vmem>>, vector<20x210xf32>
    tpu.vector_store %arg6[%c100, %c0_20], %44 {strides = array<i32>} : memref<680x512xf32, #tpu.memory_space<vmem>>, vector<20x210xf32>,
    %46 = vector.extract_strided_slice %33 {offsets = [0, 6], sizes = [20, 210], strides = [1, 1]} : vector<20x243xf32> to vector<20x210xf32>
    %c120 = arith.constant 120 : index
    %c0_21 = arith.constant 0 : index
    %47 = vector.load %arg6[%c120, %c0_21] : memref<680x512xf32, #tpu.memory_space<vmem>>, vector<20x210xf32>
    tpu.vector_store %arg6[%c120, %c0_21], %46 {strides = array<i32>} : memref<680x512xf32, #tpu.memory_space<vmem>>, vector<20x210xf32>,
    %48 = vector.extract_strided_slice %33 {offsets = [0, 7], sizes = [20, 210], strides = [1, 1]} : vector<20x243xf32> to vector<20x210xf32>
    %c140 = arith.constant 140 : index
    %c0_22 = arith.constant 0 : index
    %49 = vector.load %arg6[%c140, %c0_22] : memref<680x512xf32, #tpu.memory_space<vmem>>, vector<20x210xf32>
    tpu.vector_store %arg6[%c140, %c0_22], %48 {strides = array<i32>} : memref<680x512xf32, #tpu.memory_space<vmem>>, vector<20x210xf32>,
    %50 = vector.extract_strided_slice %33 {offsets = [0, 8], sizes = [20, 210], strides = [1, 1]} : vector<20x243xf32> to vector<20x210xf32>
    %c160 = arith.constant 160 : index
    %c0_23 = arith.constant 0 : index
    %51 = vector.load %arg6[%c160, %c0_23] : memref<680x512xf32, #tpu.memory_space<vmem>>, vector<20x210xf32>
    tpu.vector_store %arg6[%c160, %c0_23], %50 {strides = array<i32>} : memref<680x512xf32, #tpu.memory_space<vmem>>, vector<20x210xf32>,
    %52 = vector.extract_strided_slice %33 {offsets = [0, 9], sizes = [20, 210], strides = [1, 1]} : vector<20x243xf32> to vector<20x210xf32>
    %c180 = arith.constant 180 : index
    %c0_24 = arith.constant 0 : index
    %53 = vector.load %arg6[%c180, %c0_24] : memref<680x512xf32, #tpu.memory_space<vmem>>, vector<20x210xf32>
    tpu.vector_store %arg6[%c180, %c0_24], %52 {strides = array<i32>} : memref<680x512xf32, #tpu.memory_space<vmem>>, vector<20x210xf32>,
    %54 = vector.extract_strided_slice %33 {offsets = [0, 10], sizes = [20, 210], strides = [1, 1]} : vector<20x243xf32> to vector<20x210xf32>
    %c200 = arith.constant 200 : index
    %c0_25 = arith.constant 0 : index
    %55 = vector.load %arg6[%c200, %c0_25] : memref<680x512xf32, #tpu.memory_space<vmem>>, vector<20x210xf32>
    tpu.vector_store %arg6[%c200, %c0_25], %54 {strides = array<i32>} : memref<680x512xf32, #tpu.memory_space<vmem>>, vector<20x210xf32>,
    %56 = vector.extract_strided_slice %33 {offsets = [0, 11], sizes = [20, 210], strides = [1, 1]} : vector<20x243xf32> to vector<20x210xf32>
    %c220 = arith.constant 220 : index
    %c0_26 = arith.constant 0 : index
    %57 = vector.load %arg6[%c220, %c0_26] : memref<680x512xf32, #tpu.memory_space<vmem>>, vector<20x210xf32>
    tpu.vector_store %arg6[%c220, %c0_26], %56 {strides = array<i32>} : memref<680x512xf32, #tpu.memory_space<vmem>>, vector<20x210xf32>,
    %58 = vector.extract_strided_slice %33 {offsets = [0, 12], sizes = [20, 210], strides = [1, 1]} : vector<20x243xf32> to vector<20x210xf32>
    %c240 = arith.constant 240 : index
    %c0_27 = arith.constant 0 : index
    %59 = vector.load %arg6[%c240, %c0_27] : memref<680x512xf32, #tpu.memory_space<vmem>>, vector<20x210xf32>
    tpu.vector_store %arg6[%c240, %c0_27], %58 {strides = array<i32>} : memref<680x512xf32, #tpu.memory_space<vmem>>, vector<20x210xf32>,
    %60 = vector.extract_strided_slice %33 {offsets = [0, 13], sizes = [20, 210], strides = [1, 1]} : vector<20x243xf32> to vector<20x210xf32>
    %c260 = arith.constant 260 : index
    %c0_28 = arith.constant 0 : index
    %61 = vector.load %arg6[%c260, %c0_28] : memref<680x512xf32, #tpu.memory_space<vmem>>, vector<20x210xf32>
    tpu.vector_store %arg6[%c260, %c0_28], %60 {strides = array<i32>} : memref<680x512xf32, #tpu.memory_space<vmem>>, vector<20x210xf32>,
    %62 = vector.extract_strided_slice %33 {offsets = [0, 14], sizes = [20, 210], strides = [1, 1]} : vector<20x243xf32> to vector<20x210xf32>
    %c280 = arith.constant 280 : index
    %c0_29 = arith.constant 0 : index
    %63 = vector.load %arg6[%c280, %c0_29] : memref<680x512xf32, #tpu.memory_space<vmem>>, vector<20x210xf32>
    tpu.vector_store %arg6[%c280, %c0_29], %62 {strides = array<i32>} : memref<680x512xf32, #tpu.memory_space<vmem>>, vector<20x210xf32>,
    %64 = vector.extract_strided_slice %33 {offsets = [0, 15], sizes = [20, 210], strides = [1, 1]} : vector<20x243xf32> to vector<20x210xf32>
    %c300 = arith.constant 300 : index
    %c0_30 = arith.constant 0 : index
    %65 = vector.load %arg6[%c300, %c0_30] : memref<680x512xf32, #tpu.memory_space<vmem>>, vector<20x210xf32>
    tpu.vector_store %arg6[%c300, %c0_30], %64 {strides = array<i32>} : memref<680x512xf32, #tpu.memory_space<vmem>>, vector<20x210xf32>,
    %66 = vector.extract_strided_slice %33 {offsets = [0, 16], sizes = [20, 210], strides = [1, 1]} : vector<20x243xf32> to vector<20x210xf32>
    %c320 = arith.constant 320 : index
    %c0_31 = arith.constant 0 : index
    %67 = vector.load %arg6[%c320, %c0_31] : memref<680x512xf32, #tpu.memory_space<vmem>>, vector<20x210xf32>
    tpu.vector_store %arg6[%c320, %c0_31], %66 {strides = array<i32>} : memref<680x512xf32, #tpu.memory_space<vmem>>, vector<20x210xf32>,
    %68 = vector.extract_strided_slice %33 {offsets = [0, 17], sizes = [20, 210], strides = [1, 1]} : vector<20x243xf32> to vector<20x210xf32>
    %c340 = arith.constant 340 : index
    %c0_32 = arith.constant 0 : index
    %69 = vector.load %arg6[%c340, %c0_32] : memref<680x512xf32, #tpu.memory_space<vmem>>, vector<20x210xf32>
    tpu.vector_store %arg6[%c340, %c0_32], %68 {strides = array<i32>} : memref<680x512xf32, #tpu.memory_space<vmem>>, vector<20x210xf32>,
    %70 = vector.extract_strided_slice %33 {offsets = [0, 18], sizes = [20, 210], strides = [1, 1]} : vector<20x243xf32> to vector<20x210xf32>
    %c360 = arith.constant 360 : index
    %c0_33 = arith.constant 0 : index
    %71 = vector.load %arg6[%c360, %c0_33] : memref<680x512xf32, #tpu.memory_space<vmem>>, vector<20x210xf32>
    tpu.vector_store %arg6[%c360, %c0_33], %70 {strides = array<i32>} : memref<680x512xf32, #tpu.memory_space<vmem>>, vector<20x210xf32>,
    %72 = vector.extract_strided_slice %33 {offsets = [0, 19], sizes = [20, 210], strides = [1, 1]} : vector<20x243xf32> to vector<20x210xf32>
    %c380 = arith.constant 380 : index
    %c0_34 = arith.constant 0 : index
    %73 = vector.load %arg6[%c380, %c0_34] : memref<680x512xf32, #tpu.memory_space<vmem>>, vector<20x210xf32>
    tpu.vector_store %arg6[%c380, %c0_34], %72 {strides = array<i32>} : memref<680x512xf32, #tpu.memory_space<vmem>>, vector<20x210xf32>,
    %74 = vector.extract_strided_slice %33 {offsets = [0, 20], sizes = [20, 210], strides = [1, 1]} : vector<20x243xf32> to vector<20x210xf32>
    %c400 = arith.constant 400 : index
    %c0_35 = arith.constant 0 : index
    %75 = vector.load %arg6[%c400, %c0_35] : memref<680x512xf32, #tpu.memory_space<vmem>>, vector<20x210xf32>
    tpu.vector_store %arg6[%c400, %c0_35], %74 {strides = array<i32>} : memref<680x512xf32, #tpu.memory_space<vmem>>, vector<20x210xf32>,
    %76 = vector.extract_strided_slice %33 {offsets = [0, 21], sizes = [20, 210], strides = [1, 1]} : vector<20x243xf32> to vector<20x210xf32>
    %c420 = arith.constant 420 : index
    %c0_36 = arith.constant 0 : index
    %77 = vector.load %arg6[%c420, %c0_36] : memref<680x512xf32, #tpu.memory_space<vmem>>, vector<20x210xf32>
    tpu.vector_store %arg6[%c420, %c0_36], %76 {strides = array<i32>} : memref<680x512xf32, #tpu.memory_space<vmem>>, vector<20x210xf32>,
    %78 = vector.extract_strided_slice %33 {offsets = [0, 22], sizes = [20, 210], strides = [1, 1]} : vector<20x243xf32> to vector<20x210xf32>
    %c440 = arith.constant 440 : index
    %c0_37 = arith.constant 0 : index
    %79 = vector.load %arg6[%c440, %c0_37] : memref<680x512xf32, #tpu.memory_space<vmem>>, vector<20x210xf32>
    tpu.vector_store %arg6[%c440, %c0_37], %78 {strides = array<i32>} : memref<680x512xf32, #tpu.memory_space<vmem>>, vector<20x210xf32>,
    %80 = vector.extract_strided_slice %33 {offsets = [0, 23], sizes = [20, 210], strides = [1, 1]} : vector<20x243xf32> to vector<20x210xf32>
    %c460 = arith.constant 460 : index
    %c0_38 = arith.constant 0 : index
    %81 = vector.load %arg6[%c460, %c0_38] : memref<680x512xf32, #tpu.memory_space<vmem>>, vector<20x210xf32>
    tpu.vector_store %arg6[%c460, %c0_38], %80 {strides = array<i32>} : memref<680x512xf32, #tpu.memory_space<vmem>>, vector<20x210xf32>,
    %82 = vector.extract_strided_slice %33 {offsets = [0, 24], sizes = [20, 210], strides = [1, 1]} : vector<20x243xf32> to vector<20x210xf32>
    %c480 = arith.constant 480 : index
    %c0_39 = arith.constant 0 : index
    %83 = vector.load %arg6[%c480, %c0_39] : memref<680x512xf32, #tpu.memory_space<vmem>>, vector<20x210xf32>
    tpu.vector_store %arg6[%c480, %c0_39], %82 {strides = array<i32>} : memref<680x512xf32, #tpu.memory_space<vmem>>, vector<20x210xf32>,
    %84 = vector.extract_strided_slice %33 {offsets = [0, 25], sizes = [20, 210], strides = [1, 1]} : vector<20x243xf32> to vector<20x210xf32>
    %c500 = arith.constant 500 : index
    %c0_40 = arith.constant 0 : index
    %85 = vector.load %arg6[%c500, %c0_40] : memref<680x512xf32, #tpu.memory_space<vmem>>, vector<20x210xf32>
    tpu.vector_store %arg6[%c500, %c0_40], %84 {strides = array<i32>} : memref<680x512xf32, #tpu.memory_space<vmem>>, vector<20x210xf32>,
    %86 = vector.extract_strided_slice %33 {offsets = [0, 26], sizes = [20, 210], strides = [1, 1]} : vector<20x243xf32> to vector<20x210xf32>
    %c520 = arith.constant 520 : index
    %c0_41 = arith.constant 0 : index
    %87 = vector.load %arg6[%c520, %c0_41] : memref<680x512xf32, #tpu.memory_space<vmem>>, vector<20x210xf32>
    tpu.vector_store %arg6[%c520, %c0_41], %86 {strides = array<i32>} : memref<680x512xf32, #tpu.memory_space<vmem>>, vector<20x210xf32>,
    %88 = vector.extract_strided_slice %33 {offsets = [0, 27], sizes = [20, 210], strides = [1, 1]} : vector<20x243xf32> to vector<20x210xf32>
    %c540 = arith.constant 540 : index
    %c0_42 = arith.constant 0 : index
    %89 = vector.load %arg6[%c540, %c0_42] : memref<680x512xf32, #tpu.memory_space<vmem>>, vector<20x210xf32>
    tpu.vector_store %arg6[%c540, %c0_42], %88 {strides = array<i32>} : memref<680x512xf32, #tpu.memory_space<vmem>>, vector<20x210xf32>,
    %90 = vector.extract_strided_slice %33 {offsets = [0, 28], sizes = [20, 210], strides = [1, 1]} : vector<20x243xf32> to vector<20x210xf32>
    %c560 = arith.constant 560 : index
    %c0_43 = arith.constant 0 : index
    %91 = vector.load %arg6[%c560, %c0_43] : memref<680x512xf32, #tpu.memory_space<vmem>>, vector<20x210xf32>
    tpu.vector_store %arg6[%c560, %c0_43], %90 {strides = array<i32>} : memref<680x512xf32, #tpu.memory_space<vmem>>, vector<20x210xf32>,
    %92 = vector.extract_strided_slice %33 {offsets = [0, 29], sizes = [20, 210], strides = [1, 1]} : vector<20x243xf32> to vector<20x210xf32>
    %c580 = arith.constant 580 : index
    %c0_44 = arith.constant 0 : index
    %93 = vector.load %arg6[%c580, %c0_44] : memref<680x512xf32, #tpu.memory_space<vmem>>, vector<20x210xf32>
    tpu.vector_store %arg6[%c580, %c0_44], %92 {strides = array<i32>} : memref<680x512xf32, #tpu.memory_space<vmem>>, vector<20x210xf32>,
    %94 = vector.extract_strided_slice %33 {offsets = [0, 30], sizes = [20, 210], strides = [1, 1]} : vector<20x243xf32> to vector<20x210xf32>
    %c600 = arith.constant 600 : index
    %c0_45 = arith.constant 0 : index
    %95 = vector.load %arg6[%c600, %c0_45] : memref<680x512xf32, #tpu.memory_space<vmem>>, vector<20x210xf32>
    tpu.vector_store %arg6[%c600, %c0_45], %94 {strides = array<i32>} : memref<680x512xf32, #tpu.memory_space<vmem>>, vector<20x210xf32>,
    %96 = vector.extract_strided_slice %33 {offsets = [0, 31], sizes = [20, 210], strides = [1, 1]} : vector<20x243xf32> to vector<20x210xf32>
    %c620 = arith.constant 620 : index
    %c0_46 = arith.constant 0 : index
    %97 = vector.load %arg6[%c620, %c0_46] : memref<680x512xf32, #tpu.memory_space<vmem>>, vector<20x210xf32>
    tpu.vector_store %arg6[%c620, %c0_46], %96 {strides = array<i32>} : memref<680x512xf32, #tpu.memory_space<vmem>>, vector<20x210xf32>,
    %98 = vector.extract_strided_slice %33 {offsets = [0, 32], sizes = [20, 210], strides = [1, 1]} : vector<20x243xf32> to vector<20x210xf32>
    %c640 = arith.constant 640 : index
    %c0_47 = arith.constant 0 : index
    %99 = vector.load %arg6[%c640, %c0_47] : memref<680x512xf32, #tpu.memory_space<vmem>>, vector<20x210xf32>
    tpu.vector_store %arg6[%c640, %c0_47], %98 {strides = array<i32>} : memref<680x512xf32, #tpu.memory_space<vmem>>, vector<20x210xf32>,
    %100 = vector.extract_strided_slice %33 {offsets = [0, 33], sizes = [20, 210], strides = [1, 1]} : vector<20x243xf32> to vector<20x210xf32>
    %c660 = arith.constant 660 : index
    %c0_48 = arith.constant 0 : index
    %101 = vector.load %arg6[%c660, %c0_48] : memref<680x512xf32, #tpu.memory_space<vmem>>, vector<20x210xf32>
    tpu.vector_store %arg6[%c660, %c0_48], %100 {strides = array<i32>} : memref<680x512xf32, #tpu.memory_space<vmem>>, vector<20x210xf32>,
    %c1 = arith.constant 1 : index
    %c0_49 = arith.constant 0 : index
    %c0_50 = arith.constant 0 : index
    %102 = vector.load %arg1[%c1, %c0_49, %c0_50] : memref<2x20x243xf32, #tpu.memory_space<vmem>>, vector<1x20x243xf32>
    %103 = vector.shape_cast %102 : vector<1x20x243xf32> to vector<20x243xf32>
    %c1_51 = arith.constant 1 : index
    %c0_52 = arith.constant 0 : index
    %c0_53 = arith.constant 0 : index
    %104 = vector.load %arg2[%c1_51, %c0_52, %c0_53] : memref<2x243x20xf32, #tpu.memory_space<vmem>>, vector<1x243x20xf32>
    %105 = vector.shape_cast %104 : vector<1x243x20xf32> to vector<243x20xf32>
    %cst_54 = arith.constant dense<0.000000e+00> : vector<20xf32>
    %106 = vector.multi_reduction <add>, %105, %cst_54 [0] : vector<243x20xf32> to vector<20xf32>
    %107 = vector.shape_cast %106 : vector<20xf32> to vector<1x20xf32>
    %cst_55 = arith.constant 2.430000e+02 : f32
    %108 = vector.broadcast %cst_55 : f32 to vector<1x20xf32>
    %109 = arith.divf %107, %108 : vector<1x20xf32>
    %110 = vector.broadcast %109 : vector<1x20xf32> to vector<243x20xf32>
    %111 = arith.subf %105, %110 : vector<243x20xf32>
    %112 = arith.mulf %111, %111 : vector<243x20xf32>
    %cst_56 = arith.constant dense<0.000000e+00> : vector<20xf32>
    %113 = vector.multi_reduction <add>, %112, %cst_56 [0] : vector<243x20xf32> to vector<20xf32>
    %114 = vector.shape_cast %113 : vector<20xf32> to vector<1x20xf32>
    %cst_57 = arith.constant 0.00413223123 : f32
    %115 = vector.broadcast %cst_57 : f32 to vector<1x20xf32>
    %116 = arith.mulf %114, %115 : vector<1x20xf32>
    %117 = math.sqrt %116 : vector<1x20xf32>
    %118 = vector.broadcast %109 : vector<1x20xf32> to vector<20x20xf32>
    %119 = arith.mulf %0, %118 : vector<20x20xf32>
    %cst_58 = arith.constant dense<0.000000e+00> : vector<20xf32>
    %120 = vector.multi_reduction <add>, %119, %cst_58 [1] : vector<20x20xf32> to vector<20xf32>
    %121 = vector.shape_cast %120 : vector<20xf32> to vector<20x1xf32>
    %122 = arith.addf %121, %2 : vector<20x1xf32>
    %123 = vector.broadcast %117 : vector<1x20xf32> to vector<20x20xf32>
    %124 = arith.mulf %1, %123 : vector<20x20xf32>
    %cst_59 = arith.constant dense<0.000000e+00> : vector<20xf32>
    %125 = vector.multi_reduction <add>, %124, %cst_59 [1] : vector<20x20xf32> to vector<20xf32>
    %126 = vector.shape_cast %125 : vector<20xf32> to vector<20x1xf32>
    %127 = arith.addf %126, %3 : vector<20x1xf32>
    %128 = vector.broadcast %122 : vector<20x1xf32> to vector<20x243xf32>
    %129 = arith.subf %103, %128 : vector<20x243xf32>
    %130 = vector.broadcast %127 : vector<20x1xf32> to vector<20x243xf32>
    %131 = arith.mulf %129, %130 : vector<20x243xf32>
    %132 = vector.extract_strided_slice %131 {offsets = [0, 0], sizes = [20, 210], strides = [1, 1]} : vector<20x243xf32> to vector<20x210xf32>
    %c0_60 = arith.constant 0 : index
    %c256 = arith.constant 256 : index
    %133 = vector.load %arg6[%c0_60, %c256] : memref<680x512xf32, #tpu.memory_space<vmem>>, vector<20x210xf32>
    tpu.vector_store %arg6[%c0_60, %c256], %132 {strides = array<i32>} : memref<680x512xf32, #tpu.memory_space<vmem>>, vector<20x210xf32>,
    %134 = vector.extract_strided_slice %131 {offsets = [0, 1], sizes = [20, 210], strides = [1, 1]} : vector<20x243xf32> to vector<20x210xf32>
    %c20_61 = arith.constant 20 : index
    %c256_62 = arith.constant 256 : index
    %135 = vector.load %arg6[%c20_61, %c256_62] : memref<680x512xf32, #tpu.memory_space<vmem>>, vector<20x210xf32>
    tpu.vector_store %arg6[%c20_61, %c256_62], %134 {strides = array<i32>} : memref<680x512xf32, #tpu.memory_space<vmem>>, vector<20x210xf32>,
    %136 = vector.extract_strided_slice %131 {offsets = [0, 2], sizes = [20, 210], strides = [1, 1]} : vector<20x243xf32> to vector<20x210xf32>
    %c40_63 = arith.constant 40 : index
    %c256_64 = arith.constant 256 : index
    %137 = vector.load %arg6[%c40_63, %c256_64] : memref<680x512xf32, #tpu.memory_space<vmem>>, vector<20x210xf32>
    tpu.vector_store %arg6[%c40_63, %c256_64], %136 {strides = array<i32>} : memref<680x512xf32, #tpu.memory_space<vmem>>, vector<20x210xf32>,
    %138 = vector.extract_strided_slice %131 {offsets = [0, 3], sizes = [20, 210], strides = [1, 1]} : vector<20x243xf32> to vector<20x210xf32>
    %c60_65 = arith.constant 60 : index
    %c256_66 = arith.constant 256 : index
    %139 = vector.load %arg6[%c60_65, %c256_66] : memref<680x512xf32, #tpu.memory_space<vmem>>, vector<20x210xf32>
    tpu.vector_store %arg6[%c60_65, %c256_66], %138 {strides = array<i32>} : memref<680x512xf32, #tpu.memory_space<vmem>>, vector<20x210xf32>,
    %140 = vector.extract_strided_slice %131 {offsets = [0, 4], sizes = [20, 210], strides = [1, 1]} : vector<20x243xf32> to vector<20x210xf32>
    %c80_67 = arith.constant 80 : index
    %c256_68 = arith.constant 256 : index
    %141 = vector.load %arg6[%c80_67, %c256_68] : memref<680x512xf32, #tpu.memory_space<vmem>>, vector<20x210xf32>
    tpu.vector_store %arg6[%c80_67, %c256_68], %140 {strides = array<i32>} : memref<680x512xf32, #tpu.memory_space<vmem>>, vector<20x210xf32>,
    %142 = vector.extract_strided_slice %131 {offsets = [0, 5], sizes = [20, 210], strides = [1, 1]} : vector<20x243xf32> to vector<20x210xf32>
    %c100_69 = arith.constant 100 : index
    %c256_70 = arith.constant 256 : index
    %143 = vector.load %arg6[%c100_69, %c256_70] : memref<680x512xf32, #tpu.memory_space<vmem>>, vector<20x210xf32>
    tpu.vector_store %arg6[%c100_69, %c256_70], %142 {strides = array<i32>} : memref<680x512xf32, #tpu.memory_space<vmem>>, vector<20x210xf32>,
    %144 = vector.extract_strided_slice %131 {offsets = [0, 6], sizes = [20, 210], strides = [1, 1]} : vector<20x243xf32> to vector<20x210xf32>
    %c120_71 = arith.constant 120 : index
    %c256_72 = arith.constant 256 : index
    %145 = vector.load %arg6[%c120_71, %c256_72] : memref<680x512xf32, #tpu.memory_space<vmem>>, vector<20x210xf32>
    tpu.vector_store %arg6[%c120_71, %c256_72], %144 {strides = array<i32>} : memref<680x512xf32, #tpu.memory_space<vmem>>, vector<20x210xf32>,
    %146 = vector.extract_strided_slice %131 {offsets = [0, 7], sizes = [20, 210], strides = [1, 1]} : vector<20x243xf32> to vector<20x210xf32>
    %c140_73 = arith.constant 140 : index
    %c256_74 = arith.constant 256 : index
    %147 = vector.load %arg6[%c140_73, %c256_74] : memref<680x512xf32, #tpu.memory_space<vmem>>, vector<20x210xf32>
    tpu.vector_store %arg6[%c140_73, %c256_74], %146 {strides = array<i32>} : memref<680x512xf32, #tpu.memory_space<vmem>>, vector<20x210xf32>,
    %148 = vector.extract_strided_slice %131 {offsets = [0, 8], sizes = [20, 210], strides = [1, 1]} : vector<20x243xf32> to vector<20x210xf32>
    %c160_75 = arith.constant 160 : index
    %c256_76 = arith.constant 256 : index
    %149 = vector.load %arg6[%c160_75, %c256_76] : memref<680x512xf32, #tpu.memory_space<vmem>>, vector<20x210xf32>
    tpu.vector_store %arg6[%c160_75, %c256_76], %148 {strides = array<i32>} : memref<680x512xf32, #tpu.memory_space<vmem>>, vector<20x210xf32>,
    %150 = vector.extract_strided_slice %131 {offsets = [0, 9], sizes = [20, 210], strides = [1, 1]} : vector<20x243xf32> to vector<20x210xf32>
    %c180_77 = arith.constant 180 : index
    %c256_78 = arith.constant 256 : index
    %151 = vector.load %arg6[%c180_77, %c256_78] : memref<680x512xf32, #tpu.memory_space<vmem>>, vector<20x210xf32>
    tpu.vector_store %arg6[%c180_77, %c256_78], %150 {strides = array<i32>} : memref<680x512xf32, #tpu.memory_space<vmem>>, vector<20x210xf32>,
    %152 = vector.extract_strided_slice %131 {offsets = [0, 10], sizes = [20, 210], strides = [1, 1]} : vector<20x243xf32> to vector<20x210xf32>
    %c200_79 = arith.constant 200 : index
    %c256_80 = arith.constant 256 : index
    %153 = vector.load %arg6[%c200_79, %c256_80] : memref<680x512xf32, #tpu.memory_space<vmem>>, vector<20x210xf32>
    tpu.vector_store %arg6[%c200_79, %c256_80], %152 {strides = array<i32>} : memref<680x512xf32, #tpu.memory_space<vmem>>, vector<20x210xf32>,
    %154 = vector.extract_strided_slice %131 {offsets = [0, 11], sizes = [20, 210], strides = [1, 1]} : vector<20x243xf32> to vector<20x210xf32>
    %c220_81 = arith.constant 220 : index
    %c256_82 = arith.constant 256 : index
    %155 = vector.load %arg6[%c220_81, %c256_82] : memref<680x512xf32, #tpu.memory_space<vmem>>, vector<20x210xf32>
    tpu.vector_store %arg6[%c220_81, %c256_82], %154 {strides = array<i32>} : memref<680x512xf32, #tpu.memory_space<vmem>>, vector<20x210xf32>,
    %156 = vector.extract_strided_slice %131 {offsets = [0, 12], sizes = [20, 210], strides = [1, 1]} : vector<20x243xf32> to vector<20x210xf32>
    %c240_83 = arith.constant 240 : index
    %c256_84 = arith.constant 256 : index
    %157 = vector.load %arg6[%c240_83, %c256_84] : memref<680x512xf32, #tpu.memory_space<vmem>>, vector<20x210xf32>
    tpu.vector_store %arg6[%c240_83, %c256_84], %156 {strides = array<i32>} : memref<680x512xf32, #tpu.memory_space<vmem>>, vector<20x210xf32>,
    %158 = vector.extract_strided_slice %131 {offsets = [0, 13], sizes = [20, 210], strides = [1, 1]} : vector<20x243xf32> to vector<20x210xf32>
    %c260_85 = arith.constant 260 : index
    %c256_86 = arith.constant 256 : index
    %159 = vector.load %arg6[%c260_85, %c256_86] : memref<680x512xf32, #tpu.memory_space<vmem>>, vector<20x210xf32>
    tpu.vector_store %arg6[%c260_85, %c256_86], %158 {strides = array<i32>} : memref<680x512xf32, #tpu.memory_space<vmem>>, vector<20x210xf32>,
    %160 = vector.extract_strided_slice %131 {offsets = [0, 14], sizes = [20, 210], strides = [1, 1]} : vector<20x243xf32> to vector<20x210xf32>
    %c280_87 = arith.constant 280 : index
    %c256_88 = arith.constant 256 : index
    %161 = vector.load %arg6[%c280_87, %c256_88] : memref<680x512xf32, #tpu.memory_space<vmem>>, vector<20x210xf32>
    tpu.vector_store %arg6[%c280_87, %c256_88], %160 {strides = array<i32>} : memref<680x512xf32, #tpu.memory_space<vmem>>, vector<20x210xf32>,
    %162 = vector.extract_strided_slice %131 {offsets = [0, 15], sizes = [20, 210], strides = [1, 1]} : vector<20x243xf32> to vector<20x210xf32>
    %c300_89 = arith.constant 300 : index
    %c256_90 = arith.constant 256 : index
    %163 = vector.load %arg6[%c300_89, %c256_90] : memref<680x512xf32, #tpu.memory_space<vmem>>, vector<20x210xf32>
    tpu.vector_store %arg6[%c300_89, %c256_90], %162 {strides = array<i32>} : memref<680x512xf32, #tpu.memory_space<vmem>>, vector<20x210xf32>,
    %164 = vector.extract_strided_slice %131 {offsets = [0, 16], sizes = [20, 210], strides = [1, 1]} : vector<20x243xf32> to vector<20x210xf32>
    %c320_91 = arith.constant 320 : index
    %c256_92 = arith.constant 256 : index
    %165 = vector.load %arg6[%c320_91, %c256_92] : memref<680x512xf32, #tpu.memory_space<vmem>>, vector<20x210xf32>
    tpu.vector_store %arg6[%c320_91, %c256_92], %164 {strides = array<i32>} : memref<680x512xf32, #tpu.memory_space<vmem>>, vector<20x210xf32>,
    %166 = vector.extract_strided_slice %131 {offsets = [0, 17], sizes = [20, 210], strides = [1, 1]} : vector<20x243xf32> to vector<20x210xf32>
    %c340_93 = arith.constant 340 : index
    %c256_94 = arith.constant 256 : index
    %167 = vector.load %arg6[%c340_93, %c256_94] : memref<680x512xf32, #tpu.memory_space<vmem>>, vector<20x210xf32>
    tpu.vector_store %arg6[%c340_93, %c256_94], %166 {strides = array<i32>} : memref<680x512xf32, #tpu.memory_space<vmem>>, vector<20x210xf32>,
    %168 = vector.extract_strided_slice %131 {offsets = [0, 18], sizes = [20, 210], strides = [1, 1]} : vector<20x243xf32> to vector<20x210xf32>
    %c360_95 = arith.constant 360 : index
    %c256_96 = arith.constant 256 : index
    %169 = vector.load %arg6[%c360_95, %c256_96] : memref<680x512xf32, #tpu.memory_space<vmem>>, vector<20x210xf32>
    tpu.vector_store %arg6[%c360_95, %c256_96], %168 {strides = array<i32>} : memref<680x512xf32, #tpu.memory_space<vmem>>, vector<20x210xf32>,
    %170 = vector.extract_strided_slice %131 {offsets = [0, 19], sizes = [20, 210], strides = [1, 1]} : vector<20x243xf32> to vector<20x210xf32>
    %c380_97 = arith.constant 380 : index
    %c256_98 = arith.constant 256 : index
    %171 = vector.load %arg6[%c380_97, %c256_98] : memref<680x512xf32, #tpu.memory_space<vmem>>, vector<20x210xf32>
    tpu.vector_store %arg6[%c380_97, %c256_98], %170 {strides = array<i32>} : memref<680x512xf32, #tpu.memory_space<vmem>>, vector<20x210xf32>,
    %172 = vector.extract_strided_slice %131 {offsets = [0, 20], sizes = [20, 210], strides = [1, 1]} : vector<20x243xf32> to vector<20x210xf32>
    %c400_99 = arith.constant 400 : index
    %c256_100 = arith.constant 256 : index
    %173 = vector.load %arg6[%c400_99, %c256_100] : memref<680x512xf32, #tpu.memory_space<vmem>>, vector<20x210xf32>
    tpu.vector_store %arg6[%c400_99, %c256_100], %172 {strides = array<i32>} : memref<680x512xf32, #tpu.memory_space<vmem>>, vector<20x210xf32>,
    %174 = vector.extract_strided_slice %131 {offsets = [0, 21], sizes = [20, 210], strides = [1, 1]} : vector<20x243xf32> to vector<20x210xf32>
    %c420_101 = arith.constant 420 : index
    %c256_102 = arith.constant 256 : index
    %175 = vector.load %arg6[%c420_101, %c256_102] : memref<680x512xf32, #tpu.memory_space<vmem>>, vector<20x210xf32>
    tpu.vector_store %arg6[%c420_101, %c256_102], %174 {strides = array<i32>} : memref<680x512xf32, #tpu.memory_space<vmem>>, vector<20x210xf32>,
    %176 = vector.extract_strided_slice %131 {offsets = [0, 22], sizes = [20, 210], strides = [1, 1]} : vector<20x243xf32> to vector<20x210xf32>
    %c440_103 = arith.constant 440 : index
    %c256_104 = arith.constant 256 : index
    %177 = vector.load %arg6[%c440_103, %c256_104] : memref<680x512xf32, #tpu.memory_space<vmem>>, vector<20x210xf32>
    tpu.vector_store %arg6[%c440_103, %c256_104], %176 {strides = array<i32>} : memref<680x512xf32, #tpu.memory_space<vmem>>, vector<20x210xf32>,
    %178 = vector.extract_strided_slice %131 {offsets = [0, 23], sizes = [20, 210], strides = [1, 1]} : vector<20x243xf32> to vector<20x210xf32>
    %c460_105 = arith.constant 460 : index
    %c256_106 = arith.constant 256 : index
    %179 = vector.load %arg6[%c460_105, %c256_106] : memref<680x512xf32, #tpu.memory_space<vmem>>, vector<20x210xf32>
    tpu.vector_store %arg6[%c460_105, %c256_106], %178 {strides = array<i32>} : memref<680x512xf32, #tpu.memory_space<vmem>>, vector<20x210xf32>,
    %180 = vector.extract_strided_slice %131 {offsets = [0, 24], sizes = [20, 210], strides = [1, 1]} : vector<20x243xf32> to vector<20x210xf32>
    %c480_107 = arith.constant 480 : index
    %c256_108 = arith.constant 256 : index
    %181 = vector.load %arg6[%c480_107, %c256_108] : memref<680x512xf32, #tpu.memory_space<vmem>>, vector<20x210xf32>
    tpu.vector_store %arg6[%c480_107, %c256_108], %180 {strides = array<i32>} : memref<680x512xf32, #tpu.memory_space<vmem>>, vector<20x210xf32>,
    %182 = vector.extract_strided_slice %131 {offsets = [0, 25], sizes = [20, 210], strides = [1, 1]} : vector<20x243xf32> to vector<20x210xf32>
    %c500_109 = arith.constant 500 : index
    %c256_110 = arith.constant 256 : index
    %183 = vector.load %arg6[%c500_109, %c256_110] : memref<680x512xf32, #tpu.memory_space<vmem>>, vector<20x210xf32>
    tpu.vector_store %arg6[%c500_109, %c256_110], %182 {strides = array<i32>} : memref<680x512xf32, #tpu.memory_space<vmem>>, vector<20x210xf32>,
    %184 = vector.extract_strided_slice %131 {offsets = [0, 26], sizes = [20, 210], strides = [1, 1]} : vector<20x243xf32> to vector<20x210xf32>
    %c520_111 = arith.constant 520 : index
    %c256_112 = arith.constant 256 : index
    %185 = vector.load %arg6[%c520_111, %c256_112] : memref<680x512xf32, #tpu.memory_space<vmem>>, vector<20x210xf32>
    tpu.vector_store %arg6[%c520_111, %c256_112], %184 {strides = array<i32>} : memref<680x512xf32, #tpu.memory_space<vmem>>, vector<20x210xf32>,
    %186 = vector.extract_strided_slice %131 {offsets = [0, 27], sizes = [20, 210], strides = [1, 1]} : vector<20x243xf32> to vector<20x210xf32>
    %c540_113 = arith.constant 540 : index
    %c256_114 = arith.constant 256 : index
    %187 = vector.load %arg6[%c540_113, %c256_114] : memref<680x512xf32, #tpu.memory_space<vmem>>, vector<20x210xf32>
    tpu.vector_store %arg6[%c540_113, %c256_114], %186 {strides = array<i32>} : memref<680x512xf32, #tpu.memory_space<vmem>>, vector<20x210xf32>,
    %188 = vector.extract_strided_slice %131 {offsets = [0, 28], sizes = [20, 210], strides = [1, 1]} : vector<20x243xf32> to vector<20x210xf32>
    %c560_115 = arith.constant 560 : index
    %c256_116 = arith.constant 256 : index
    %189 = vector.load %arg6[%c560_115, %c256_116] : memref<680x512xf32, #tpu.memory_space<vmem>>, vector<20x210xf32>
    tpu.vector_store %arg6[%c560_115, %c256_116], %188 {strides = array<i32>} : memref<680x512xf32, #tpu.memory_space<vmem>>, vector<20x210xf32>,
    %190 = vector.extract_strided_slice %131 {offsets = [0, 29], sizes = [20, 210], strides = [1, 1]} : vector<20x243xf32> to vector<20x210xf32>
    %c580_117 = arith.constant 580 : index
    %c256_118 = arith.constant 256 : index
    %191 = vector.load %arg6[%c580_117, %c256_118] : memref<680x512xf32, #tpu.memory_space<vmem>>, vector<20x210xf32>
    tpu.vector_store %arg6[%c580_117, %c256_118], %190 {strides = array<i32>} : memref<680x512xf32, #tpu.memory_space<vmem>>, vector<20x210xf32>,
    %192 = vector.extract_strided_slice %131 {offsets = [0, 30], sizes = [20, 210], strides = [1, 1]} : vector<20x243xf32> to vector<20x210xf32>
    %c600_119 = arith.constant 600 : index
    %c256_120 = arith.constant 256 : index
    %193 = vector.load %arg6[%c600_119, %c256_120] : memref<680x512xf32, #tpu.memory_space<vmem>>, vector<20x210xf32>
    tpu.vector_store %arg6[%c600_119, %c256_120], %192 {strides = array<i32>} : memref<680x512xf32, #tpu.memory_space<vmem>>, vector<20x210xf32>,
    %194 = vector.extract_strided_slice %131 {offsets = [0, 31], sizes = [20, 210], strides = [1, 1]} : vector<20x243xf32> to vector<20x210xf32>
    %c620_121 = arith.constant 620 : index
    %c256_122 = arith.constant 256 : index
    %195 = vector.load %arg6[%c620_121, %c256_122] : memref<680x512xf32, #tpu.memory_space<vmem>>, vector<20x210xf32>
    tpu.vector_store %arg6[%c620_121, %c256_122], %194 {strides = array<i32>} : memref<680x512xf32, #tpu.memory_space<vmem>>, vector<20x210xf32>,
    %196 = vector.extract_strided_slice %131 {offsets = [0, 32], sizes = [20, 210], strides = [1, 1]} : vector<20x243xf32> to vector<20x210xf32>
    %c640_123 = arith.constant 640 : index
    %c256_124 = arith.constant 256 : index
    %197 = vector.load %arg6[%c640_123, %c256_124] : memref<680x512xf32, #tpu.memory_space<vmem>>, vector<20x210xf32>
    tpu.vector_store %arg6[%c640_123, %c256_124], %196 {strides = array<i32>} : memref<680x512xf32, #tpu.memory_space<vmem>>, vector<20x210xf32>,
    %198 = vector.extract_strided_slice %131 {offsets = [0, 33], sizes = [20, 210], strides = [1, 1]} : vector<20x243xf32> to vector<20x210xf32>
    %c660_125 = arith.constant 660 : index
    %c256_126 = arith.constant 256 : index
    %199 = vector.load %arg6[%c660_125, %c256_126] : memref<680x512xf32, #tpu.memory_space<vmem>>, vector<20x210xf32>
    tpu.vector_store %arg6[%c660_125, %c256_126], %198 {strides = array<i32>} : memref<680x512xf32, #tpu.memory_space<vmem>>, vector<20x210xf32>,
    %c0_127 = arith.constant 0 : index
    %c0_128 = arith.constant 0 : index
    %200 = vector.load %arg3[%c0_127, %c0_128] : memref<10x680xf32, #tpu.memory_space<vmem>>, vector<10x680xf32>
    %c0_129 = arith.constant 0 : index
    %c0_130 = arith.constant 0 : index
    %201 = vector.load %arg6[%c0_129, %c0_130] : memref<680x512xf32, #tpu.memory_space<vmem>>, vector<680x512xf32>
    %cst_131 = arith.constant dense<0.000000e+00> : vector<10x512xf32>
    %202 = tpu.matmul %200, %201, %cst_131 {dimension_numbers = #tpu.dot_dimension_numbers<[1], [0], [0], [1], [0, 0, 1, 1], [], []>} : vector<10x680xf32>, vector<680x512xf32>, vector<10x512xf32> -> vector<10x512xf32>
    %c0_132 = arith.constant 0 : index
    %c52 = arith.constant 52 : index
    %203 = vector.load %arg4[%c0_132, %c52] : memref<210x160xf32, #tpu.memory_space<vmem>>, vector<10x1xf32>
    %204 = vector.broadcast %203 : vector<10x1xf32> to vector<10x512xf32>
    %205 = arith.addf %202, %204 : vector<10x512xf32>
    %206 = arith.mulf %205, %205 : vector<10x512xf32>
    %c0_133 = arith.constant 0 : index
    %c0_134 = arith.constant 0 : index
    %207 = vector.load %arg4[%c0_133, %c0_134] : memref<210x160xf32, #tpu.memory_space<vmem>>, vector<210x10xf32>
    %c0_135 = arith.constant 0 : index
    %c60_136 = arith.constant 60 : index
    %208 = vector.load %arg4[%c0_135, %c60_136] : memref<210x160xf32, #tpu.memory_space<vmem>>, vector<10x100xf32>
    %c25 = arith.constant 25 : index
    %c10_137 = arith.constant 10 : index
    %209 = vector.load %arg4[%c25, %c10_137] : memref<210x160xf32, #tpu.memory_space<vmem>>, vector<1x10xf32>
    %c20_138 = arith.constant 20 : index
    %c10_139 = arith.constant 10 : index
    %210 = vector.load %arg4[%c20_138, %c10_139] : memref<210x160xf32, #tpu.memory_space<vmem>>, vector<5x10xf32>
    %c0_140 = arith.constant 0 : index
    %c53 = arith.constant 53 : index
    %211 = vector.load %arg4[%c0_140, %c53] : memref<210x160xf32, #tpu.memory_space<vmem>>, vector<5x1xf32>
    %c20_141 = arith.constant 20 : index
    %c20_142 = arith.constant 20 : index
    %212 = vector.load %arg4[%c20_141, %c20_142] : memref<210x160xf32, #tpu.memory_space<vmem>>, vector<5x3xf32>
    %c26 = arith.constant 26 : index
    %c10_143 = arith.constant 10 : index
    %213 = vector.load %arg4[%c26, %c10_143] : memref<210x160xf32, #tpu.memory_space<vmem>>, vector<1x3xf32>
    %214 = vector.extract_strided_slice %206 {offsets = [0, 0], sizes = [10, 210], strides = [1, 1]} : vector<10x512xf32> to vector<10x210xf32>
    %cst_144 = arith.constant dense<0.000000e+00> : vector<10x10xf32>
    %215 = tpu.matmul %214, %207, %cst_144 {dimension_numbers = #tpu.dot_dimension_numbers<[1], [0], [0], [1], [0, 0, 1, 1], [], []>} : vector<10x210xf32>, vector<210x10xf32>, vector<10x10xf32> -> vector<10x10xf32>
    %cst_145 = arith.constant 9.99999997E-7 : f32
    %216 = vector.broadcast %cst_145 : f32 to vector<10x10xf32>
    %217 = arith.maximumf %215, %216 : vector<10x10xf32>
    %218 = math.log %217 : vector<10x10xf32>
    %219 = vector.extract_strided_slice %218 {offsets = [0, 0], sizes = [10, 1], strides = [1, 1]} : vector<10x10xf32> to vector<10x1xf32>
    %220 = vector.extract_strided_slice %208 {offsets = [0, 0], sizes = [10, 10], strides = [1, 1]} : vector<10x100xf32> to vector<10x10xf32>
    %221 = vector.broadcast %219 : vector<10x1xf32> to vector<10x10xf32>
    %222 = arith.mulf %221, %220 : vector<10x10xf32>
    %223 = vector.extract_strided_slice %218 {offsets = [0, 1], sizes = [10, 1], strides = [1, 1]} : vector<10x10xf32> to vector<10x1xf32>
    %224 = vector.extract_strided_slice %208 {offsets = [0, 10], sizes = [10, 10], strides = [1, 1]} : vector<10x100xf32> to vector<10x10xf32>
    %225 = vector.broadcast %223 : vector<10x1xf32> to vector<10x10xf32>
    %226 = arith.mulf %225, %224 : vector<10x10xf32>
    %227 = arith.addf %222, %226 : vector<10x10xf32>
    %228 = vector.extract_strided_slice %218 {offsets = [0, 2], sizes = [10, 1], strides = [1, 1]} : vector<10x10xf32> to vector<10x1xf32>
    %229 = vector.extract_strided_slice %208 {offsets = [0, 20], sizes = [10, 10], strides = [1, 1]} : vector<10x100xf32> to vector<10x10xf32>
    %230 = vector.broadcast %228 : vector<10x1xf32> to vector<10x10xf32>
    %231 = arith.mulf %230, %229 : vector<10x10xf32>
    %232 = arith.addf %227, %231 : vector<10x10xf32>
    %233 = vector.extract_strided_slice %218 {offsets = [0, 3], sizes = [10, 1], strides = [1, 1]} : vector<10x10xf32> to vector<10x1xf32>
    %234 = vector.extract_strided_slice %208 {offsets = [0, 30], sizes = [10, 10], strides = [1, 1]} : vector<10x100xf32> to vector<10x10xf32>
    %235 = vector.broadcast %233 : vector<10x1xf32> to vector<10x10xf32>
    %236 = arith.mulf %235, %234 : vector<10x10xf32>
    %237 = arith.addf %232, %236 : vector<10x10xf32>
    %238 = vector.extract_strided_slice %218 {offsets = [0, 4], sizes = [10, 1], strides = [1, 1]} : vector<10x10xf32> to vector<10x1xf32>
    %239 = vector.extract_strided_slice %208 {offsets = [0, 40], sizes = [10, 10], strides = [1, 1]} : vector<10x100xf32> to vector<10x10xf32>
    %240 = vector.broadcast %238 : vector<10x1xf32> to vector<10x10xf32>
    %241 = arith.mulf %240, %239 : vector<10x10xf32>
    %242 = arith.addf %237, %241 : vector<10x10xf32>
    %243 = vector.extract_strided_slice %218 {offsets = [0, 5], sizes = [10, 1], strides = [1, 1]} : vector<10x10xf32> to vector<10x1xf32>
    %244 = vector.extract_strided_slice %208 {offsets = [0, 50], sizes = [10, 10], strides = [1, 1]} : vector<10x100xf32> to vector<10x10xf32>
    %245 = vector.broadcast %243 : vector<10x1xf32> to vector<10x10xf32>
    %246 = arith.mulf %245, %244 : vector<10x10xf32>
    %247 = arith.addf %242, %246 : vector<10x10xf32>
    %248 = vector.extract_strided_slice %218 {offsets = [0, 6], sizes = [10, 1], strides = [1, 1]} : vector<10x10xf32> to vector<10x1xf32>
    %249 = vector.extract_strided_slice %208 {offsets = [0, 60], sizes = [10, 10], strides = [1, 1]} : vector<10x100xf32> to vector<10x10xf32>
    %250 = vector.broadcast %248 : vector<10x1xf32> to vector<10x10xf32>
    %251 = arith.mulf %250, %249 : vector<10x10xf32>
    %252 = arith.addf %247, %251 : vector<10x10xf32>
    %253 = vector.extract_strided_slice %218 {offsets = [0, 7], sizes = [10, 1], strides = [1, 1]} : vector<10x10xf32> to vector<10x1xf32>
    %254 = vector.extract_strided_slice %208 {offsets = [0, 70], sizes = [10, 10], strides = [1, 1]} : vector<10x100xf32> to vector<10x10xf32>
    %255 = vector.broadcast %253 : vector<10x1xf32> to vector<10x10xf32>
    %256 = arith.mulf %255, %254 : vector<10x10xf32>
    %257 = arith.addf %252, %256 : vector<10x10xf32>
    %258 = vector.extract_strided_slice %218 {offsets = [0, 8], sizes = [10, 1], strides = [1, 1]} : vector<10x10xf32> to vector<10x1xf32>
    %259 = vector.extract_strided_slice %208 {offsets = [0, 80], sizes = [10, 10], strides = [1, 1]} : vector<10x100xf32> to vector<10x10xf32>
    %260 = vector.broadcast %258 : vector<10x1xf32> to vector<10x10xf32>
    %261 = arith.mulf %260, %259 : vector<10x10xf32>
    %262 = arith.addf %257, %261 : vector<10x10xf32>
    %263 = vector.extract_strided_slice %218 {offsets = [0, 9], sizes = [10, 1], strides = [1, 1]} : vector<10x10xf32> to vector<10x1xf32>
    %264 = vector.extract_strided_slice %208 {offsets = [0, 90], sizes = [10, 10], strides = [1, 1]} : vector<10x100xf32> to vector<10x10xf32>
    %265 = vector.broadcast %263 : vector<10x1xf32> to vector<10x10xf32>
    %266 = arith.mulf %265, %264 : vector<10x10xf32>
    %267 = arith.addf %262, %266 : vector<10x10xf32>
    %cst_146 = arith.constant dense<0.000000e+00> : vector<10xf32>
    %268 = vector.multi_reduction <add>, %267, %cst_146 [0] : vector<10x10xf32> to vector<10xf32>
    %269 = vector.shape_cast %268 : vector<10xf32> to vector<1x10xf32>
    %270 = arith.addf %269, %209 : vector<1x10xf32>
    %271 = vector.broadcast %270 : vector<1x10xf32> to vector<5x10xf32>
    %272 = arith.mulf %210, %271 : vector<5x10xf32>
    %cst_147 = arith.constant dense<0.000000e+00> : vector<5xf32>
    %273 = vector.multi_reduction <add>, %272, %cst_147 [1] : vector<5x10xf32> to vector<5xf32>
    %274 = vector.shape_cast %273 : vector<5xf32> to vector<5x1xf32>
    %275 = arith.addf %274, %211 : vector<5x1xf32>
    %276 = math.tanh %275 : vector<5x1xf32>
    %277 = vector.broadcast %276 : vector<5x1xf32> to vector<5x3xf32>
    %278 = arith.mulf %212, %277 : vector<5x3xf32>
    %cst_148 = arith.constant dense<0.000000e+00> : vector<3xf32>
    %279 = vector.multi_reduction <add>, %278, %cst_148 [0] : vector<5x3xf32> to vector<3xf32>
    %280 = vector.shape_cast %279 : vector<3xf32> to vector<1x3xf32>
    %281 = arith.addf %280, %213 : vector<1x3xf32>
    %282 = vector.extract_strided_slice %206 {offsets = [0, 256], sizes = [10, 210], strides = [1, 1]} : vector<10x512xf32> to vector<10x210xf32>
    %cst_149 = arith.constant dense<0.000000e+00> : vector<10x10xf32>
    %283 = tpu.matmul %282, %207, %cst_149 {dimension_numbers = #tpu.dot_dimension_numbers<[1], [0], [0], [1], [0, 0, 1, 1], [], []>} : vector<10x210xf32>, vector<210x10xf32>, vector<10x10xf32> -> vector<10x10xf32>
    %cst_150 = arith.constant 9.99999997E-7 : f32
    %284 = vector.broadcast %cst_150 : f32 to vector<10x10xf32>
    %285 = arith.maximumf %283, %284 : vector<10x10xf32>
    %286 = math.log %285 : vector<10x10xf32>
    %287 = vector.extract_strided_slice %286 {offsets = [0, 0], sizes = [10, 1], strides = [1, 1]} : vector<10x10xf32> to vector<10x1xf32>
    %288 = vector.extract_strided_slice %208 {offsets = [0, 0], sizes = [10, 10], strides = [1, 1]} : vector<10x100xf32> to vector<10x10xf32>
    %289 = vector.broadcast %287 : vector<10x1xf32> to vector<10x10xf32>
    %290 = arith.mulf %289, %288 : vector<10x10xf32>
    %291 = vector.extract_strided_slice %286 {offsets = [0, 1], sizes = [10, 1], strides = [1, 1]} : vector<10x10xf32> to vector<10x1xf32>
    %292 = vector.extract_strided_slice %208 {offsets = [0, 10], sizes = [10, 10], strides = [1, 1]} : vector<10x100xf32> to vector<10x10xf32>
    %293 = vector.broadcast %291 : vector<10x1xf32> to vector<10x10xf32>
    %294 = arith.mulf %293, %292 : vector<10x10xf32>
    %295 = arith.addf %290, %294 : vector<10x10xf32>
    %296 = vector.extract_strided_slice %286 {offsets = [0, 2], sizes = [10, 1], strides = [1, 1]} : vector<10x10xf32> to vector<10x1xf32>
    %297 = vector.extract_strided_slice %208 {offsets = [0, 20], sizes = [10, 10], strides = [1, 1]} : vector<10x100xf32> to vector<10x10xf32>
    %298 = vector.broadcast %296 : vector<10x1xf32> to vector<10x10xf32>
    %299 = arith.mulf %298, %297 : vector<10x10xf32>
    %300 = arith.addf %295, %299 : vector<10x10xf32>
    %301 = vector.extract_strided_slice %286 {offsets = [0, 3], sizes = [10, 1], strides = [1, 1]} : vector<10x10xf32> to vector<10x1xf32>
    %302 = vector.extract_strided_slice %208 {offsets = [0, 30], sizes = [10, 10], strides = [1, 1]} : vector<10x100xf32> to vector<10x10xf32>
    %303 = vector.broadcast %301 : vector<10x1xf32> to vector<10x10xf32>
    %304 = arith.mulf %303, %302 : vector<10x10xf32>
    %305 = arith.addf %300, %304 : vector<10x10xf32>
    %306 = vector.extract_strided_slice %286 {offsets = [0, 4], sizes = [10, 1], strides = [1, 1]} : vector<10x10xf32> to vector<10x1xf32>
    %307 = vector.extract_strided_slice %208 {offsets = [0, 40], sizes = [10, 10], strides = [1, 1]} : vector<10x100xf32> to vector<10x10xf32>
    %308 = vector.broadcast %306 : vector<10x1xf32> to vector<10x10xf32>
    %309 = arith.mulf %308, %307 : vector<10x10xf32>
    %310 = arith.addf %305, %309 : vector<10x10xf32>
    %311 = vector.extract_strided_slice %286 {offsets = [0, 5], sizes = [10, 1], strides = [1, 1]} : vector<10x10xf32> to vector<10x1xf32>
    %312 = vector.extract_strided_slice %208 {offsets = [0, 50], sizes = [10, 10], strides = [1, 1]} : vector<10x100xf32> to vector<10x10xf32>
    %313 = vector.broadcast %311 : vector<10x1xf32> to vector<10x10xf32>
    %314 = arith.mulf %313, %312 : vector<10x10xf32>
    %315 = arith.addf %310, %314 : vector<10x10xf32>
    %316 = vector.extract_strided_slice %286 {offsets = [0, 6], sizes = [10, 1], strides = [1, 1]} : vector<10x10xf32> to vector<10x1xf32>
    %317 = vector.extract_strided_slice %208 {offsets = [0, 60], sizes = [10, 10], strides = [1, 1]} : vector<10x100xf32> to vector<10x10xf32>
    %318 = vector.broadcast %316 : vector<10x1xf32> to vector<10x10xf32>
    %319 = arith.mulf %318, %317 : vector<10x10xf32>
    %320 = arith.addf %315, %319 : vector<10x10xf32>
    %321 = vector.extract_strided_slice %286 {offsets = [0, 7], sizes = [10, 1], strides = [1, 1]} : vector<10x10xf32> to vector<10x1xf32>
    %322 = vector.extract_strided_slice %208 {offsets = [0, 70], sizes = [10, 10], strides = [1, 1]} : vector<10x100xf32> to vector<10x10xf32>
    %323 = vector.broadcast %321 : vector<10x1xf32> to vector<10x10xf32>
    %324 = arith.mulf %323, %322 : vector<10x10xf32>
    %325 = arith.addf %320, %324 : vector<10x10xf32>
    %326 = vector.extract_strided_slice %286 {offsets = [0, 8], sizes = [10, 1], strides = [1, 1]} : vector<10x10xf32> to vector<10x1xf32>
    %327 = vector.extract_strided_slice %208 {offsets = [0, 80], sizes = [10, 10], strides = [1, 1]} : vector<10x100xf32> to vector<10x10xf32>
    %328 = vector.broadcast %326 : vector<10x1xf32> to vector<10x10xf32>
    %329 = arith.mulf %328, %327 : vector<10x10xf32>
    %330 = arith.addf %325, %329 : vector<10x10xf32>
    %331 = vector.extract_strided_slice %286 {offsets = [0, 9], sizes = [10, 1], strides = [1, 1]} : vector<10x10xf32> to vector<10x1xf32>
    %332 = vector.extract_strided_slice %208 {offsets = [0, 90], sizes = [10, 10], strides = [1, 1]} : vector<10x100xf32> to vector<10x10xf32>
    %333 = vector.broadcast %331 : vector<10x1xf32> to vector<10x10xf32>
    %334 = arith.mulf %333, %332 : vector<10x10xf32>
    %335 = arith.addf %330, %334 : vector<10x10xf32>
    %cst_151 = arith.constant dense<0.000000e+00> : vector<10xf32>
    %336 = vector.multi_reduction <add>, %335, %cst_151 [0] : vector<10x10xf32> to vector<10xf32>
    %337 = vector.shape_cast %336 : vector<10xf32> to vector<1x10xf32>
    %338 = arith.addf %337, %209 : vector<1x10xf32>
    %339 = vector.broadcast %338 : vector<1x10xf32> to vector<5x10xf32>
    %340 = arith.mulf %210, %339 : vector<5x10xf32>
    %cst_152 = arith.constant dense<0.000000e+00> : vector<5xf32>
    %341 = vector.multi_reduction <add>, %340, %cst_152 [1] : vector<5x10xf32> to vector<5xf32>
    %342 = vector.shape_cast %341 : vector<5xf32> to vector<5x1xf32>
    %343 = arith.addf %342, %211 : vector<5x1xf32>
    %344 = math.tanh %343 : vector<5x1xf32>
    %345 = vector.broadcast %344 : vector<5x1xf32> to vector<5x3xf32>
    %346 = arith.mulf %212, %345 : vector<5x3xf32>
    %cst_153 = arith.constant dense<0.000000e+00> : vector<3xf32>
    %347 = vector.multi_reduction <add>, %346, %cst_153 [0] : vector<5x3xf32> to vector<3xf32>
    %348 = vector.shape_cast %347 : vector<3xf32> to vector<1x3xf32>
    %349 = arith.addf %348, %213 : vector<1x3xf32>
    %350 = tpu.concatenate %281, %349 in 0 : vector<1x3xf32>, vector<1x3xf32> -> vector<2x3xf32>
    %c0_154 = arith.constant 0 : index
    %c0_155 = arith.constant 0 : index
    %351 = vector.load %arg5[%c0_154, %c0_155] : memref<2x3xf32, #tpu.memory_space<vmem>>, vector<2x3xf32>
    tpu.vector_store %arg5[%c0_154, %c0_155], %350 {strides = array<i32>} : memref<2x3xf32, #tpu.memory_space<vmem>>, vector<2x3xf32>,
    return
  }
  func.func @transform_0(%arg0: i32) -> (i32, i32, i32) {
    %c0_i32 = arith.constant 0 : i32
    %c0_i32_0 = arith.constant 0 : i32
    %c0_i32_1 = arith.constant 0 : i32
    return %arg0, %c0_i32, %c0_i32_0 : i32, i32, i32
  }
  func.func @transform_1(%arg0: i32) -> (i32, i32, i32) {
    %c0_i32 = arith.constant 0 : i32
    %c0_i32_0 = arith.constant 0 : i32
    %c0_i32_1 = arith.constant 0 : i32
    return %arg0, %c0_i32, %c0_i32_0 : i32, i32, i32
  }
  func.func @transform_2(%arg0: i32) -> (i32, i32) {
    %c0_i32 = arith.constant 0 : i32
    %c0_i32_0 = arith.constant 0 : i32
    %c0_i32_1 = arith.constant 0 : i32
    return %c0_i32, %c0_i32_0 : i32, i32
  }
  func.func @transform_3(%arg0: i32) -> (i32, i32) {
    %c0_i32 = arith.constant 0 : i32
    %c0_i32_0 = arith.constant 0 : i32
    %c0_i32_1 = arith.constant 0 : i32
    return %c0_i32, %c0_i32_0 : i32, i32
  }
  func.func @transform_4(%arg0: i32) -> (i32, i32) {
    %c0_i32 = arith.constant 0 : i32
    %c0_i32_0 = arith.constant 0 : i32
    return %arg0, %c0_i32 : i32, i32
  }
}

</mosaic_0001>

<llo_original>
// kernel: fwd.1
$region0: #{fwd.1}
  #allocation0 [shape = 'u32[]', space=smem, size = 0x4, offset = 0x4, fixed_abs, tag = 'smem constant byte address 0x4 - core index']
  #allocation1 [shape = 'u32[72,128]{1,0:T(1,128)}', space=vmem, size = 0x9000, scoped, tag = 'internal scratch']
  #allocation2 [shape = 'f32[680,512]{1,0:T(8,128)}', space=vmem, size = 0x154000, scoped, tag = 'scratch operand']
  %s0 = inlined_call_operand.vmem [shape: f32[2,20,243], index: 0, kind: input, shape index: {}]
  %s1 = inlined_call_operand.vmem [shape: f32[2,243,20], index: 1, kind: input, shape index: {}]
  %s2 = inlined_call_operand.vmem [shape: f32[10,680], index: 2, kind: input, shape index: {}]
  %s3 = inlined_call_operand.vmem [shape: f32[210,160], index: 3, kind: input, shape index: {}]
  %s4 = inlined_call_operand.hbm [shape: f32[2,3], index: 4, kind: output, shape index: {}]
  %s5 = sld [smem:[#allocation0]]
  $region26: #{fwd.1} parent=0
    _
  %s7 = ssub.s32 1, %s5
  %s8 = scalar_select 0, %s7, %s5
  $region1: #{fwd.1} parent=0
    #allocation3 [shape = 'u8[1024]{0}', space=vmem, size = 0x400, scoped, tag = 'output window, operand 0, single buffered']
    #allocation4 [shape = 's32[1]{0}', space=sflag, size = 0x4, scoped, tag = 'scoped memory for fwd.1']
    %9 = vsyncpa [#allocation4], 0
    // Predicated region
    $region2: #{fwd.1} parent=1 // pred_check
      _
    $region3: #{fwd.1} parent=1 // pred_check_branch
      %11 = sbr.rel (0) target = $region5
    $region4: #{fwd.1} parent=1 // pred_region
      _
    $region5: #{fwd.1} parent=1 // pred_fallthru
      _
    // Predicated region
    $region6: #{fwd.1} parent=1 // pred_check
      _
    $region7: #{fwd.1} parent=1 // pred_check_branch
      %13 = sbr.rel (0) target = $region9
    $region8: #{fwd.1} parent=1 // pred_region
      _
    $region9: #{fwd.1} parent=1 // pred_fallthru
      _
    // Predicated region
    $region10: #{fwd.1} parent=1 // pred_check
      _
    $region11: #{fwd.1} parent=1 // pred_check_branch
      %15 = sbr.rel (0) target = $region13
    $region12: #{fwd.1} parent=1 // pred_region
      _
    $region13: #{fwd.1} parent=1 // pred_fallthru
      _
    // Predicated region
    $region14: #{fwd.1} parent=1 // pred_check
      _
    $region15: #{fwd.1} parent=1 // pred_check_branch
      %17 = sbr.rel (0) target = $region17
    $region16: #{fwd.1} parent=1 // pred_region
      _
    $region17: #{fwd.1} parent=1 // pred_fallthru
      _
    %v18 = vld [vmem:[%s3] sm:$0xff]
    %v19 = vld [vmem:[%s3 + $0x10] sm:$0xff]
    %v20 = vld [vmem:[%s3 + $0x20] sm:$0xf]
    %v21 = vld [vmem:[%s0] sm:$0xff]
    %v22 = vld [vmem:[%s0 + $0x8] sm:$0xff]
    %v23 = vld [vmem:[%s0 + $0x10] sm:$0xff]
    %v24 = vld [vmem:[%s0 + $0x18] sm:$0xff]
    %v25 = vld [vmem:[%s0 + $0x20] sm:$0xf]
    %v26 = vld [vmem:[%s0 + $0x28] sm:$0xf]
    %v27 = vld [vmem:[%s1] sm:$0xff]
    %v28 = vld [vmem:[%s1 + $0x8] sm:$0xff]
    %v29 = vld [vmem:[%s1 + $0x10] sm:$0xff]
    %v30 = vld [vmem:[%s1 + $0x18] sm:$0xff]
    %v31 = vld [vmem:[%s1 + $0x20] sm:$0xff]
    %v32 = vld [vmem:[%s1 + $0x28] sm:$0xff]
    %v33 = vld [vmem:[%s1 + $0x30] sm:$0xff]
    %v34 = vld [vmem:[%s1 + $0x38] sm:$0xff]
    %v35 = vld [vmem:[%s1 + $0x40] sm:$0xff]
    %v36 = vld [vmem:[%s1 + $0x48] sm:$0xff]
    %v37 = vld [vmem:[%s1 + $0x50] sm:$0xff]
    %v38 = vld [vmem:[%s1 + $0x58] sm:$0xff]
    %v39 = vld [vmem:[%s1 + $0x60] sm:$0xff]
    %v40 = vld [vmem:[%s1 + $0x68] sm:$0xff]
    %v41 = vld [vmem:[%s1 + $0x70] sm:$0xff]
    %v42 = vld [vmem:[%s1 + $0x78] sm:$0xff]
    %v43 = vld [vmem:[%s1 + $0x80] sm:$0xff]
    %v44 = vld [vmem:[%s1 + $0x88] sm:$0xff]
    %v45 = vld [vmem:[%s1 + $0x90] sm:$0xff]
    %v46 = vld [vmem:[%s1 + $0x98] sm:$0xff]
    %v47 = vld [vmem:[%s1 + $0xa0] sm:$0xff]
    %v48 = vld [vmem:[%s1 + $0xa8] sm:$0xff]
    %v49 = vld [vmem:[%s1 + $0xb0] sm:$0xff]
    %v50 = vld [vmem:[%s1 + $0xb8] sm:$0xff]
    %v51 = vld [vmem:[%s1 + $0xc0] sm:$0xff]
    %v52 = vld [vmem:[%s1 + $0xc8] sm:$0xff]
    %v53 = vld [vmem:[%s1 + $0xd0] sm:$0xff]
    %v54 = vld [vmem:[%s1 + $0xd8] sm:$0xff]
    %v55 = vld [vmem:[%s1 + $0xe0] sm:$0xff]
    %v56 = vld [vmem:[%s1 + $0xe8] sm:$0xff]
    %v57 = vld [vmem:[%s1 + $0xf0] sm:$0x7]
    %vm58 = vcmask 162816
    %v59 = vsel %vm58, %v27, 0.0
    %v60 = vsel %vm58, %v28, 0.0
    %v61 = vadd.f32 %v59, %v60
    %v62 = vsel %vm58, %v29, 0.0
    %v63 = vadd.f32 %v61, %v62
    %v64 = vsel %vm58, %v30, 0.0
    %v65 = vadd.f32 %v63, %v64
    %v66 = vsel %vm58, %v31, 0.0
    %v67 = vadd.f32 %v65, %v66
    %v68 = vsel %vm58, %v32, 0.0
    %v69 = vadd.f32 %v67, %v68
    %v70 = vsel %vm58, %v33, 0.0
    %v71 = vadd.f32 %v69, %v70
    %v72 = vsel %vm58, %v34, 0.0
    %v73 = vadd.f32 %v71, %v72
    %v74 = vsel %vm58, %v35, 0.0
    %v75 = vadd.f32 %v73, %v74
    %v76 = vsel %vm58, %v36, 0.0
    %v77 = vadd.f32 %v75, %v76
    %v78 = vsel %vm58, %v37, 0.0
    %v79 = vadd.f32 %v77, %v78
    %v80 = vsel %vm58, %v38, 0.0
    %v81 = vadd.f32 %v79, %v80
    %v82 = vsel %vm58, %v39, 0.0
    %v83 = vadd.f32 %v81, %v82
    %v84 = vsel %vm58, %v40, 0.0
    %v85 = vadd.f32 %v83, %v84
    %v86 = vsel %vm58, %v41, 0.0
    %v87 = vadd.f32 %v85, %v86
    %v88 = vsel %vm58, %v42, 0.0
    %v89 = vadd.f32 %v87, %v88
    %v90 = vsel %vm58, %v43, 0.0
    %v91 = vadd.f32 %v89, %v90
    %v92 = vsel %vm58, %v44, 0.0
    %v93 = vadd.f32 %v91, %v92
    %v94 = vsel %vm58, %v45, 0.0
    %v95 = vadd.f32 %v93, %v94
    %v96 = vsel %vm58, %v46, 0.0
    %v97 = vadd.f32 %v95, %v96
    %v98 = vsel %vm58, %v47, 0.0
    %v99 = vadd.f32 %v97, %v98
    %v100 = vsel %vm58, %v48, 0.0
    %v101 = vadd.f32 %v99, %v100
    %v102 = vsel %vm58, %v49, 0.0
    %v103 = vadd.f32 %v101, %v102
    %v104 = vsel %vm58, %v50, 0.0
    %v105 = vadd.f32 %v103, %v104
    %v106 = vsel %vm58, %v51, 0.0
    %v107 = vadd.f32 %v105, %v106
    %v108 = vsel %vm58, %v52, 0.0
    %v109 = vadd.f32 %v107, %v108
    %v110 = vsel %vm58, %v53, 0.0
    %v111 = vadd.f32 %v109, %v110
    %v112 = vsel %vm58, %v54, 0.0
    %v113 = vadd.f32 %v111, %v112
    %v114 = vsel %vm58, %v55, 0.0
    %v115 = vadd.f32 %v113, %v114
    %v116 = vsel %vm58, %v56, 0.0
    %v117 = vadd.f32 %v115, %v116
    %vm118 = vcmask 157696
    %v119 = vsel %vm118, %v57, 0.0
    %v120 = vadd.f32 %v117, %v119
    %v121 = vrot.slane %v120, 4
    %v122 = vadd.f32 %v120, %v121
    %v123 = vrot.slane %v122, 2
    %v124 = vadd.f32 %v122, %v123
    %v125 = vrot.slane %v124, 1
    %v126 = vadd.f32 %v124, %v125
    %v127 = vrcp.pop 243.0
    %v128 = vmul.f32 243.0, %v127
    %v129 = vsub.f32 1.0, %v128
    %v130 = vmul.f32 %v127, %v129
    %v131 = vadd.f32 %v127, %v130
    %vm132 = vweird.f32 %v127
    %v133 = vsel %vm132, %v127, %v131
    %v134 = vmul.f32 %v126, %v133
    %v135 = vsub.f32 %v27, %v134
    %v136 = vsub.f32 %v28, %v134
    %v137 = vsub.f32 %v29, %v134
    %v138 = vsub.f32 %v30, %v134
    %v139 = vsub.f32 %v31, %v134
    %v140 = vsub.f32 %v32, %v134
    %v141 = vsub.f32 %v33, %v134
    %v142 = vsub.f32 %v34, %v134
    %v143 = vsub.f32 %v35, %v134
    %v144 = vsub.f32 %v36, %v134
    %v145 = vsub.f32 %v37, %v134
    %v146 = vsub.f32 %v38, %v134
    %v147 = vsub.f32 %v39, %v134
    %v148 = vsub.f32 %v40, %v134
    %v149 = vsub.f32 %v41, %v134
    %v150 = vsub.f32 %v42, %v134
    %v151 = vsub.f32 %v43, %v134
    %v152 = vsub.f32 %v44, %v134
    %v153 = vsub.f32 %v45, %v134
    %v154 = vsub.f32 %v46, %v134
    %v155 = vsub.f32 %v47, %v134
    %v156 = vsub.f32 %v48, %v134
    %v157 = vsub.f32 %v49, %v134
    %v158 = vsub.f32 %v50, %v134
    %v159 = vsub.f32 %v51, %v134
    %v160 = vsub.f32 %v52, %v134
    %v161 = vsub.f32 %v53, %v134
    %v162 = vsub.f32 %v54, %v134
    %v163 = vsub.f32 %v55, %v134
    %v164 = vsub.f32 %v56, %v134
    %v165 = vsub.f32 %v57, %v134
    %v166 = vmul.f32 %v135, %v135
    %v167 = vmul.f32 %v136, %v136
    %v168 = vmul.f32 %v137, %v137
    %v169 = vmul.f32 %v138, %v138
    %v170 = vmul.f32 %v139, %v139
    %v171 = vmul.f32 %v140, %v140
    %v172 = vmul.f32 %v141, %v141
    %v173 = vmul.f32 %v142, %v142
    %v174 = vmul.f32 %v143, %v143
    %v175 = vmul.f32 %v144, %v144
    %v176 = vmul.f32 %v145, %v145
    %v177 = vmul.f32 %v146, %v146
    %v178 = vmul.f32 %v147, %v147
    %v179 = vmul.f32 %v148, %v148
    %v180 = vmul.f32 %v149, %v149
    %v181 = vmul.f32 %v150, %v150
    %v182 = vmul.f32 %v151, %v151
    %v183 = vmul.f32 %v152, %v152
    %v184 = vmul.f32 %v153, %v153
    %v185 = vmul.f32 %v154, %v154
    %v186 = vmul.f32 %v155, %v155
    %v187 = vmul.f32 %v156, %v156
    %v188 = vmul.f32 %v157, %v157
    %v189 = vmul.f32 %v158, %v158
    %v190 = vmul.f32 %v159, %v159
    %v191 = vmul.f32 %v160, %v160
    %v192 = vmul.f32 %v161, %v161
    %v193 = vmul.f32 %v162, %v162
    %v194 = vmul.f32 %v163, %v163
    %v195 = vmul.f32 %v164, %v164
    %v196 = vmul.f32 %v165, %v165
    %v197 = vsel %vm58, %v166, 0.0
    %v198 = vsel %vm58, %v167, 0.0
    %v199 = vadd.f32 %v197, %v198
    %v200 = vsel %vm58, %v168, 0.0
    %v201 = vadd.f32 %v199, %v200
    %v202 = vsel %vm58, %v169, 0.0
    %v203 = vadd.f32 %v201, %v202
    %v204 = vsel %vm58, %v170, 0.0
    %v205 = vadd.f32 %v203, %v204
    %v206 = vsel %vm58, %v171, 0.0
    %v207 = vadd.f32 %v205, %v206
    %v208 = vsel %vm58, %v172, 0.0
    %v209 = vadd.f32 %v207, %v208
    %v210 = vsel %vm58, %v173, 0.0
    %v211 = vadd.f32 %v209, %v210
    %v212 = vsel %vm58, %v174, 0.0
    %v213 = vadd.f32 %v211, %v212
    %v214 = vsel %vm58, %v175, 0.0
    %v215 = vadd.f32 %v213, %v214
    %v216 = vsel %vm58, %v176, 0.0
    %v217 = vadd.f32 %v215, %v216
    %v218 = vsel %vm58, %v177, 0.0
    %v219 = vadd.f32 %v217, %v218
    %v220 = vsel %vm58, %v178, 0.0
    %v221 = vadd.f32 %v219, %v220
    %v222 = vsel %vm58, %v179, 0.0
    %v223 = vadd.f32 %v221, %v222
    %v224 = vsel %vm58, %v180, 0.0
    %v225 = vadd.f32 %v223, %v224
    %v226 = vsel %vm58, %v181, 0.0
    %v227 = vadd.f32 %v225, %v226
    %v228 = vsel %vm58, %v182, 0.0
    %v229 = vadd.f32 %v227, %v228
    %v230 = vsel %vm58, %v183, 0.0
    %v231 = vadd.f32 %v229, %v230
    %v232 = vsel %vm58, %v184, 0.0
    %v233 = vadd.f32 %v231, %v232
    %v234 = vsel %vm58, %v185, 0.0
    %v235 = vadd.f32 %v233, %v234
    %v236 = vsel %vm58, %v186, 0.0
    %v237 = vadd.f32 %v235, %v236
    %v238 = vsel %vm58, %v187, 0.0
    %v239 = vadd.f32 %v237, %v238
    %v240 = vsel %vm58, %v188, 0.0
    %v241 = vadd.f32 %v239, %v240
    %v242 = vsel %vm58, %v189, 0.0
    %v243 = vadd.f32 %v241, %v242
    %v244 = vsel %vm58, %v190, 0.0
    %v245 = vadd.f32 %v243, %v244
    %v246 = vsel %vm58, %v191, 0.0
    %v247 = vadd.f32 %v245, %v246
    %v248 = vsel %vm58, %v192, 0.0
    %v249 = vadd.f32 %v247, %v248
    %v250 = vsel %vm58, %v193, 0.0
    %v251 = vadd.f32 %v249, %v250
    %v252 = vsel %vm58, %v194, 0.0
    %v253 = vadd.f32 %v251, %v252
    %v254 = vsel %vm58, %v195, 0.0
    %v255 = vadd.f32 %v253, %v254
    %v256 = vsel %vm118, %v196, 0.0
    %v257 = vadd.f32 %v255, %v256
    %v258 = vrot.slane %v257, 4
    %v259 = vadd.f32 %v257, %v258
    %v260 = vrot.slane %v259, 2
    %v261 = vadd.f32 %v259, %v260
    %v262 = vrot.slane %v261, 1
    %v263 = vadd.f32 %v261, %v262
    %v264 = vmul.f32 %v263, 0.004132231
    %v265 = vrsqrt.pop %v264
    %v266 = vmul.f32 %v265, %v264
    %v267 = vmul.f32 %v266, %v265
    %v268 = vmul.f32 0.5, %v267
    %v269 = vsub.f32 1.5, %v268
    %v270 = vmul.f32 %v265, %v269
    %v271 = vmul.f32 %v264, %v270
    %vm272 = vcmp.eq.f32.partialorder %v264, inf
    %v273 = vsel %vm272, %v264, %v271
    %vm274 = vcmp.eq.f32.partialorder %v264, 0.0
    %v275 = vand.u32 %v264, 2147483648
    %v276 = vsel %vm274, %v275, %v273
    %278 = vrot.lane.b32.xlu0 %v134, 10
    %v279 = vpop.permute.xlu0 %278
    %v281 = vmul.f32 %v18, %v279
    %v282 = vmul.f32 %v19, %v279
    %v283 = vmul.f32 %v20, %v279
    %287 = vrot.lane.b32.xlu0 %v281, 118
    %v288 = vpop.permute.xlu0 %287
    %289 = vrot.lane.b32.xlu0 %v282, 118
    %v290 = vpop.permute.xlu0 %289
    %291 = vrot.lane.b32.xlu0 %v283, 118
    %v292 = vpop.permute.xlu0 %291
    %v296 = vsel %vm58, %v288, 0.0
    %297 = vadd.xlane.f32.xlu0 %v296
    %v298 = vpop.xlane.xlu0 %297
    %v299 = vsel %vm58, %v290, 0.0
    %300 = vadd.xlane.f32.xlu0 %v299
    %v301 = vpop.xlane.xlu0 %300
    %vm302 = vcmask 158720
    %v303 = vsel %vm302, %v292, 0.0
    %304 = vadd.xlane.f32.xlu0 %v303
    %v305 = vpop.xlane.xlu0 %304
    %v306 = vadd.f32 %v298, %v18
    %v307 = vadd.f32 %v301, %v19
    %v308 = vadd.f32 %v305, %v20
    %310 = vrot.lane.b32.xlu0 %v276, 30
    %v311 = vpop.permute.xlu0 %310
    %v313 = vmul.f32 %v18, %v311
    %v314 = vmul.f32 %v19, %v311
    %v315 = vmul.f32 %v20, %v311
    %319 = vrot.lane.b32.xlu0 %v313, 98
    %v320 = vpop.permute.xlu0 %319
    %321 = vrot.lane.b32.xlu0 %v314, 98
    %v322 = vpop.permute.xlu0 %321
    %323 = vrot.lane.b32.xlu0 %v315, 98
    %v324 = vpop.permute.xlu0 %323
    %v328 = vsel %vm58, %v320, 0.0
    %329 = vadd.xlane.f32.xlu0 %v328
    %v330 = vpop.xlane.xlu0 %329
    %v331 = vsel %vm58, %v322, 0.0
    %332 = vadd.xlane.f32.xlu0 %v331
    %v333 = vpop.xlane.xlu0 %332
    %v334 = vsel %vm302, %v324, 0.0
    %335 = vadd.xlane.f32.xlu0 %v334
    %v336 = vpop.xlane.xlu0 %335
    %v337 = vadd.f32 %v330, %v18
    %v338 = vadd.f32 %v333, %v19
    %v339 = vadd.f32 %v336, %v20
    %341 = vset.pattern.permute.xlu0 50
    %342 = vperm.xlu0 %341, %v306
    %v343 = vpop.permute.xlu0 %342
    %346 = vset.pattern.permute.xlu0 50
    %347 = vperm.xlu0 %346, %v307
    %v348 = vpop.permute.xlu0 %347
    %351 = vset.pattern.permute.xlu0 50
    %352 = vperm.xlu0 %351, %v308
    %v353 = vpop.permute.xlu0 %352
    %v355 = vsub.f32 %v21, %v343
    %v356 = vsub.f32 %v22, %v343
    %v357 = vsub.f32 %v23, %v348
    %v358 = vsub.f32 %v24, %v348
    %v359 = vsub.f32 %v25, %v353
    %v360 = vsub.f32 %v26, %v353
    %362 = vset.pattern.permute.xlu0 51
    %363 = vperm.xlu0 %362, %v337
    %v364 = vpop.permute.xlu0 %363
    %367 = vset.pattern.permute.xlu0 51
    %368 = vperm.xlu0 %367, %v338
    %v369 = vpop.permute.xlu0 %368
    %372 = vset.pattern.permute.xlu0 51
    %373 = vperm.xlu0 %372, %v339
    %v374 = vpop.permute.xlu0 %373
    %v376 = vmul.f32 %v355, %v364
    %v377 = vmul.f32 %v356, %v364
    %v378 = vmul.f32 %v357, %v369
    %v379 = vmul.f32 %v358, %v369
    %v380 = vmul.f32 %v359, %v374
    %v381 = vmul.f32 %v360, %v374
    %382 = vst [vmem:[#allocation2] sm:$0xff] %v376
    %vm383 = vcmask 670720
    %384 = vst.msk [vmem:[#allocation2 + $0x8] sm:$0xff] %vm383, %v377
    %385 = vst [vmem:[#allocation2 + $0x20] sm:$0xff] %v378
    %386 = vst.msk [vmem:[#allocation2 + $0x28] sm:$0xff] %vm383, %v379
    %387 = vst [vmem:[#allocation2 + $0x40] sm:$0xf] %v380
    %vm388 = vcmask 666624
    %389 = vst.msk [vmem:[#allocation2 + $0x48] sm:$0xf] %vm388, %v381
    %vm396 = vcmask 1043456
    %v397 = vrot.slane %v376, 4
    %v398 = vrot.slane %v377, 4
    %v399 = vrot.slane %v378, 4
    %v400 = vsel %vm396, %v397, %v399
    %v401 = vrot.slane %v379, 4
    %v402 = vsel %vm396, %v398, %v401
    %v403 = vrot.slane %v380, 4
    %v404 = vsel %vm396, %v399, %v403
    %v405 = vrot.slane %v381, 4
    %v406 = vsel %vm396, %v401, %v405
    %407 = vrot.lane.b32.xlu0 %v397, 127
    %v408 = vpop.permute.xlu0 %407
    %409 = vrot.lane.b32.xlu0 %v398, 127
    %v410 = vpop.permute.xlu0 %409
    %411 = vrot.lane.b32.xlu0 %v400, 127
    %v412 = vpop.permute.xlu0 %411
    %413 = vrot.lane.b32.xlu0 %v402, 127
    %v414 = vpop.permute.xlu0 %413
    %415 = vrot.lane.b32.xlu0 %v404, 127
    %v416 = vpop.permute.xlu0 %415
    %417 = vrot.lane.b32.xlu0 %v406, 127
    %v418 = vpop.permute.xlu0 %417
    %vm419 = vcmask 1039360
    %v420 = vsel %vm419, %v408, %v410
    %v421 = vsel %vm419, %v412, %v414
    %v422 = vsel %vm419, %v416, %v418
    %429 = vst [vmem:[#allocation2 + $0x40] sm:$0xf0] %v420
    %vm430 = vcmask 670724
    %431 = vst.msk [vmem:[#allocation2 + $0x48] sm:$0xf0] %vm430, %v410
    %432 = vst [vmem:[#allocation2 + $0x60] sm:$0xff] %v421
    %433 = vst.msk [vmem:[#allocation2 + $0x68] sm:$0xff] %vm383, %v414
    %434 = vst [vmem:[#allocation2 + $0x80] sm:$0xff] %v422
    %435 = vst.msk [vmem:[#allocation2 + $0x88] sm:$0xff] %vm383, %v418
    %436 = vrot.lane.b32.xlu0 %v376, 126
    %v437 = vpop.permute.xlu0 %436
    %438 = vrot.lane.b32.xlu0 %v377, 126
    %v439 = vpop.permute.xlu0 %438
    %440 = vrot.lane.b32.xlu0 %v378, 126
    %v441 = vpop.permute.xlu0 %440
    %442 = vrot.lane.b32.xlu0 %v379, 126
    %v443 = vpop.permute.xlu0 %442
    %444 = vrot.lane.b32.xlu0 %v380, 126
    %v445 = vpop.permute.xlu0 %444
    %446 = vrot.lane.b32.xlu0 %v381, 126
    %v447 = vpop.permute.xlu0 %446
    %vm448 = vcmask 1031168
    %v449 = vsel %vm448, %v437, %v439
    %v450 = vsel %vm448, %v441, %v443
    %v451 = vsel %vm448, %v445, %v447
    %458 = vst [vmem:[#allocation2 + $0xa0] sm:$0xff] %v449
    %459 = vst.msk [vmem:[#allocation2 + $0xa8] sm:$0xff] %vm383, %v439
    %460 = vst [vmem:[#allocation2 + $0xc0] sm:$0xff] %v450
    %461 = vst.msk [vmem:[#allocation2 + $0xc8] sm:$0xff] %vm383, %v443
    %462 = vst [vmem:[#allocation2 + $0xe0] sm:$0xf] %v451
    %463 = vst.msk [vmem:[#allocation2 + $0xe8] sm:$0xf] %vm388, %v447
    %464 = vrot.lane.b32.xlu0 %v397, 125
    %v465 = vpop.permute.xlu0 %464
    %466 = vrot.lane.b32.xlu0 %v398, 125
    %v467 = vpop.permute.xlu0 %466
    %468 = vrot.lane.b32.xlu0 %v400, 125
    %v469 = vpop.permute.xlu0 %468
    %470 = vrot.lane.b32.xlu0 %v402, 125
    %v471 = vpop.permute.xlu0 %470
    %472 = vrot.lane.b32.xlu0 %v404, 125
    %v473 = vpop.permute.xlu0 %472
    %474 = vrot.lane.b32.xlu0 %v406, 125
    %v475 = vpop.permute.xlu0 %474
    %vm476 = vcmask 1022976
    %v477 = vsel %vm476, %v465, %v467
    %v478 = vsel %vm476, %v469, %v471
    %v479 = vsel %vm476, %v473, %v475
    %486 = vst [vmem:[#allocation2 + $0xe0] sm:$0xf0] %v477
    %487 = vst.msk [vmem:[#allocation2 + $0xe8] sm:$0xf0] %vm430, %v467
    %488 = vst [vmem:[#allocation2 + $0x100] sm:$0xff] %v478
    %489 = vst.msk [vmem:[#allocation2 + $0x108] sm:$0xff] %vm383, %v471
    %490 = vst [vmem:[#allocation2 + $0x120] sm:$0xff] %v479
    %491 = vst.msk [vmem:[#allocation2 + $0x128] sm:$0xff] %vm383, %v475
    %492 = vrot.lane.b32.xlu0 %v376, 124
    %v493 = vpop.permute.xlu0 %492
    %494 = vrot.lane.b32.xlu0 %v377, 124
    %v495 = vpop.permute.xlu0 %494
    %496 = vrot.lane.b32.xlu0 %v378, 124
    %v497 = vpop.permute.xlu0 %496
    %498 = vrot.lane.b32.xlu0 %v379, 124
    %v499 = vpop.permute.xlu0 %498
    %500 = vrot.lane.b32.xlu0 %v380, 124
    %v501 = vpop.permute.xlu0 %500
    %502 = vrot.lane.b32.xlu0 %v381, 124
    %v503 = vpop.permute.xlu0 %502
    %vm504 = vcmask 1014784
    %v505 = vsel %vm504, %v493, %v495
    %v506 = vsel %vm504, %v497, %v499
    %v507 = vsel %vm504, %v501, %v503
    %514 = vst [vmem:[#allocation2 + $0x140] sm:$0xff] %v505
    %515 = vst.msk [vmem:[#allocation2 + $0x148] sm:$0xff] %vm383, %v495
    %516 = vst [vmem:[#allocation2 + $0x160] sm:$0xff] %v506
    %517 = vst.msk [vmem:[#allocation2 + $0x168] sm:$0xff] %vm383, %v499
    %518 = vst [vmem:[#allocation2 + $0x180] sm:$0xf] %v507
    %519 = vst.msk [vmem:[#allocation2 + $0x188] sm:$0xf] %vm388, %v503
    %520 = vrot.lane.b32.xlu0 %v397, 123
    %v521 = vpop.permute.xlu0 %520
    %522 = vrot.lane.b32.xlu0 %v398, 123
    %v523 = vpop.permute.xlu0 %522
    %524 = vrot.lane.b32.xlu0 %v400, 123
    %v525 = vpop.permute.xlu0 %524
    %526 = vrot.lane.b32.xlu0 %v402, 123
    %v527 = vpop.permute.xlu0 %526
    %528 = vrot.lane.b32.xlu0 %v404, 123
    %v529 = vpop.permute.xlu0 %528
    %530 = vrot.lane.b32.xlu0 %v406, 123
    %v531 = vpop.permute.xlu0 %530
    %vm532 = vcmask 1006592
    %v533 = vsel %vm532, %v521, %v523
    %v534 = vsel %vm532, %v525, %v527
    %v535 = vsel %vm532, %v529, %v531
    %542 = vst [vmem:[#allocation2 + $0x180] sm:$0xf0] %v533
    %543 = vst.msk [vmem:[#allocation2 + $0x188] sm:$0xf0] %vm430, %v523
    %544 = vst [vmem:[#allocation2 + $0x1a0] sm:$0xff] %v534
    %545 = vst.msk [vmem:[#allocation2 + $0x1a8] sm:$0xff] %vm383, %v527
    %546 = vst [vmem:[#allocation2 + $0x1c0] sm:$0xff] %v535
    %547 = vst.msk [vmem:[#allocation2 + $0x1c8] sm:$0xff] %vm383, %v531
    %548 = vrot.lane.b32.xlu0 %v376, 122
    %v549 = vpop.permute.xlu0 %548
    %550 = vrot.lane.b32.xlu0 %v377, 122
    %v551 = vpop.permute.xlu0 %550
    %552 = vrot.lane.b32.xlu0 %v378, 122
    %v553 = vpop.permute.xlu0 %552
    %554 = vrot.lane.b32.xlu0 %v379, 122
    %v555 = vpop.permute.xlu0 %554
    %556 = vrot.lane.b32.xlu0 %v380, 122
    %v557 = vpop.permute.xlu0 %556
    %558 = vrot.lane.b32.xlu0 %v381, 122
    %v559 = vpop.permute.xlu0 %558
    %vm560 = vcmask 998400
    %v561 = vsel %vm560, %v549, %v551
    %v562 = vsel %vm560, %v553, %v555
    %v563 = vsel %vm560, %v557, %v559
    %570 = vst [vmem:[#allocation2 + $0x1e0] sm:$0xff] %v561
    %571 = vst.msk [vmem:[#allocation2 + $0x1e8] sm:$0xff] %vm383, %v551
    %572 = vst [vmem:[#allocation2 + $0x200] sm:$0xff] %v562
    %573 = vst.msk [vmem:[#allocation2 + $0x208] sm:$0xff] %vm383, %v555
    %574 = vst [vmem:[#allocation2 + $0x220] sm:$0xf] %v563
    %575 = vst.msk [vmem:[#allocation2 + $0x228] sm:$0xf] %vm388, %v559
    %576 = vrot.lane.b32.xlu0 %v397, 121
    %v577 = vpop.permute.xlu0 %576
    %578 = vrot.lane.b32.xlu0 %v398, 121
    %v579 = vpop.permute.xlu0 %578
    %580 = vrot.lane.b32.xlu0 %v400, 121
    %v581 = vpop.permute.xlu0 %580
    %582 = vrot.lane.b32.xlu0 %v402, 121
    %v583 = vpop.permute.xlu0 %582
    %584 = vrot.lane.b32.xlu0 %v404, 121
    %v585 = vpop.permute.xlu0 %584
    %586 = vrot.lane.b32.xlu0 %v406, 121
    %v587 = vpop.permute.xlu0 %586
    %vm588 = vcmask 990208
    %v589 = vsel %vm588, %v577, %v579
    %v590 = vsel %vm588, %v581, %v583
    %v591 = vsel %vm588, %v585, %v587
    %598 = vst [vmem:[#allocation2 + $0x220] sm:$0xf0] %v589
    %599 = vst.msk [vmem:[#allocation2 + $0x228] sm:$0xf0] %vm430, %v579
    %600 = vst [vmem:[#allocation2 + $0x240] sm:$0xff] %v590
    %601 = vst.msk [vmem:[#allocation2 + $0x248] sm:$0xff] %vm383, %v583
    %602 = vst [vmem:[#allocation2 + $0x260] sm:$0xff] %v591
    %603 = vst.msk [vmem:[#allocation2 + $0x268] sm:$0xff] %vm383, %v587
    %604 = vrot.lane.b32.xlu0 %v376, 120
    %v605 = vpop.permute.xlu0 %604
    %606 = vrot.lane.b32.xlu0 %v377, 120
    %v607 = vpop.permute.xlu0 %606
    %608 = vrot.lane.b32.xlu0 %v378, 120
    %v609 = vpop.permute.xlu0 %608
    %610 = vrot.lane.b32.xlu0 %v379, 120
    %v611 = vpop.permute.xlu0 %610
    %612 = vrot.lane.b32.xlu0 %v380, 120
    %v613 = vpop.permute.xlu0 %612
    %614 = vrot.lane.b32.xlu0 %v381, 120
    %v615 = vpop.permute.xlu0 %614
    %vm616 = vcmask 982016
    %v617 = vsel %vm616, %v605, %v607
    %v618 = vsel %vm616, %v609, %v611
    %v619 = vsel %vm616, %v613, %v615
    %626 = vst [vmem:[#allocation2 + $0x280] sm:$0xff] %v617
    %627 = vst.msk [vmem:[#allocation2 + $0x288] sm:$0xff] %vm383, %v607
    %628 = vst [vmem:[#allocation2 + $0x2a0] sm:$0xff] %v618
    %629 = vst.msk [vmem:[#allocation2 + $0x2a8] sm:$0xff] %vm383, %v611
    %630 = vst [vmem:[#allocation2 + $0x2c0] sm:$0xf] %v619
    %631 = vst.msk [vmem:[#allocation2 + $0x2c8] sm:$0xf] %vm388, %v615
    %632 = vrot.lane.b32.xlu0 %v397, 119
    %v633 = vpop.permute.xlu0 %632
    %634 = vrot.lane.b32.xlu0 %v398, 119
    %v635 = vpop.permute.xlu0 %634
    %636 = vrot.lane.b32.xlu0 %v400, 119
    %v637 = vpop.permute.xlu0 %636
    %638 = vrot.lane.b32.xlu0 %v402, 119
    %v639 = vpop.permute.xlu0 %638
    %640 = vrot.lane.b32.xlu0 %v404, 119
    %v641 = vpop.permute.xlu0 %640
    %642 = vrot.lane.b32.xlu0 %v406, 119
    %v643 = vpop.permute.xlu0 %642
    %vm644 = vcmask 973824
    %v645 = vsel %vm644, %v633, %v635
    %v646 = vsel %vm644, %v637, %v639
    %v647 = vsel %vm644, %v641, %v643
    %654 = vst [vmem:[#allocation2 + $0x2c0] sm:$0xf0] %v645
    %655 = vst.msk [vmem:[#allocation2 + $0x2c8] sm:$0xf0] %vm430, %v635
    %656 = vst [vmem:[#allocation2 + $0x2e0] sm:$0xff] %v646
    %657 = vst.msk [vmem:[#allocation2 + $0x2e8] sm:$0xff] %vm383, %v639
    %658 = vst [vmem:[#allocation2 + $0x300] sm:$0xff] %v647
    %659 = vst.msk [vmem:[#allocation2 + $0x308] sm:$0xff] %vm383, %v643
    %660 = vrot.lane.b32.xlu0 %v376, 118
    %v661 = vpop.permute.xlu0 %660
    %662 = vrot.lane.b32.xlu0 %v377, 118
    %v663 = vpop.permute.xlu0 %662
    %664 = vrot.lane.b32.xlu0 %v378, 118
    %v665 = vpop.permute.xlu0 %664
    %666 = vrot.lane.b32.xlu0 %v379, 118
    %v667 = vpop.permute.xlu0 %666
    %668 = vrot.lane.b32.xlu0 %v380, 118
    %v669 = vpop.permute.xlu0 %668
    %670 = vrot.lane.b32.xlu0 %v381, 118
    %v671 = vpop.permute.xlu0 %670
    %vm672 = vcmask 965632
    %v673 = vsel %vm672, %v661, %v663
    %v674 = vsel %vm672, %v665, %v667
    %v675 = vsel %vm672, %v669, %v671
    %682 = vst [vmem:[#allocation2 + $0x320] sm:$0xff] %v673
    %683 = vst.msk [vmem:[#allocation2 + $0x328] sm:$0xff] %vm383, %v663
    %684 = vst [vmem:[#allocation2 + $0x340] sm:$0xff] %v674
    %685 = vst.msk [vmem:[#allocation2 + $0x348] sm:$0xff] %vm383, %v667
    %686 = vst [vmem:[#allocation2 + $0x360] sm:$0xf] %v675
    %687 = vst.msk [vmem:[#allocation2 + $0x368] sm:$0xf] %vm388, %v671
    %688 = vrot.lane.b32.xlu0 %v397, 117
    %v689 = vpop.permute.xlu0 %688
    %690 = vrot.lane.b32.xlu0 %v398, 117
    %v691 = vpop.permute.xlu0 %690
    %692 = vrot.lane.b32.xlu0 %v400, 117
    %v693 = vpop.permute.xlu0 %692
    %694 = vrot.lane.b32.xlu0 %v402, 117
    %v695 = vpop.permute.xlu0 %694
    %696 = vrot.lane.b32.xlu0 %v404, 117
    %v697 = vpop.permute.xlu0 %696
    %698 = vrot.lane.b32.xlu0 %v406, 117
    %v699 = vpop.permute.xlu0 %698
    %vm700 = vcmask 957440
    %v701 = vsel %vm700, %v689, %v691
    %v702 = vsel %vm700, %v693, %v695
    %v703 = vsel %vm700, %v697, %v699
    %710 = vst [vmem:[#allocation2 + $0x360] sm:$0xf0] %v701
    %711 = vst.msk [vmem:[#allocation2 + $0x368] sm:$0xf0] %vm430, %v691
    %712 = vst [vmem:[#allocation2 + $0x380] sm:$0xff] %v702
    %713 = vst.msk [vmem:[#allocation2 + $0x388] sm:$0xff] %vm383, %v695
    %714 = vst [vmem:[#allocation2 + $0x3a0] sm:$0xff] %v703
    %715 = vst.msk [vmem:[#allocation2 + $0x3a8] sm:$0xff] %vm383, %v699
    %716 = vrot.lane.b32.xlu0 %v376, 116
    %v717 = vpop.permute.xlu0 %716
    %718 = vrot.lane.b32.xlu0 %v377, 116
    %v719 = vpop.permute.xlu0 %718
    %720 = vrot.lane.b32.xlu0 %v378, 116
    %v721 = vpop.permute.xlu0 %720
    %722 = vrot.lane.b32.xlu0 %v379, 116
    %v723 = vpop.permute.xlu0 %722
    %724 = vrot.lane.b32.xlu0 %v380, 116
    %v725 = vpop.permute.xlu0 %724
    %726 = vrot.lane.b32.xlu0 %v381, 116
    %v727 = vpop.permute.xlu0 %726
    %vm728 = vcmask 949248
    %v729 = vsel %vm728, %v717, %v719
    %v730 = vsel %vm728, %v721, %v723
    %v731 = vsel %vm728, %v725, %v727
    %738 = vst [vmem:[#allocation2 + $0x3c0] sm:$0xff] %v729
    %739 = vst.msk [vmem:[#allocation2 + $0x3c8] sm:$0xff] %vm383, %v719
    %740 = vst [vmem:[#allocation2 + $0x3e0] sm:$0xff] %v730
    %741 = vst.msk [vmem:[#allocation2 + $0x3e8] sm:$0xff] %vm383, %v723
    %742 = vst [vmem:[#allocation2 + $0x400] sm:$0xf] %v731
    %743 = vst.msk [vmem:[#allocation2 + $0x408] sm:$0xf] %vm388, %v727
    %744 = vrot.lane.b32.xlu0 %v397, 115
    %v745 = vpop.permute.xlu0 %744
    %746 = vrot.lane.b32.xlu0 %v398, 115
    %v747 = vpop.permute.xlu0 %746
    %748 = vrot.lane.b32.xlu0 %v400, 115
    %v749 = vpop.permute.xlu0 %748
    %750 = vrot.lane.b32.xlu0 %v402, 115
    %v751 = vpop.permute.xlu0 %750
    %752 = vrot.lane.b32.xlu0 %v404, 115
    %v753 = vpop.permute.xlu0 %752
    %754 = vrot.lane.b32.xlu0 %v406, 115
    %v755 = vpop.permute.xlu0 %754
    %vm756 = vcmask 941056
    %v757 = vsel %vm756, %v745, %v747
    %v758 = vsel %vm756, %v749, %v751
    %v759 = vsel %vm756, %v753, %v755
    %766 = vst [vmem:[#allocation2 + $0x400] sm:$0xf0] %v757
    %767 = vst.msk [vmem:[#allocation2 + $0x408] sm:$0xf0] %vm430, %v747
    %768 = vst [vmem:[#allocation2 + $0x420] sm:$0xff] %v758
    %769 = vst.msk [vmem:[#allocation2 + $0x428] sm:$0xff] %vm383, %v751
    %770 = vst [vmem:[#allocation2 + $0x440] sm:$0xff] %v759
    %771 = vst.msk [vmem:[#allocation2 + $0x448] sm:$0xff] %vm383, %v755
    %772 = vrot.lane.b32.xlu0 %v376, 114
    %v773 = vpop.permute.xlu0 %772
    %774 = vrot.lane.b32.xlu0 %v377, 114
    %v775 = vpop.permute.xlu0 %774
    %776 = vrot.lane.b32.xlu0 %v378, 114
    %v777 = vpop.permute.xlu0 %776
    %778 = vrot.lane.b32.xlu0 %v379, 114
    %v779 = vpop.permute.xlu0 %778
    %780 = vrot.lane.b32.xlu0 %v380, 114
    %v781 = vpop.permute.xlu0 %780
    %782 = vrot.lane.b32.xlu0 %v381, 114
    %v783 = vpop.permute.xlu0 %782
    %vm784 = vcmask 932864
    %v785 = vsel %vm784, %v773, %v775
    %v786 = vsel %vm784, %v777, %v779
    %v787 = vsel %vm784, %v781, %v783
    %794 = vst [vmem:[#allocation2 + $0x460] sm:$0xff] %v785
    %795 = vst.msk [vmem:[#allocation2 + $0x468] sm:$0xff] %vm383, %v775
    %796 = vst [vmem:[#allocation2 + $0x480] sm:$0xff] %v786
    %797 = vst.msk [vmem:[#allocation2 + $0x488] sm:$0xff] %vm383, %v779
    %798 = vst [vmem:[#allocation2 + $0x4a0] sm:$0xf] %v787
    %799 = vst.msk [vmem:[#allocation2 + $0x4a8] sm:$0xf] %vm388, %v783
    %800 = vrot.lane.b32.xlu0 %v397, 113
    %v801 = vpop.permute.xlu0 %800
    %802 = vrot.lane.b32.xlu0 %v398, 113
    %v803 = vpop.permute.xlu0 %802
    %804 = vrot.lane.b32.xlu0 %v400, 113
    %v805 = vpop.permute.xlu0 %804
    %806 = vrot.lane.b32.xlu0 %v402, 113
    %v807 = vpop.permute.xlu0 %806
    %808 = vrot.lane.b32.xlu0 %v404, 113
    %v809 = vpop.permute.xlu0 %808
    %810 = vrot.lane.b32.xlu0 %v406, 113
    %v811 = vpop.permute.xlu0 %810
    %vm812 = vcmask 924672
    %v813 = vsel %vm812, %v801, %v803
    %v814 = vsel %vm812, %v805, %v807
    %v815 = vsel %vm812, %v809, %v811
    %822 = vst [vmem:[#allocation2 + $0x4a0] sm:$0xf0] %v813
    %823 = vst.msk [vmem:[#allocation2 + $0x4a8] sm:$0xf0] %vm430, %v803
    %824 = vst [vmem:[#allocation2 + $0x4c0] sm:$0xff] %v814
    %825 = vst.msk [vmem:[#allocation2 + $0x4c8] sm:$0xff] %vm383, %v807
    %826 = vst [vmem:[#allocation2 + $0x4e0] sm:$0xff] %v815
    %827 = vst.msk [vmem:[#allocation2 + $0x4e8] sm:$0xff] %vm383, %v811
    %828 = vrot.lane.b32.xlu0 %v376, 112
    %v829 = vpop.permute.xlu0 %828
    %830 = vrot.lane.b32.xlu0 %v377, 112
    %v831 = vpop.permute.xlu0 %830
    %832 = vrot.lane.b32.xlu0 %v378, 112
    %v833 = vpop.permute.xlu0 %832
    %834 = vrot.lane.b32.xlu0 %v379, 112
    %v835 = vpop.permute.xlu0 %834
    %836 = vrot.lane.b32.xlu0 %v380, 112
    %v837 = vpop.permute.xlu0 %836
    %838 = vrot.lane.b32.xlu0 %v381, 112
    %v839 = vpop.permute.xlu0 %838
    %vm840 = vcmask 916480
    %v841 = vsel %vm840, %v829, %v831
    %v842 = vsel %vm840, %v833, %v835
    %v843 = vsel %vm840, %v837, %v839
    %850 = vst [vmem:[#allocation2 + $0x500] sm:$0xff] %v841
    %851 = vst.msk [vmem:[#allocation2 + $0x508] sm:$0xff] %vm383, %v831
    %852 = vst [vmem:[#allocation2 + $0x520] sm:$0xff] %v842
    %853 = vst.msk [vmem:[#allocation2 + $0x528] sm:$0xff] %vm383, %v835
    %854 = vst [vmem:[#allocation2 + $0x540] sm:$0xf] %v843
    %855 = vst.msk [vmem:[#allocation2 + $0x548] sm:$0xf] %vm388, %v839
    %856 = vrot.lane.b32.xlu0 %v397, 111
    %v857 = vpop.permute.xlu0 %856
    %858 = vrot.lane.b32.xlu0 %v398, 111
    %v859 = vpop.permute.xlu0 %858
    %860 = vrot.lane.b32.xlu0 %v400, 111
    %v861 = vpop.permute.xlu0 %860
    %862 = vrot.lane.b32.xlu0 %v402, 111
    %v863 = vpop.permute.xlu0 %862
    %864 = vrot.lane.b32.xlu0 %v404, 111
    %v865 = vpop.permute.xlu0 %864
    %866 = vrot.lane.b32.xlu0 %v406, 111
    %v867 = vpop.permute.xlu0 %866
    %vm868 = vcmask 908288
    %v869 = vsel %vm868, %v857, %v859
    %v870 = vsel %vm868, %v861, %v863
    %v871 = vsel %vm868, %v865, %v867
    %878 = vst [vmem:[#allocation2 + $0x540] sm:$0xf0] %v869
    %879 = vst.msk [vmem:[#allocation2 + $0x548] sm:$0xf0] %vm430, %v859
    %880 = vst [vmem:[#allocation2 + $0x560] sm:$0xff] %v870
    %881 = vst.msk [vmem:[#allocation2 + $0x568] sm:$0xff] %vm383, %v863
    %882 = vst [vmem:[#allocation2 + $0x580] sm:$0xff] %v871
    %883 = vst.msk [vmem:[#allocation2 + $0x588] sm:$0xff] %vm383, %v867
    %884 = vrot.lane.b32.xlu0 %v376, 110
    %v885 = vpop.permute.xlu0 %884
    %886 = vrot.lane.b32.xlu0 %v377, 110
    %v887 = vpop.permute.xlu0 %886
    %888 = vrot.lane.b32.xlu0 %v378, 110
    %v889 = vpop.permute.xlu0 %888
    %890 = vrot.lane.b32.xlu0 %v379, 110
    %v891 = vpop.permute.xlu0 %890
    %892 = vrot.lane.b32.xlu0 %v380, 110
    %v893 = vpop.permute.xlu0 %892
    %894 = vrot.lane.b32.xlu0 %v381, 110
    %v895 = vpop.permute.xlu0 %894
    %vm896 = vcmask 900096
    %v897 = vsel %vm896, %v885, %v887
    %v898 = vsel %vm896, %v889, %v891
    %v899 = vsel %vm896, %v893, %v895
    %906 = vst [vmem:[#allocation2 + $0x5a0] sm:$0xff] %v897
    %907 = vst.msk [vmem:[#allocation2 + $0x5a8] sm:$0xff] %vm383, %v887
    %908 = vst [vmem:[#allocation2 + $0x5c0] sm:$0xff] %v898
    %909 = vst.msk [vmem:[#allocation2 + $0x5c8] sm:$0xff] %vm383, %v891
    %910 = vst [vmem:[#allocation2 + $0x5e0] sm:$0xf] %v899
    %911 = vst.msk [vmem:[#allocation2 + $0x5e8] sm:$0xf] %vm388, %v895
    %912 = vrot.lane.b32.xlu0 %v397, 109
    %v913 = vpop.permute.xlu0 %912
    %914 = vrot.lane.b32.xlu0 %v398, 109
    %v915 = vpop.permute.xlu0 %914
    %916 = vrot.lane.b32.xlu0 %v400, 109
    %v917 = vpop.permute.xlu0 %916
    %918 = vrot.lane.b32.xlu0 %v402, 109
    %v919 = vpop.permute.xlu0 %918
    %920 = vrot.lane.b32.xlu0 %v404, 109
    %v921 = vpop.permute.xlu0 %920
    %922 = vrot.lane.b32.xlu0 %v406, 109
    %v923 = vpop.permute.xlu0 %922
    %vm924 = vcmask 891904
    %v925 = vsel %vm924, %v913, %v915
    %v926 = vsel %vm924, %v917, %v919
    %v927 = vsel %vm924, %v921, %v923
    %934 = vst [vmem:[#allocation2 + $0x5e0] sm:$0xf0] %v925
    %935 = vst.msk [vmem:[#allocation2 + $0x5e8] sm:$0xf0] %vm430, %v915
    %936 = vst [vmem:[#allocation2 + $0x600] sm:$0xff] %v926
    %937 = vst.msk [vmem:[#allocation2 + $0x608] sm:$0xff] %vm383, %v919
    %938 = vst [vmem:[#allocation2 + $0x620] sm:$0xff] %v927
    %939 = vst.msk [vmem:[#allocation2 + $0x628] sm:$0xff] %vm383, %v923
    %940 = vrot.lane.b32.xlu0 %v376, 108
    %v941 = vpop.permute.xlu0 %940
    %942 = vrot.lane.b32.xlu0 %v377, 108
    %v943 = vpop.permute.xlu0 %942
    %944 = vrot.lane.b32.xlu0 %v378, 108
    %v945 = vpop.permute.xlu0 %944
    %946 = vrot.lane.b32.xlu0 %v379, 108
    %v947 = vpop.permute.xlu0 %946
    %948 = vrot.lane.b32.xlu0 %v380, 108
    %v949 = vpop.permute.xlu0 %948
    %950 = vrot.lane.b32.xlu0 %v381, 108
    %v951 = vpop.permute.xlu0 %950
    %vm952 = vcmask 883712
    %v953 = vsel %vm952, %v941, %v943
    %v954 = vsel %vm952, %v945, %v947
    %v955 = vsel %vm952, %v949, %v951
    %962 = vst [vmem:[#allocation2 + $0x640] sm:$0xff] %v953
    %963 = vst.msk [vmem:[#allocation2 + $0x648] sm:$0xff] %vm383, %v943
    %964 = vst [vmem:[#allocation2 + $0x660] sm:$0xff] %v954
    %965 = vst.msk [vmem:[#allocation2 + $0x668] sm:$0xff] %vm383, %v947
    %966 = vst [vmem:[#allocation2 + $0x680] sm:$0xf] %v955
    %967 = vst.msk [vmem:[#allocation2 + $0x688] sm:$0xf] %vm388, %v951
    %968 = vrot.lane.b32.xlu0 %v397, 107
    %v969 = vpop.permute.xlu0 %968
    %970 = vrot.lane.b32.xlu0 %v398, 107
    %v971 = vpop.permute.xlu0 %970
    %972 = vrot.lane.b32.xlu0 %v400, 107
    %v973 = vpop.permute.xlu0 %972
    %974 = vrot.lane.b32.xlu0 %v402, 107
    %v975 = vpop.permute.xlu0 %974
    %976 = vrot.lane.b32.xlu0 %v404, 107
    %v977 = vpop.permute.xlu0 %976
    %978 = vrot.lane.b32.xlu0 %v406, 107
    %v979 = vpop.permute.xlu0 %978
    %vm980 = vcmask 875520
    %v981 = vsel %vm980, %v969, %v971
    %v982 = vsel %vm980, %v973, %v975
    %v983 = vsel %vm980, %v977, %v979
    %990 = vst [vmem:[#allocation2 + $0x680] sm:$0xf0] %v981
    %991 = vst.msk [vmem:[#allocation2 + $0x688] sm:$0xf0] %vm430, %v971
    %992 = vst [vmem:[#allocation2 + $0x6a0] sm:$0xff] %v982
    %993 = vst.msk [vmem:[#allocation2 + $0x6a8] sm:$0xff] %vm383, %v975
    %994 = vst [vmem:[#allocation2 + $0x6c0] sm:$0xff] %v983
    %995 = vst.msk [vmem:[#allocation2 + $0x6c8] sm:$0xff] %vm383, %v979
    %996 = vrot.lane.b32.xlu0 %v376, 106
    %v997 = vpop.permute.xlu0 %996
    %998 = vrot.lane.b32.xlu0 %v377, 106
    %v999 = vpop.permute.xlu0 %998
    %1000 = vrot.lane.b32.xlu0 %v378, 106
    %v1001 = vpop.permute.xlu0 %1000
    %1002 = vrot.lane.b32.xlu0 %v379, 106
    %v1003 = vpop.permute.xlu0 %1002
    %1004 = vrot.lane.b32.xlu0 %v380, 106
    %v1005 = vpop.permute.xlu0 %1004
    %1006 = vrot.lane.b32.xlu0 %v381, 106
    %v1007 = vpop.permute.xlu0 %1006
    %vm1008 = vcmask 867328
    %v1009 = vsel %vm1008, %v997, %v999
    %v1010 = vsel %vm1008, %v1001, %v1003
    %v1011 = vsel %vm1008, %v1005, %v1007
    %1018 = vst [vmem:[#allocation2 + $0x6e0] sm:$0xff] %v1009
    %1019 = vst.msk [vmem:[#allocation2 + $0x6e8] sm:$0xff] %vm383, %v999
    %1020 = vst [vmem:[#allocation2 + $0x700] sm:$0xff] %v1010
    %1021 = vst.msk [vmem:[#allocation2 + $0x708] sm:$0xff] %vm383, %v1003
    %1022 = vst [vmem:[#allocation2 + $0x720] sm:$0xf] %v1011
    %1023 = vst.msk [vmem:[#allocation2 + $0x728] sm:$0xf] %vm388, %v1007
    %1024 = vrot.lane.b32.xlu0 %v397, 105
    %v1025 = vpop.permute.xlu0 %1024
    %1026 = vrot.lane.b32.xlu0 %v398, 105
    %v1027 = vpop.permute.xlu0 %1026
    %1028 = vrot.lane.b32.xlu0 %v400, 105
    %v1029 = vpop.permute.xlu0 %1028
    %1030 = vrot.lane.b32.xlu0 %v402, 105
    %v1031 = vpop.permute.xlu0 %1030
    %1032 = vrot.lane.b32.xlu0 %v404, 105
    %v1033 = vpop.permute.xlu0 %1032
    %1034 = vrot.lane.b32.xlu0 %v406, 105
    %v1035 = vpop.permute.xlu0 %1034
    %vm1036 = vcmask 859136
    %v1037 = vsel %vm1036, %v1025, %v1027
    %v1038 = vsel %vm1036, %v1029, %v1031
    %v1039 = vsel %vm1036, %v1033, %v1035
    %1046 = vst [vmem:[#allocation2 + $0x720] sm:$0xf0] %v1037
    %1047 = vst.msk [vmem:[#allocation2 + $0x728] sm:$0xf0] %vm430, %v1027
    %1048 = vst [vmem:[#allocation2 + $0x740] sm:$0xff] %v1038
    %1049 = vst.msk [vmem:[#allocation2 + $0x748] sm:$0xff] %vm383, %v1031
    %1050 = vst [vmem:[#allocation2 + $0x760] sm:$0xff] %v1039
    %1051 = vst.msk [vmem:[#allocation2 + $0x768] sm:$0xff] %vm383, %v1035
    %1052 = vrot.lane.b32.xlu0 %v376, 104
    %v1053 = vpop.permute.xlu0 %1052
    %1054 = vrot.lane.b32.xlu0 %v377, 104
    %v1055 = vpop.permute.xlu0 %1054
    %1056 = vrot.lane.b32.xlu0 %v378, 104
    %v1057 = vpop.permute.xlu0 %1056
    %1058 = vrot.lane.b32.xlu0 %v379, 104
    %v1059 = vpop.permute.xlu0 %1058
    %1060 = vrot.lane.b32.xlu0 %v380, 104
    %v1061 = vpop.permute.xlu0 %1060
    %1062 = vrot.lane.b32.xlu0 %v381, 104
    %v1063 = vpop.permute.xlu0 %1062
    %vm1064 = vcmask 850944
    %v1065 = vsel %vm1064, %v1053, %v1055
    %v1066 = vsel %vm1064, %v1057, %v1059
    %v1067 = vsel %vm1064, %v1061, %v1063
    %1074 = vst [vmem:[#allocation2 + $0x780] sm:$0xff] %v1065
    %1075 = vst.msk [vmem:[#allocation2 + $0x788] sm:$0xff] %vm383, %v1055
    %1076 = vst [vmem:[#allocation2 + $0x7a0] sm:$0xff] %v1066
    %1077 = vst.msk [vmem:[#allocation2 + $0x7a8] sm:$0xff] %vm383, %v1059
    %1078 = vst [vmem:[#allocation2 + $0x7c0] sm:$0xf] %v1067
    %1079 = vst.msk [vmem:[#allocation2 + $0x7c8] sm:$0xf] %vm388, %v1063
    %1080 = vrot.lane.b32.xlu0 %v397, 103
    %v1081 = vpop.permute.xlu0 %1080
    %1082 = vrot.lane.b32.xlu0 %v398, 103
    %v1083 = vpop.permute.xlu0 %1082
    %1084 = vrot.lane.b32.xlu0 %v400, 103
    %v1085 = vpop.permute.xlu0 %1084
    %1086 = vrot.lane.b32.xlu0 %v402, 103
    %v1087 = vpop.permute.xlu0 %1086
    %1088 = vrot.lane.b32.xlu0 %v404, 103
    %v1089 = vpop.permute.xlu0 %1088
    %1090 = vrot.lane.b32.xlu0 %v406, 103
    %v1091 = vpop.permute.xlu0 %1090
    %vm1092 = vcmask 842752
    %v1093 = vsel %vm1092, %v1081, %v1083
    %v1094 = vsel %vm1092, %v1085, %v1087
    %v1095 = vsel %vm1092, %v1089, %v1091
    %1102 = vst [vmem:[#allocation2 + $0x7c0] sm:$0xf0] %v1093
    %1103 = vst.msk [vmem:[#allocation2 + $0x7c8] sm:$0xf0] %vm430, %v1083
    %1104 = vst [vmem:[#allocation2 + $0x7e0] sm:$0xff] %v1094
    %1105 = vst.msk [vmem:[#allocation2 + $0x7e8] sm:$0xff] %vm383, %v1087
    %1106 = vst [vmem:[#allocation2 + $0x800] sm:$0xff] %v1095
    %1107 = vst.msk [vmem:[#allocation2 + $0x808] sm:$0xff] %vm383, %v1091
    %1108 = vrot.lane.b32.xlu0 %v376, 102
    %v1109 = vpop.permute.xlu0 %1108
    %1110 = vrot.lane.b32.xlu0 %v377, 102
    %v1111 = vpop.permute.xlu0 %1110
    %1112 = vrot.lane.b32.xlu0 %v378, 102
    %v1113 = vpop.permute.xlu0 %1112
    %1114 = vrot.lane.b32.xlu0 %v379, 102
    %v1115 = vpop.permute.xlu0 %1114
    %1116 = vrot.lane.b32.xlu0 %v380, 102
    %v1117 = vpop.permute.xlu0 %1116
    %1118 = vrot.lane.b32.xlu0 %v381, 102
    %v1119 = vpop.permute.xlu0 %1118
    %vm1120 = vcmask 834560
    %v1121 = vsel %vm1120, %v1109, %v1111
    %v1122 = vsel %vm1120, %v1113, %v1115
    %v1123 = vsel %vm1120, %v1117, %v1119
    %1130 = vst [vmem:[#allocation2 + $0x820] sm:$0xff] %v1121
    %1131 = vst.msk [vmem:[#allocation2 + $0x828] sm:$0xff] %vm383, %v1111
    %1132 = vst [vmem:[#allocation2 + $0x840] sm:$0xff] %v1122
    %1133 = vst.msk [vmem:[#allocation2 + $0x848] sm:$0xff] %vm383, %v1115
    %1134 = vst [vmem:[#allocation2 + $0x860] sm:$0xf] %v1123
    %1135 = vst.msk [vmem:[#allocation2 + $0x868] sm:$0xf] %vm388, %v1119
    %1136 = vrot.lane.b32.xlu0 %v397, 101
    %v1137 = vpop.permute.xlu0 %1136
    %1138 = vrot.lane.b32.xlu0 %v398, 101
    %v1139 = vpop.permute.xlu0 %1138
    %1140 = vrot.lane.b32.xlu0 %v400, 101
    %v1141 = vpop.permute.xlu0 %1140
    %1142 = vrot.lane.b32.xlu0 %v402, 101
    %v1143 = vpop.permute.xlu0 %1142
    %1144 = vrot.lane.b32.xlu0 %v404, 101
    %v1145 = vpop.permute.xlu0 %1144
    %1146 = vrot.lane.b32.xlu0 %v406, 101
    %v1147 = vpop.permute.xlu0 %1146
    %vm1148 = vcmask 826368
    %v1149 = vsel %vm1148, %v1137, %v1139
    %v1150 = vsel %vm1148, %v1141, %v1143
    %v1151 = vsel %vm1148, %v1145, %v1147
    %1158 = vst [vmem:[#allocation2 + $0x860] sm:$0xf0] %v1149
    %1159 = vst.msk [vmem:[#allocation2 + $0x868] sm:$0xf0] %vm430, %v1139
    %1160 = vst [vmem:[#allocation2 + $0x880] sm:$0xff] %v1150
    %1161 = vst.msk [vmem:[#allocation2 + $0x888] sm:$0xff] %vm383, %v1143
    %1162 = vst [vmem:[#allocation2 + $0x8a0] sm:$0xff] %v1151
    %1163 = vst.msk [vmem:[#allocation2 + $0x8a8] sm:$0xff] %vm383, %v1147
    %1164 = vrot.lane.b32.xlu0 %v376, 100
    %v1165 = vpop.permute.xlu0 %1164
    %1166 = vrot.lane.b32.xlu0 %v377, 100
    %v1167 = vpop.permute.xlu0 %1166
    %1168 = vrot.lane.b32.xlu0 %v378, 100
    %v1169 = vpop.permute.xlu0 %1168
    %1170 = vrot.lane.b32.xlu0 %v379, 100
    %v1171 = vpop.permute.xlu0 %1170
    %1172 = vrot.lane.b32.xlu0 %v380, 100
    %v1173 = vpop.permute.xlu0 %1172
    %1174 = vrot.lane.b32.xlu0 %v381, 100
    %v1175 = vpop.permute.xlu0 %1174
    %vm1176 = vcmask 818176
    %v1177 = vsel %vm1176, %v1165, %v1167
    %v1178 = vsel %vm1176, %v1169, %v1171
    %v1179 = vsel %vm1176, %v1173, %v1175
    %1186 = vst [vmem:[#allocation2 + $0x8c0] sm:$0xff] %v1177
    %1187 = vst.msk [vmem:[#allocation2 + $0x8c8] sm:$0xff] %vm383, %v1167
    %1188 = vst [vmem:[#allocation2 + $0x8e0] sm:$0xff] %v1178
    %1189 = vst.msk [vmem:[#allocation2 + $0x8e8] sm:$0xff] %vm383, %v1171
    %1190 = vst [vmem:[#allocation2 + $0x900] sm:$0xf] %v1179
    %1191 = vst.msk [vmem:[#allocation2 + $0x908] sm:$0xf] %vm388, %v1175
    %1192 = vrot.lane.b32.xlu0 %v397, 99
    %v1193 = vpop.permute.xlu0 %1192
    %1194 = vrot.lane.b32.xlu0 %v398, 99
    %v1195 = vpop.permute.xlu0 %1194
    %1196 = vrot.lane.b32.xlu0 %v400, 99
    %v1197 = vpop.permute.xlu0 %1196
    %1198 = vrot.lane.b32.xlu0 %v402, 99
    %v1199 = vpop.permute.xlu0 %1198
    %1200 = vrot.lane.b32.xlu0 %v404, 99
    %v1201 = vpop.permute.xlu0 %1200
    %1202 = vrot.lane.b32.xlu0 %v406, 99
    %v1203 = vpop.permute.xlu0 %1202
    %vm1204 = vcmask 809984
    %v1205 = vsel %vm1204, %v1193, %v1195
    %v1206 = vsel %vm1204, %v1197, %v1199
    %v1207 = vsel %vm1204, %v1201, %v1203
    %1214 = vst [vmem:[#allocation2 + $0x900] sm:$0xf0] %v1205
    %1215 = vst.msk [vmem:[#allocation2 + $0x908] sm:$0xf0] %vm430, %v1195
    %1216 = vst [vmem:[#allocation2 + $0x920] sm:$0xff] %v1206
    %1217 = vst.msk [vmem:[#allocation2 + $0x928] sm:$0xff] %vm383, %v1199
    %1218 = vst [vmem:[#allocation2 + $0x940] sm:$0xff] %v1207
    %1219 = vst.msk [vmem:[#allocation2 + $0x948] sm:$0xff] %vm383, %v1203
    %1220 = vrot.lane.b32.xlu0 %v376, 98
    %v1221 = vpop.permute.xlu0 %1220
    %1222 = vrot.lane.b32.xlu0 %v377, 98
    %v1223 = vpop.permute.xlu0 %1222
    %1224 = vrot.lane.b32.xlu0 %v378, 98
    %v1225 = vpop.permute.xlu0 %1224
    %1226 = vrot.lane.b32.xlu0 %v379, 98
    %v1227 = vpop.permute.xlu0 %1226
    %1228 = vrot.lane.b32.xlu0 %v380, 98
    %v1229 = vpop.permute.xlu0 %1228
    %1230 = vrot.lane.b32.xlu0 %v381, 98
    %v1231 = vpop.permute.xlu0 %1230
    %vm1232 = vcmask 801792
    %v1233 = vsel %vm1232, %v1221, %v1223
    %v1234 = vsel %vm1232, %v1225, %v1227
    %v1235 = vsel %vm1232, %v1229, %v1231
    %1242 = vst [vmem:[#allocation2 + $0x960] sm:$0xff] %v1233
    %1243 = vst.msk [vmem:[#allocation2 + $0x968] sm:$0xff] %vm383, %v1223
    %1244 = vst [vmem:[#allocation2 + $0x980] sm:$0xff] %v1234
    %1245 = vst.msk [vmem:[#allocation2 + $0x988] sm:$0xff] %vm383, %v1227
    %1246 = vst [vmem:[#allocation2 + $0x9a0] sm:$0xf] %v1235
    %1247 = vst.msk [vmem:[#allocation2 + $0x9a8] sm:$0xf] %vm388, %v1231
    %1248 = vrot.lane.b32.xlu0 %v397, 97
    %v1249 = vpop.permute.xlu0 %1248
    %1250 = vrot.lane.b32.xlu0 %v398, 97
    %v1251 = vpop.permute.xlu0 %1250
    %1252 = vrot.lane.b32.xlu0 %v400, 97
    %v1253 = vpop.permute.xlu0 %1252
    %1254 = vrot.lane.b32.xlu0 %v402, 97
    %v1255 = vpop.permute.xlu0 %1254
    %1256 = vrot.lane.b32.xlu0 %v404, 97
    %v1257 = vpop.permute.xlu0 %1256
    %1258 = vrot.lane.b32.xlu0 %v406, 97
    %v1259 = vpop.permute.xlu0 %1258
    %vm1260 = vcmask 793600
    %v1261 = vsel %vm1260, %v1249, %v1251
    %v1262 = vsel %vm1260, %v1253, %v1255
    %v1263 = vsel %vm1260, %v1257, %v1259
    %1270 = vst [vmem:[#allocation2 + $0x9a0] sm:$0xf0] %v1261
    %1271 = vst.msk [vmem:[#allocation2 + $0x9a8] sm:$0xf0] %vm430, %v1251
    %1272 = vst [vmem:[#allocation2 + $0x9c0] sm:$0xff] %v1262
    %1273 = vst.msk [vmem:[#allocation2 + $0x9c8] sm:$0xff] %vm383, %v1255
    %1274 = vst [vmem:[#allocation2 + $0x9e0] sm:$0xff] %v1263
    %1275 = vst.msk [vmem:[#allocation2 + $0x9e8] sm:$0xff] %vm383, %v1259
    %1276 = vrot.lane.b32.xlu0 %v376, 96
    %v1277 = vpop.permute.xlu0 %1276
    %1278 = vrot.lane.b32.xlu0 %v377, 96
    %v1279 = vpop.permute.xlu0 %1278
    %1280 = vrot.lane.b32.xlu0 %v378, 96
    %v1281 = vpop.permute.xlu0 %1280
    %1282 = vrot.lane.b32.xlu0 %v379, 96
    %v1283 = vpop.permute.xlu0 %1282
    %1284 = vrot.lane.b32.xlu0 %v380, 96
    %v1285 = vpop.permute.xlu0 %1284
    %1286 = vrot.lane.b32.xlu0 %v381, 96
    %v1287 = vpop.permute.xlu0 %1286
    %vm1288 = vcmask 785408
    %v1289 = vsel %vm1288, %v1277, %v1279
    %v1290 = vsel %vm1288, %v1281, %v1283
    %v1291 = vsel %vm1288, %v1285, %v1287
    %1298 = vst [vmem:[#allocation2 + $0xa00] sm:$0xff] %v1289
    %1299 = vst.msk [vmem:[#allocation2 + $0xa08] sm:$0xff] %vm383, %v1279
    %1300 = vst [vmem:[#allocation2 + $0xa20] sm:$0xff] %v1290
    %1301 = vst.msk [vmem:[#allocation2 + $0xa28] sm:$0xff] %vm383, %v1283
    %1302 = vst [vmem:[#allocation2 + $0xa40] sm:$0xf] %v1291
    %1303 = vst.msk [vmem:[#allocation2 + $0xa48] sm:$0xf] %vm388, %v1287
    %1304 = vrot.lane.b32.xlu0 %v397, 95
    %v1305 = vpop.permute.xlu0 %1304
    %1306 = vrot.lane.b32.xlu0 %v398, 95
    %v1307 = vpop.permute.xlu0 %1306
    %1308 = vrot.lane.b32.xlu0 %v400, 95
    %v1309 = vpop.permute.xlu0 %1308
    %1310 = vrot.lane.b32.xlu0 %v402, 95
    %v1311 = vpop.permute.xlu0 %1310
    %1312 = vrot.lane.b32.xlu0 %v404, 95
    %v1313 = vpop.permute.xlu0 %1312
    %1314 = vrot.lane.b32.xlu0 %v406, 95
    %v1315 = vpop.permute.xlu0 %1314
    %vm1316 = vcmask 777216
    %v1317 = vsel %vm1316, %v1305, %v1307
    %v1318 = vsel %vm1316, %v1309, %v1311
    %v1319 = vsel %vm1316, %v1313, %v1315
    %1326 = vst [vmem:[#allocation2 + $0xa40] sm:$0xf0] %v1317
    %1327 = vst.msk [vmem:[#allocation2 + $0xa48] sm:$0xf0] %vm430, %v1307
    %1328 = vst [vmem:[#allocation2 + $0xa60] sm:$0xff] %v1318
    %1329 = vst.msk [vmem:[#allocation2 + $0xa68] sm:$0xff] %vm383, %v1311
    %1330 = vst [vmem:[#allocation2 + $0xa80] sm:$0xff] %v1319
    %1331 = vst.msk [vmem:[#allocation2 + $0xa88] sm:$0xff] %vm383, %v1315
    %s1332 = scalar_lea.vmem %s0, 48
    %v1333 = vld [vmem:[%s1332] sm:$0xff]
    %v1334 = vld [vmem:[%s1332 + $0x8] sm:$0xff]
    %v1335 = vld [vmem:[%s1332 + $0x10] sm:$0xff]
    %v1336 = vld [vmem:[%s1332 + $0x18] sm:$0xff]
    %v1337 = vld [vmem:[%s1332 + $0x20] sm:$0xf]
    %v1338 = vld [vmem:[%s1332 + $0x28] sm:$0xf]
    %s1339 = scalar_lea.vmem %s1, 248
    %v1340 = vld [vmem:[%s1339] sm:$0xff]
    %v1341 = vld [vmem:[%s1339 + $0x8] sm:$0xff]
    %v1342 = vld [vmem:[%s1339 + $0x10] sm:$0xff]
    %v1343 = vld [vmem:[%s1339 + $0x18] sm:$0xff]
    %v1344 = vld [vmem:[%s1339 + $0x20] sm:$0xff]
    %v1345 = vld [vmem:[%s1339 + $0x28] sm:$0xff]
    %v1346 = vld [vmem:[%s1339 + $0x30] sm:$0xff]
    %v1347 = vld [vmem:[%s1339 + $0x38] sm:$0xff]
    %v1348 = vld [vmem:[%s1339 + $0x40] sm:$0xff]
    %v1349 = vld [vmem:[%s1339 + $0x48] sm:$0xff]
    %v1350 = vld [vmem:[%s1339 + $0x50] sm:$0xff]
    %v1351 = vld [vmem:[%s1339 + $0x58] sm:$0xff]
    %v1352 = vld [vmem:[%s1339 + $0x60] sm:$0xff]
    %v1353 = vld [vmem:[%s1339 + $0x68] sm:$0xff]
    %v1354 = vld [vmem:[%s1339 + $0x70] sm:$0xff]
    %v1355 = vld [vmem:[%s1339 + $0x78] sm:$0xff]
    %v1356 = vld [vmem:[%s1339 + $0x80] sm:$0xff]
    %v1357 = vld [vmem:[%s1339 + $0x88] sm:$0xff]
    %v1358 = vld [vmem:[%s1339 + $0x90] sm:$0xff]
    %v1359 = vld [vmem:[%s1339 + $0x98] sm:$0xff]
    %v1360 = vld [vmem:[%s1339 + $0xa0] sm:$0xff]
    %v1361 = vld [vmem:[%s1339 + $0xa8] sm:$0xff]
    %v1362 = vld [vmem:[%s1339 + $0xb0] sm:$0xff]
    %v1363 = vld [vmem:[%s1339 + $0xb8] sm:$0xff]
    %v1364 = vld [vmem:[%s1339 + $0xc0] sm:$0xff]
    %v1365 = vld [vmem:[%s1339 + $0xc8] sm:$0xff]
    %v1366 = vld [vmem:[%s1339 + $0xd0] sm:$0xff]
    %v1367 = vld [vmem:[%s1339 + $0xd8] sm:$0xff]
    %v1368 = vld [vmem:[%s1339 + $0xe0] sm:$0xff]
    %v1369 = vld [vmem:[%s1339 + $0xe8] sm:$0xff]
    %v1370 = vld [vmem:[%s1339 + $0xf0] sm:$0x7]
    %v1371 = vsel %vm58, %v1340, 0.0
    %v1372 = vsel %vm58, %v1341, 0.0
    %v1373 = vadd.f32 %v1371, %v1372
    %v1374 = vsel %vm58, %v1342, 0.0
    %v1375 = vadd.f32 %v1373, %v1374
    %v1376 = vsel %vm58, %v1343, 0.0
    %v1377 = vadd.f32 %v1375, %v1376
    %v1378 = vsel %vm58, %v1344, 0.0
    %v1379 = vadd.f32 %v1377, %v1378
    %v1380 = vsel %vm58, %v1345, 0.0
    %v1381 = vadd.f32 %v1379, %v1380
    %v1382 = vsel %vm58, %v1346, 0.0
    %v1383 = vadd.f32 %v1381, %v1382
    %v1384 = vsel %vm58, %v1347, 0.0
    %v1385 = vadd.f32 %v1383, %v1384
    %v1386 = vsel %vm58, %v1348, 0.0
    %v1387 = vadd.f32 %v1385, %v1386
    %v1388 = vsel %vm58, %v1349, 0.0
    %v1389 = vadd.f32 %v1387, %v1388
    %v1390 = vsel %vm58, %v1350, 0.0
    %v1391 = vadd.f32 %v1389, %v1390
    %v1392 = vsel %vm58, %v1351, 0.0
    %v1393 = vadd.f32 %v1391, %v1392
    %v1394 = vsel %vm58, %v1352, 0.0
    %v1395 = vadd.f32 %v1393, %v1394
    %v1396 = vsel %vm58, %v1353, 0.0
    %v1397 = vadd.f32 %v1395, %v1396
    %v1398 = vsel %vm58, %v1354, 0.0
    %v1399 = vadd.f32 %v1397, %v1398
    %v1400 = vsel %vm58, %v1355, 0.0
    %v1401 = vadd.f32 %v1399, %v1400
    %v1402 = vsel %vm58, %v1356, 0.0
    %v1403 = vadd.f32 %v1401, %v1402
    %v1404 = vsel %vm58, %v1357, 0.0
    %v1405 = vadd.f32 %v1403, %v1404
    %v1406 = vsel %vm58, %v1358, 0.0
    %v1407 = vadd.f32 %v1405, %v1406
    %v1408 = vsel %vm58, %v1359, 0.0
    %v1409 = vadd.f32 %v1407, %v1408
    %v1410 = vsel %vm58, %v1360, 0.0
    %v1411 = vadd.f32 %v1409, %v1410
    %v1412 = vsel %vm58, %v1361, 0.0
    %v1413 = vadd.f32 %v1411, %v1412
    %v1414 = vsel %vm58, %v1362, 0.0
    %v1415 = vadd.f32 %v1413, %v1414
    %v1416 = vsel %vm58, %v1363, 0.0
    %v1417 = vadd.f32 %v1415, %v1416
    %v1418 = vsel %vm58, %v1364, 0.0
    %v1419 = vadd.f32 %v1417, %v1418
    %v1420 = vsel %vm58, %v1365, 0.0
    %v1421 = vadd.f32 %v1419, %v1420
    %v1422 = vsel %vm58, %v1366, 0.0
    %v1423 = vadd.f32 %v1421, %v1422
    %v1424 = vsel %vm58, %v1367, 0.0
    %v1425 = vadd.f32 %v1423, %v1424
    %v1426 = vsel %vm58, %v1368, 0.0
    %v1427 = vadd.f32 %v1425, %v1426
    %v1428 = vsel %vm58, %v1369, 0.0
    %v1429 = vadd.f32 %v1427, %v1428
    %v1430 = vsel %vm118, %v1370, 0.0
    %v1431 = vadd.f32 %v1429, %v1430
    %v1432 = vrot.slane %v1431, 4
    %v1433 = vadd.f32 %v1431, %v1432
    %v1434 = vrot.slane %v1433, 2
    %v1435 = vadd.f32 %v1433, %v1434
    %v1436 = vrot.slane %v1435, 1
    %v1437 = vadd.f32 %v1435, %v1436
    %v1438 = vmul.f32 %v1437, %v133
    %v1439 = vsub.f32 %v1340, %v1438
    %v1440 = vsub.f32 %v1341, %v1438
    %v1441 = vsub.f32 %v1342, %v1438
    %v1442 = vsub.f32 %v1343, %v1438
    %v1443 = vsub.f32 %v1344, %v1438
    %v1444 = vsub.f32 %v1345, %v1438
    %v1445 = vsub.f32 %v1346, %v1438
    %v1446 = vsub.f32 %v1347, %v1438
    %v1447 = vsub.f32 %v1348, %v1438
    %v1448 = vsub.f32 %v1349, %v1438
    %v1449 = vsub.f32 %v1350, %v1438
    %v1450 = vsub.f32 %v1351, %v1438
    %v1451 = vsub.f32 %v1352, %v1438
    %v1452 = vsub.f32 %v1353, %v1438
    %v1453 = vsub.f32 %v1354, %v1438
    %v1454 = vsub.f32 %v1355, %v1438
    %v1455 = vsub.f32 %v1356, %v1438
    %v1456 = vsub.f32 %v1357, %v1438
    %v1457 = vsub.f32 %v1358, %v1438
    %v1458 = vsub.f32 %v1359, %v1438
    %v1459 = vsub.f32 %v1360, %v1438
    %v1460 = vsub.f32 %v1361, %v1438
    %v1461 = vsub.f32 %v1362, %v1438
    %v1462 = vsub.f32 %v1363, %v1438
    %v1463 = vsub.f32 %v1364, %v1438
    %v1464 = vsub.f32 %v1365, %v1438
    %v1465 = vsub.f32 %v1366, %v1438
    %v1466 = vsub.f32 %v1367, %v1438
    %v1467 = vsub.f32 %v1368, %v1438
    %v1468 = vsub.f32 %v1369, %v1438
    %v1469 = vsub.f32 %v1370, %v1438
    %v1470 = vmul.f32 %v1439, %v1439
    %v1471 = vmul.f32 %v1440, %v1440
    %v1472 = vmul.f32 %v1441, %v1441
    %v1473 = vmul.f32 %v1442, %v1442
    %v1474 = vmul.f32 %v1443, %v1443
    %v1475 = vmul.f32 %v1444, %v1444
    %v1476 = vmul.f32 %v1445, %v1445
    %v1477 = vmul.f32 %v1446, %v1446
    %v1478 = vmul.f32 %v1447, %v1447
    %v1479 = vmul.f32 %v1448, %v1448
    %v1480 = vmul.f32 %v1449, %v1449
    %v1481 = vmul.f32 %v1450, %v1450
    %v1482 = vmul.f32 %v1451, %v1451
    %v1483 = vmul.f32 %v1452, %v1452
    %v1484 = vmul.f32 %v1453, %v1453
    %v1485 = vmul.f32 %v1454, %v1454
    %v1486 = vmul.f32 %v1455, %v1455
    %v1487 = vmul.f32 %v1456, %v1456
    %v1488 = vmul.f32 %v1457, %v1457
    %v1489 = vmul.f32 %v1458, %v1458
    %v1490 = vmul.f32 %v1459, %v1459
    %v1491 = vmul.f32 %v1460, %v1460
    %v1492 = vmul.f32 %v1461, %v1461
    %v1493 = vmul.f32 %v1462, %v1462
    %v1494 = vmul.f32 %v1463, %v1463
    %v1495 = vmul.f32 %v1464, %v1464
    %v1496 = vmul.f32 %v1465, %v1465
    %v1497 = vmul.f32 %v1466, %v1466
    %v1498 = vmul.f32 %v1467, %v1467
    %v1499 = vmul.f32 %v1468, %v1468
    %v1500 = vmul.f32 %v1469, %v1469
    %v1501 = vsel %vm58, %v1470, 0.0
    %v1502 = vsel %vm58, %v1471, 0.0
    %v1503 = vadd.f32 %v1501, %v1502
    %v1504 = vsel %vm58, %v1472, 0.0
    %v1505 = vadd.f32 %v1503, %v1504
    %v1506 = vsel %vm58, %v1473, 0.0
    %v1507 = vadd.f32 %v1505, %v1506
    %v1508 = vsel %vm58, %v1474, 0.0
    %v1509 = vadd.f32 %v1507, %v1508
    %v1510 = vsel %vm58, %v1475, 0.0
    %v1511 = vadd.f32 %v1509, %v1510
    %v1512 = vsel %vm58, %v1476, 0.0
    %v1513 = vadd.f32 %v1511, %v1512
    %v1514 = vsel %vm58, %v1477, 0.0
    %v1515 = vadd.f32 %v1513, %v1514
    %v1516 = vsel %vm58, %v1478, 0.0
    %v1517 = vadd.f32 %v1515, %v1516
    %v1518 = vsel %vm58, %v1479, 0.0
    %v1519 = vadd.f32 %v1517, %v1518
    %v1520 = vsel %vm58, %v1480, 0.0
    %v1521 = vadd.f32 %v1519, %v1520
    %v1522 = vsel %vm58, %v1481, 0.0
    %v1523 = vadd.f32 %v1521, %v1522
    %v1524 = vsel %vm58, %v1482, 0.0
    %v1525 = vadd.f32 %v1523, %v1524
    %v1526 = vsel %vm58, %v1483, 0.0
    %v1527 = vadd.f32 %v1525, %v1526
    %v1528 = vsel %vm58, %v1484, 0.0
    %v1529 = vadd.f32 %v1527, %v1528
    %v1530 = vsel %vm58, %v1485, 0.0
    %v1531 = vadd.f32 %v1529, %v1530
    %v1532 = vsel %vm58, %v1486, 0.0
    %v1533 = vadd.f32 %v1531, %v1532
    %v1534 = vsel %vm58, %v1487, 0.0
    %v1535 = vadd.f32 %v1533, %v1534
    %v1536 = vsel %vm58, %v1488, 0.0
    %v1537 = vadd.f32 %v1535, %v1536
    %v1538 = vsel %vm58, %v1489, 0.0
    %v1539 = vadd.f32 %v1537, %v1538
    %v1540 = vsel %vm58, %v1490, 0.0
    %v1541 = vadd.f32 %v1539, %v1540
    %v1542 = vsel %vm58, %v1491, 0.0
    %v1543 = vadd.f32 %v1541, %v1542
    %v1544 = vsel %vm58, %v1492, 0.0
    %v1545 = vadd.f32 %v1543, %v1544
    %v1546 = vsel %vm58, %v1493, 0.0
    %v1547 = vadd.f32 %v1545, %v1546
    %v1548 = vsel %vm58, %v1494, 0.0
    %v1549 = vadd.f32 %v1547, %v1548
    %v1550 = vsel %vm58, %v1495, 0.0
    %v1551 = vadd.f32 %v1549, %v1550
    %v1552 = vsel %vm58, %v1496, 0.0
    %v1553 = vadd.f32 %v1551, %v1552
    %v1554 = vsel %vm58, %v1497, 0.0
    %v1555 = vadd.f32 %v1553, %v1554
    %v1556 = vsel %vm58, %v1498, 0.0
    %v1557 = vadd.f32 %v1555, %v1556
    %v1558 = vsel %vm58, %v1499, 0.0
    %v1559 = vadd.f32 %v1557, %v1558
    %v1560 = vsel %vm118, %v1500, 0.0
    %v1561 = vadd.f32 %v1559, %v1560
    %v1562 = vrot.slane %v1561, 4
    %v1563 = vadd.f32 %v1561, %v1562
    %v1564 = vrot.slane %v1563, 2
    %v1565 = vadd.f32 %v1563, %v1564
    %v1566 = vrot.slane %v1565, 1
    %v1567 = vadd.f32 %v1565, %v1566
    %v1568 = vmul.f32 %v1567, 0.004132231
    %v1569 = vrsqrt.pop %v1568
    %v1570 = vmul.f32 %v1569, %v1568
    %v1571 = vmul.f32 %v1570, %v1569
    %v1572 = vmul.f32 0.5, %v1571
    %v1573 = vsub.f32 1.5, %v1572
    %v1574 = vmul.f32 %v1569, %v1573
    %v1575 = vmul.f32 %v1568, %v1574
    %vm1576 = vcmp.eq.f32.partialorder %v1568, inf
    %v1577 = vsel %vm1576, %v1568, %v1575
    %vm1578 = vcmp.eq.f32.partialorder %v1568, 0.0
    %v1579 = vand.u32 %v1568, 2147483648
    %v1580 = vsel %vm1578, %v1579, %v1577
    %1582 = vrot.lane.b32.xlu0 %v1438, 10
    %v1583 = vpop.permute.xlu0 %1582
    %v1585 = vmul.f32 %v18, %v1583
    %v1586 = vmul.f32 %v19, %v1583
    %v1587 = vmul.f32 %v20, %v1583
    %1591 = vrot.lane.b32.xlu0 %v1585, 118
    %v1592 = vpop.permute.xlu0 %1591
    %1593 = vrot.lane.b32.xlu0 %v1586, 118
    %v1594 = vpop.permute.xlu0 %1593
    %1595 = vrot.lane.b32.xlu0 %v1587, 118
    %v1596 = vpop.permute.xlu0 %1595
    %v1600 = vsel %vm58, %v1592, 0.0
    %1601 = vadd.xlane.f32.xlu0 %v1600
    %v1602 = vpop.xlane.xlu0 %1601
    %v1603 = vsel %vm58, %v1594, 0.0
    %1604 = vadd.xlane.f32.xlu0 %v1603
    %v1605 = vpop.xlane.xlu0 %1604
    %v1606 = vsel %vm302, %v1596, 0.0
    %1607 = vadd.xlane.f32.xlu0 %v1606
    %v1608 = vpop.xlane.xlu0 %1607
    %v1609 = vadd.f32 %v1602, %v18
    %v1610 = vadd.f32 %v1605, %v19
    %v1611 = vadd.f32 %v1608, %v20
    %1613 = vrot.lane.b32.xlu0 %v1580, 30
    %v1614 = vpop.permute.xlu0 %1613
    %v1616 = vmul.f32 %v18, %v1614
    %v1617 = vmul.f32 %v19, %v1614
    %v1618 = vmul.f32 %v20, %v1614
    %1622 = vrot.lane.b32.xlu0 %v1616, 98
    %v1623 = vpop.permute.xlu0 %1622
    %1624 = vrot.lane.b32.xlu0 %v1617, 98
    %v1625 = vpop.permute.xlu0 %1624
    %1626 = vrot.lane.b32.xlu0 %v1618, 98
    %v1627 = vpop.permute.xlu0 %1626
    %v1631 = vsel %vm58, %v1623, 0.0
    %1632 = vadd.xlane.f32.xlu0 %v1631
    %v1633 = vpop.xlane.xlu0 %1632
    %v1634 = vsel %vm58, %v1625, 0.0
    %1635 = vadd.xlane.f32.xlu0 %v1634
    %v1636 = vpop.xlane.xlu0 %1635
    %v1637 = vsel %vm302, %v1627, 0.0
    %1638 = vadd.xlane.f32.xlu0 %v1637
    %v1639 = vpop.xlane.xlu0 %1638
    %v1640 = vadd.f32 %v1633, %v18
    %v1641 = vadd.f32 %v1636, %v19
    %v1642 = vadd.f32 %v1639, %v20
    %1644 = vset.pattern.permute.xlu0 50
    %1645 = vperm.xlu0 %1644, %v1609
    %v1646 = vpop.permute.xlu0 %1645
    %1649 = vset.pattern.permute.xlu0 50
    %1650 = vperm.xlu0 %1649, %v1610
    %v1651 = vpop.permute.xlu0 %1650
    %1654 = vset.pattern.permute.xlu0 50
    %1655 = vperm.xlu0 %1654, %v1611
    %v1656 = vpop.permute.xlu0 %1655
    %v1658 = vsub.f32 %v1333, %v1646
    %v1659 = vsub.f32 %v1334, %v1646
    %v1660 = vsub.f32 %v1335, %v1651
    %v1661 = vsub.f32 %v1336, %v1651
    %v1662 = vsub.f32 %v1337, %v1656
    %v1663 = vsub.f32 %v1338, %v1656
    %1665 = vset.pattern.permute.xlu0 51
    %1666 = vperm.xlu0 %1665, %v1640
    %v1667 = vpop.permute.xlu0 %1666
    %1670 = vset.pattern.permute.xlu0 51
    %1671 = vperm.xlu0 %1670, %v1641
    %v1672 = vpop.permute.xlu0 %1671
    %1675 = vset.pattern.permute.xlu0 51
    %1676 = vperm.xlu0 %1675, %v1642
    %v1677 = vpop.permute.xlu0 %1676
    %v1679 = vmul.f32 %v1658, %v1667
    %v1680 = vmul.f32 %v1659, %v1667
    %v1681 = vmul.f32 %v1660, %v1672
    %v1682 = vmul.f32 %v1661, %v1672
    %v1683 = vmul.f32 %v1662, %v1677
    %v1684 = vmul.f32 %v1663, %v1677
    %1685 = vst [vmem:[#allocation2 + $0x10] sm:$0xff] %v1679
    %1686 = vst.msk [vmem:[#allocation2 + $0x18] sm:$0xff] %vm383, %v1680
    %1687 = vst [vmem:[#allocation2 + $0x30] sm:$0xff] %v1681
    %1688 = vst.msk [vmem:[#allocation2 + $0x38] sm:$0xff] %vm383, %v1682
    %1689 = vst [vmem:[#allocation2 + $0x50] sm:$0xf] %v1683
    %1690 = vst.msk [vmem:[#allocation2 + $0x58] sm:$0xf] %vm388, %v1684
    %v1697 = vrot.slane %v1679, 4
    %v1698 = vrot.slane %v1680, 4
    %v1699 = vrot.slane %v1681, 4
    %v1700 = vsel %vm396, %v1697, %v1699
    %v1701 = vrot.slane %v1682, 4
    %v1702 = vsel %vm396, %v1698, %v1701
    %v1703 = vrot.slane %v1683, 4
    %v1704 = vsel %vm396, %v1699, %v1703
    %v1705 = vrot.slane %v1684, 4
    %v1706 = vsel %vm396, %v1701, %v1705
    %1707 = vrot.lane.b32.xlu0 %v1697, 127
    %v1708 = vpop.permute.xlu0 %1707
    %1709 = vrot.lane.b32.xlu0 %v1698, 127
    %v1710 = vpop.permute.xlu0 %1709
    %1711 = vrot.lane.b32.xlu0 %v1700, 127
    %v1712 = vpop.permute.xlu0 %1711
    %1713 = vrot.lane.b32.xlu0 %v1702, 127
    %v1714 = vpop.permute.xlu0 %1713
    %1715 = vrot.lane.b32.xlu0 %v1704, 127
    %v1716 = vpop.permute.xlu0 %1715
    %1717 = vrot.lane.b32.xlu0 %v1706, 127
    %v1718 = vpop.permute.xlu0 %1717
    %v1719 = vsel %vm419, %v1708, %v1710
    %v1720 = vsel %vm419, %v1712, %v1714
    %v1721 = vsel %vm419, %v1716, %v1718
    %1728 = vst [vmem:[#allocation2 + $0x50] sm:$0xf0] %v1719
    %1729 = vst.msk [vmem:[#allocation2 + $0x58] sm:$0xf0] %vm430, %v1710
    %1730 = vst [vmem:[#allocation2 + $0x70] sm:$0xff] %v1720
    %1731 = vst.msk [vmem:[#allocation2 + $0x78] sm:$0xff] %vm383, %v1714
    %1732 = vst [vmem:[#allocation2 + $0x90] sm:$0xff] %v1721
    %1733 = vst.msk [vmem:[#allocation2 + $0x98] sm:$0xff] %vm383, %v1718
    %1734 = vrot.lane.b32.xlu0 %v1679, 126
    %v1735 = vpop.permute.xlu0 %1734
    %1736 = vrot.lane.b32.xlu0 %v1680, 126
    %v1737 = vpop.permute.xlu0 %1736
    %1738 = vrot.lane.b32.xlu0 %v1681, 126
    %v1739 = vpop.permute.xlu0 %1738
    %1740 = vrot.lane.b32.xlu0 %v1682, 126
    %v1741 = vpop.permute.xlu0 %1740
    %1742 = vrot.lane.b32.xlu0 %v1683, 126
    %v1743 = vpop.permute.xlu0 %1742
    %1744 = vrot.lane.b32.xlu0 %v1684, 126
    %v1745 = vpop.permute.xlu0 %1744
    %v1746 = vsel %vm448, %v1735, %v1737
    %v1747 = vsel %vm448, %v1739, %v1741
    %v1748 = vsel %vm448, %v1743, %v1745
    %1755 = vst [vmem:[#allocation2 + $0xb0] sm:$0xff] %v1746
    %1756 = vst.msk [vmem:[#allocation2 + $0xb8] sm:$0xff] %vm383, %v1737
    %1757 = vst [vmem:[#allocation2 + $0xd0] sm:$0xff] %v1747
    %1758 = vst.msk [vmem:[#allocation2 + $0xd8] sm:$0xff] %vm383, %v1741
    %1759 = vst [vmem:[#allocation2 + $0xf0] sm:$0xf] %v1748
    %1760 = vst.msk [vmem:[#allocation2 + $0xf8] sm:$0xf] %vm388, %v1745
    %1761 = vrot.lane.b32.xlu0 %v1697, 125
    %v1762 = vpop.permute.xlu0 %1761
    %1763 = vrot.lane.b32.xlu0 %v1698, 125
    %v1764 = vpop.permute.xlu0 %1763
    %1765 = vrot.lane.b32.xlu0 %v1700, 125
    %v1766 = vpop.permute.xlu0 %1765
    %1767 = vrot.lane.b32.xlu0 %v1702, 125
    %v1768 = vpop.permute.xlu0 %1767
    %1769 = vrot.lane.b32.xlu0 %v1704, 125
    %v1770 = vpop.permute.xlu0 %1769
    %1771 = vrot.lane.b32.xlu0 %v1706, 125
    %v1772 = vpop.permute.xlu0 %1771
    %v1773 = vsel %vm476, %v1762, %v1764
    %v1774 = vsel %vm476, %v1766, %v1768
    %v1775 = vsel %vm476, %v1770, %v1772
    %1782 = vst [vmem:[#allocation2 + $0xf0] sm:$0xf0] %v1773
    %1783 = vst.msk [vmem:[#allocation2 + $0xf8] sm:$0xf0] %vm430, %v1764
    %1784 = vst [vmem:[#allocation2 + $0x110] sm:$0xff] %v1774
    %1785 = vst.msk [vmem:[#allocation2 + $0x118] sm:$0xff] %vm383, %v1768
    %1786 = vst [vmem:[#allocation2 + $0x130] sm:$0xff] %v1775
    %1787 = vst.msk [vmem:[#allocation2 + $0x138] sm:$0xff] %vm383, %v1772
    %1788 = vrot.lane.b32.xlu0 %v1679, 124
    %v1789 = vpop.permute.xlu0 %1788
    %1790 = vrot.lane.b32.xlu0 %v1680, 124
    %v1791 = vpop.permute.xlu0 %1790
    %1792 = vrot.lane.b32.xlu0 %v1681, 124
    %v1793 = vpop.permute.xlu0 %1792
    %1794 = vrot.lane.b32.xlu0 %v1682, 124
    %v1795 = vpop.permute.xlu0 %1794
    %1796 = vrot.lane.b32.xlu0 %v1683, 124
    %v1797 = vpop.permute.xlu0 %1796
    %1798 = vrot.lane.b32.xlu0 %v1684, 124
    %v1799 = vpop.permute.xlu0 %1798
    %v1800 = vsel %vm504, %v1789, %v1791
    %v1801 = vsel %vm504, %v1793, %v1795
    %v1802 = vsel %vm504, %v1797, %v1799
    %1809 = vst [vmem:[#allocation2 + $0x150] sm:$0xff] %v1800
    %1810 = vst.msk [vmem:[#allocation2 + $0x158] sm:$0xff] %vm383, %v1791
    %1811 = vst [vmem:[#allocation2 + $0x170] sm:$0xff] %v1801
    %1812 = vst.msk [vmem:[#allocation2 + $0x178] sm:$0xff] %vm383, %v1795
    %1813 = vst [vmem:[#allocation2 + $0x190] sm:$0xf] %v1802
    %1814 = vst.msk [vmem:[#allocation2 + $0x198] sm:$0xf] %vm388, %v1799
    %1815 = vrot.lane.b32.xlu0 %v1697, 123
    %v1816 = vpop.permute.xlu0 %1815
    %1817 = vrot.lane.b32.xlu0 %v1698, 123
    %v1818 = vpop.permute.xlu0 %1817
    %1819 = vrot.lane.b32.xlu0 %v1700, 123
    %v1820 = vpop.permute.xlu0 %1819
    %1821 = vrot.lane.b32.xlu0 %v1702, 123
    %v1822 = vpop.permute.xlu0 %1821
    %1823 = vrot.lane.b32.xlu0 %v1704, 123
    %v1824 = vpop.permute.xlu0 %1823
    %1825 = vrot.lane.b32.xlu0 %v1706, 123
    %v1826 = vpop.permute.xlu0 %1825
    %v1827 = vsel %vm532, %v1816, %v1818
    %v1828 = vsel %vm532, %v1820, %v1822
    %v1829 = vsel %vm532, %v1824, %v1826
    %1836 = vst [vmem:[#allocation2 + $0x190] sm:$0xf0] %v1827
    %1837 = vst.msk [vmem:[#allocation2 + $0x198] sm:$0xf0] %vm430, %v1818
    %1838 = vst [vmem:[#allocation2 + $0x1b0] sm:$0xff] %v1828
    %1839 = vst.msk [vmem:[#allocation2 + $0x1b8] sm:$0xff] %vm383, %v1822
    %1840 = vst [vmem:[#allocation2 + $0x1d0] sm:$0xff] %v1829
    %1841 = vst.msk [vmem:[#allocation2 + $0x1d8] sm:$0xff] %vm383, %v1826
    %1842 = vrot.lane.b32.xlu0 %v1679, 122
    %v1843 = vpop.permute.xlu0 %1842
    %1844 = vrot.lane.b32.xlu0 %v1680, 122
    %v1845 = vpop.permute.xlu0 %1844
    %1846 = vrot.lane.b32.xlu0 %v1681, 122
    %v1847 = vpop.permute.xlu0 %1846
    %1848 = vrot.lane.b32.xlu0 %v1682, 122
    %v1849 = vpop.permute.xlu0 %1848
    %1850 = vrot.lane.b32.xlu0 %v1683, 122
    %v1851 = vpop.permute.xlu0 %1850
    %1852 = vrot.lane.b32.xlu0 %v1684, 122
    %v1853 = vpop.permute.xlu0 %1852
    %v1854 = vsel %vm560, %v1843, %v1845
    %v1855 = vsel %vm560, %v1847, %v1849
    %v1856 = vsel %vm560, %v1851, %v1853
    %1863 = vst [vmem:[#allocation2 + $0x1f0] sm:$0xff] %v1854
    %1864 = vst.msk [vmem:[#allocation2 + $0x1f8] sm:$0xff] %vm383, %v1845
    %1865 = vst [vmem:[#allocation2 + $0x210] sm:$0xff] %v1855
    %1866 = vst.msk [vmem:[#allocation2 + $0x218] sm:$0xff] %vm383, %v1849
    %1867 = vst [vmem:[#allocation2 + $0x230] sm:$0xf] %v1856
    %1868 = vst.msk [vmem:[#allocation2 + $0x238] sm:$0xf] %vm388, %v1853
    %1869 = vrot.lane.b32.xlu0 %v1697, 121
    %v1870 = vpop.permute.xlu0 %1869
    %1871 = vrot.lane.b32.xlu0 %v1698, 121
    %v1872 = vpop.permute.xlu0 %1871
    %1873 = vrot.lane.b32.xlu0 %v1700, 121
    %v1874 = vpop.permute.xlu0 %1873
    %1875 = vrot.lane.b32.xlu0 %v1702, 121
    %v1876 = vpop.permute.xlu0 %1875
    %1877 = vrot.lane.b32.xlu0 %v1704, 121
    %v1878 = vpop.permute.xlu0 %1877
    %1879 = vrot.lane.b32.xlu0 %v1706, 121
    %v1880 = vpop.permute.xlu0 %1879
    %v1881 = vsel %vm588, %v1870, %v1872
    %v1882 = vsel %vm588, %v1874, %v1876
    %v1883 = vsel %vm588, %v1878, %v1880
    %1890 = vst [vmem:[#allocation2 + $0x230] sm:$0xf0] %v1881
    %1891 = vst.msk [vmem:[#allocation2 + $0x238] sm:$0xf0] %vm430, %v1872
    %1892 = vst [vmem:[#allocation2 + $0x250] sm:$0xff] %v1882
    %1893 = vst.msk [vmem:[#allocation2 + $0x258] sm:$0xff] %vm383, %v1876
    %1894 = vst [vmem:[#allocation2 + $0x270] sm:$0xff] %v1883
    %1895 = vst.msk [vmem:[#allocation2 + $0x278] sm:$0xff] %vm383, %v1880
    %1896 = vrot.lane.b32.xlu0 %v1679, 120
    %v1897 = vpop.permute.xlu0 %1896
    %1898 = vrot.lane.b32.xlu0 %v1680, 120
    %v1899 = vpop.permute.xlu0 %1898
    %1900 = vrot.lane.b32.xlu0 %v1681, 120
    %v1901 = vpop.permute.xlu0 %1900
    %1902 = vrot.lane.b32.xlu0 %v1682, 120
    %v1903 = vpop.permute.xlu0 %1902
    %1904 = vrot.lane.b32.xlu0 %v1683, 120
    %v1905 = vpop.permute.xlu0 %1904
    %1906 = vrot.lane.b32.xlu0 %v1684, 120
    %v1907 = vpop.permute.xlu0 %1906
    %v1908 = vsel %vm616, %v1897, %v1899
    %v1909 = vsel %vm616, %v1901, %v1903
    %v1910 = vsel %vm616, %v1905, %v1907
    %1917 = vst [vmem:[#allocation2 + $0x290] sm:$0xff] %v1908
    %1918 = vst.msk [vmem:[#allocation2 + $0x298] sm:$0xff] %vm383, %v1899
    %1919 = vst [vmem:[#allocation2 + $0x2b0] sm:$0xff] %v1909
    %1920 = vst.msk [vmem:[#allocation2 + $0x2b8] sm:$0xff] %vm383, %v1903
    %1921 = vst [vmem:[#allocation2 + $0x2d0] sm:$0xf] %v1910
    %1922 = vst.msk [vmem:[#allocation2 + $0x2d8] sm:$0xf] %vm388, %v1907
    %1923 = vrot.lane.b32.xlu0 %v1697, 119
    %v1924 = vpop.permute.xlu0 %1923
    %1925 = vrot.lane.b32.xlu0 %v1698, 119
    %v1926 = vpop.permute.xlu0 %1925
    %1927 = vrot.lane.b32.xlu0 %v1700, 119
    %v1928 = vpop.permute.xlu0 %1927
    %1929 = vrot.lane.b32.xlu0 %v1702, 119
    %v1930 = vpop.permute.xlu0 %1929
    %1931 = vrot.lane.b32.xlu0 %v1704, 119
    %v1932 = vpop.permute.xlu0 %1931
    %1933 = vrot.lane.b32.xlu0 %v1706, 119
    %v1934 = vpop.permute.xlu0 %1933
    %v1935 = vsel %vm644, %v1924, %v1926
    %v1936 = vsel %vm644, %v1928, %v1930
    %v1937 = vsel %vm644, %v1932, %v1934
    %1944 = vst [vmem:[#allocation2 + $0x2d0] sm:$0xf0] %v1935
    %1945 = vst.msk [vmem:[#allocation2 + $0x2d8] sm:$0xf0] %vm430, %v1926
    %1946 = vst [vmem:[#allocation2 + $0x2f0] sm:$0xff] %v1936
    %1947 = vst.msk [vmem:[#allocation2 + $0x2f8] sm:$0xff] %vm383, %v1930
    %1948 = vst [vmem:[#allocation2 + $0x310] sm:$0xff] %v1937
    %1949 = vst.msk [vmem:[#allocation2 + $0x318] sm:$0xff] %vm383, %v1934
    %1950 = vrot.lane.b32.xlu0 %v1679, 118
    %v1951 = vpop.permute.xlu0 %1950
    %1952 = vrot.lane.b32.xlu0 %v1680, 118
    %v1953 = vpop.permute.xlu0 %1952
    %1954 = vrot.lane.b32.xlu0 %v1681, 118
    %v1955 = vpop.permute.xlu0 %1954
    %1956 = vrot.lane.b32.xlu0 %v1682, 118
    %v1957 = vpop.permute.xlu0 %1956
    %1958 = vrot.lane.b32.xlu0 %v1683, 118
    %v1959 = vpop.permute.xlu0 %1958
    %1960 = vrot.lane.b32.xlu0 %v1684, 118
    %v1961 = vpop.permute.xlu0 %1960
    %v1962 = vsel %vm672, %v1951, %v1953
    %v1963 = vsel %vm672, %v1955, %v1957
    %v1964 = vsel %vm672, %v1959, %v1961
    %1971 = vst [vmem:[#allocation2 + $0x330] sm:$0xff] %v1962
    %1972 = vst.msk [vmem:[#allocation2 + $0x338] sm:$0xff] %vm383, %v1953
    %1973 = vst [vmem:[#allocation2 + $0x350] sm:$0xff] %v1963
    %1974 = vst.msk [vmem:[#allocation2 + $0x358] sm:$0xff] %vm383, %v1957
    %1975 = vst [vmem:[#allocation2 + $0x370] sm:$0xf] %v1964
    %1976 = vst.msk [vmem:[#allocation2 + $0x378] sm:$0xf] %vm388, %v1961
    %1977 = vrot.lane.b32.xlu0 %v1697, 117
    %v1978 = vpop.permute.xlu0 %1977
    %1979 = vrot.lane.b32.xlu0 %v1698, 117
    %v1980 = vpop.permute.xlu0 %1979
    %1981 = vrot.lane.b32.xlu0 %v1700, 117
    %v1982 = vpop.permute.xlu0 %1981
    %1983 = vrot.lane.b32.xlu0 %v1702, 117
    %v1984 = vpop.permute.xlu0 %1983
    %1985 = vrot.lane.b32.xlu0 %v1704, 117
    %v1986 = vpop.permute.xlu0 %1985
    %1987 = vrot.lane.b32.xlu0 %v1706, 117
    %v1988 = vpop.permute.xlu0 %1987
    %v1989 = vsel %vm700, %v1978, %v1980
    %v1990 = vsel %vm700, %v1982, %v1984
    %v1991 = vsel %vm700, %v1986, %v1988
    %1998 = vst [vmem:[#allocation2 + $0x370] sm:$0xf0] %v1989
    %1999 = vst.msk [vmem:[#allocation2 + $0x378] sm:$0xf0] %vm430, %v1980
    %2000 = vst [vmem:[#allocation2 + $0x390] sm:$0xff] %v1990
    %2001 = vst.msk [vmem:[#allocation2 + $0x398] sm:$0xff] %vm383, %v1984
    %2002 = vst [vmem:[#allocation2 + $0x3b0] sm:$0xff] %v1991
    %2003 = vst.msk [vmem:[#allocation2 + $0x3b8] sm:$0xff] %vm383, %v1988
    %2004 = vrot.lane.b32.xlu0 %v1679, 116
    %v2005 = vpop.permute.xlu0 %2004
    %2006 = vrot.lane.b32.xlu0 %v1680, 116
    %v2007 = vpop.permute.xlu0 %2006
    %2008 = vrot.lane.b32.xlu0 %v1681, 116
    %v2009 = vpop.permute.xlu0 %2008
    %2010 = vrot.lane.b32.xlu0 %v1682, 116
    %v2011 = vpop.permute.xlu0 %2010
    %2012 = vrot.lane.b32.xlu0 %v1683, 116
    %v2013 = vpop.permute.xlu0 %2012
    %2014 = vrot.lane.b32.xlu0 %v1684, 116
    %v2015 = vpop.permute.xlu0 %2014
    %v2016 = vsel %vm728, %v2005, %v2007
    %v2017 = vsel %vm728, %v2009, %v2011
    %v2018 = vsel %vm728, %v2013, %v2015
    %2025 = vst [vmem:[#allocation2 + $0x3d0] sm:$0xff] %v2016
    %2026 = vst.msk [vmem:[#allocation2 + $0x3d8] sm:$0xff] %vm383, %v2007
    %2027 = vst [vmem:[#allocation2 + $0x3f0] sm:$0xff] %v2017
    %2028 = vst.msk [vmem:[#allocation2 + $0x3f8] sm:$0xff] %vm383, %v2011
    %2029 = vst [vmem:[#allocation2 + $0x410] sm:$0xf] %v2018
    %2030 = vst.msk [vmem:[#allocation2 + $0x418] sm:$0xf] %vm388, %v2015
    %2031 = vrot.lane.b32.xlu0 %v1697, 115
    %v2032 = vpop.permute.xlu0 %2031
    %2033 = vrot.lane.b32.xlu0 %v1698, 115
    %v2034 = vpop.permute.xlu0 %2033
    %2035 = vrot.lane.b32.xlu0 %v1700, 115
    %v2036 = vpop.permute.xlu0 %2035
    %2037 = vrot.lane.b32.xlu0 %v1702, 115
    %v2038 = vpop.permute.xlu0 %2037
    %2039 = vrot.lane.b32.xlu0 %v1704, 115
    %v2040 = vpop.permute.xlu0 %2039
    %2041 = vrot.lane.b32.xlu0 %v1706, 115
    %v2042 = vpop.permute.xlu0 %2041
    %v2043 = vsel %vm756, %v2032, %v2034
    %v2044 = vsel %vm756, %v2036, %v2038
    %v2045 = vsel %vm756, %v2040, %v2042
    %2052 = vst [vmem:[#allocation2 + $0x410] sm:$0xf0] %v2043
    %2053 = vst.msk [vmem:[#allocation2 + $0x418] sm:$0xf0] %vm430, %v2034
    %2054 = vst [vmem:[#allocation2 + $0x430] sm:$0xff] %v2044
    %2055 = vst.msk [vmem:[#allocation2 + $0x438] sm:$0xff] %vm383, %v2038
    %2056 = vst [vmem:[#allocation2 + $0x450] sm:$0xff] %v2045
    %2057 = vst.msk [vmem:[#allocation2 + $0x458] sm:$0xff] %vm383, %v2042
    %2058 = vrot.lane.b32.xlu0 %v1679, 114
    %v2059 = vpop.permute.xlu0 %2058
    %2060 = vrot.lane.b32.xlu0 %v1680, 114
    %v2061 = vpop.permute.xlu0 %2060
    %2062 = vrot.lane.b32.xlu0 %v1681, 114
    %v2063 = vpop.permute.xlu0 %2062
    %2064 = vrot.lane.b32.xlu0 %v1682, 114
    %v2065 = vpop.permute.xlu0 %2064
    %2066 = vrot.lane.b32.xlu0 %v1683, 114
    %v2067 = vpop.permute.xlu0 %2066
    %2068 = vrot.lane.b32.xlu0 %v1684, 114
    %v2069 = vpop.permute.xlu0 %2068
    %v2070 = vsel %vm784, %v2059, %v2061
    %v2071 = vsel %vm784, %v2063, %v2065
    %v2072 = vsel %vm784, %v2067, %v2069
    %2079 = vst [vmem:[#allocation2 + $0x470] sm:$0xff] %v2070
    %2080 = vst.msk [vmem:[#allocation2 + $0x478] sm:$0xff] %vm383, %v2061
    %2081 = vst [vmem:[#allocation2 + $0x490] sm:$0xff] %v2071
    %2082 = vst.msk [vmem:[#allocation2 + $0x498] sm:$0xff] %vm383, %v2065
    %2083 = vst [vmem:[#allocation2 + $0x4b0] sm:$0xf] %v2072
    %2084 = vst.msk [vmem:[#allocation2 + $0x4b8] sm:$0xf] %vm388, %v2069
    %2085 = vrot.lane.b32.xlu0 %v1697, 113
    %v2086 = vpop.permute.xlu0 %2085
    %2087 = vrot.lane.b32.xlu0 %v1698, 113
    %v2088 = vpop.permute.xlu0 %2087
    %2089 = vrot.lane.b32.xlu0 %v1700, 113
    %v2090 = vpop.permute.xlu0 %2089
    %2091 = vrot.lane.b32.xlu0 %v1702, 113
    %v2092 = vpop.permute.xlu0 %2091
    %2093 = vrot.lane.b32.xlu0 %v1704, 113
    %v2094 = vpop.permute.xlu0 %2093
    %2095 = vrot.lane.b32.xlu0 %v1706, 113
    %v2096 = vpop.permute.xlu0 %2095
    %v2097 = vsel %vm812, %v2086, %v2088
    %v2098 = vsel %vm812, %v2090, %v2092
    %v2099 = vsel %vm812, %v2094, %v2096
    %2106 = vst [vmem:[#allocation2 + $0x4b0] sm:$0xf0] %v2097
    %2107 = vst.msk [vmem:[#allocation2 + $0x4b8] sm:$0xf0] %vm430, %v2088
    %2108 = vst [vmem:[#allocation2 + $0x4d0] sm:$0xff] %v2098
    %2109 = vst.msk [vmem:[#allocation2 + $0x4d8] sm:$0xff] %vm383, %v2092
    %2110 = vst [vmem:[#allocation2 + $0x4f0] sm:$0xff] %v2099
    %2111 = vst.msk [vmem:[#allocation2 + $0x4f8] sm:$0xff] %vm383, %v2096
    %2112 = vrot.lane.b32.xlu0 %v1679, 112
    %v2113 = vpop.permute.xlu0 %2112
    %2114 = vrot.lane.b32.xlu0 %v1680, 112
    %v2115 = vpop.permute.xlu0 %2114
    %2116 = vrot.lane.b32.xlu0 %v1681, 112
    %v2117 = vpop.permute.xlu0 %2116
    %2118 = vrot.lane.b32.xlu0 %v1682, 112
    %v2119 = vpop.permute.xlu0 %2118
    %2120 = vrot.lane.b32.xlu0 %v1683, 112
    %v2121 = vpop.permute.xlu0 %2120
    %2122 = vrot.lane.b32.xlu0 %v1684, 112
    %v2123 = vpop.permute.xlu0 %2122
    %v2124 = vsel %vm840, %v2113, %v2115
    %v2125 = vsel %vm840, %v2117, %v2119
    %v2126 = vsel %vm840, %v2121, %v2123
    %2133 = vst [vmem:[#allocation2 + $0x510] sm:$0xff] %v2124
    %2134 = vst.msk [vmem:[#allocation2 + $0x518] sm:$0xff] %vm383, %v2115
    %2135 = vst [vmem:[#allocation2 + $0x530] sm:$0xff] %v2125
    %2136 = vst.msk [vmem:[#allocation2 + $0x538] sm:$0xff] %vm383, %v2119
    %2137 = vst [vmem:[#allocation2 + $0x550] sm:$0xf] %v2126
    %2138 = vst.msk [vmem:[#allocation2 + $0x558] sm:$0xf] %vm388, %v2123
    %2139 = vrot.lane.b32.xlu0 %v1697, 111
    %v2140 = vpop.permute.xlu0 %2139
    %2141 = vrot.lane.b32.xlu0 %v1698, 111
    %v2142 = vpop.permute.xlu0 %2141
    %2143 = vrot.lane.b32.xlu0 %v1700, 111
    %v2144 = vpop.permute.xlu0 %2143
    %2145 = vrot.lane.b32.xlu0 %v1702, 111
    %v2146 = vpop.permute.xlu0 %2145
    %2147 = vrot.lane.b32.xlu0 %v1704, 111
    %v2148 = vpop.permute.xlu0 %2147
    %2149 = vrot.lane.b32.xlu0 %v1706, 111
    %v2150 = vpop.permute.xlu0 %2149
    %v2151 = vsel %vm868, %v2140, %v2142
    %v2152 = vsel %vm868, %v2144, %v2146
    %v2153 = vsel %vm868, %v2148, %v2150
    %2160 = vst [vmem:[#allocation2 + $0x550] sm:$0xf0] %v2151
    %2161 = vst.msk [vmem:[#allocation2 + $0x558] sm:$0xf0] %vm430, %v2142
    %2162 = vst [vmem:[#allocation2 + $0x570] sm:$0xff] %v2152
    %2163 = vst.msk [vmem:[#allocation2 + $0x578] sm:$0xff] %vm383, %v2146
    %2164 = vst [vmem:[#allocation2 + $0x590] sm:$0xff] %v2153
    %2165 = vst.msk [vmem:[#allocation2 + $0x598] sm:$0xff] %vm383, %v2150
    %2166 = vrot.lane.b32.xlu0 %v1679, 110
    %v2167 = vpop.permute.xlu0 %2166
    %2168 = vrot.lane.b32.xlu0 %v1680, 110
    %v2169 = vpop.permute.xlu0 %2168
    %2170 = vrot.lane.b32.xlu0 %v1681, 110
    %v2171 = vpop.permute.xlu0 %2170
    %2172 = vrot.lane.b32.xlu0 %v1682, 110
    %v2173 = vpop.permute.xlu0 %2172
    %2174 = vrot.lane.b32.xlu0 %v1683, 110
    %v2175 = vpop.permute.xlu0 %2174
    %2176 = vrot.lane.b32.xlu0 %v1684, 110
    %v2177 = vpop.permute.xlu0 %2176
    %v2178 = vsel %vm896, %v2167, %v2169
    %v2179 = vsel %vm896, %v2171, %v2173
    %v2180 = vsel %vm896, %v2175, %v2177
    %2187 = vst [vmem:[#allocation2 + $0x5b0] sm:$0xff] %v2178
    %2188 = vst.msk [vmem:[#allocation2 + $0x5b8] sm:$0xff] %vm383, %v2169
    %2189 = vst [vmem:[#allocation2 + $0x5d0] sm:$0xff] %v2179
    %2190 = vst.msk [vmem:[#allocation2 + $0x5d8] sm:$0xff] %vm383, %v2173
    %2191 = vst [vmem:[#allocation2 + $0x5f0] sm:$0xf] %v2180
    %2192 = vst.msk [vmem:[#allocation2 + $0x5f8] sm:$0xf] %vm388, %v2177
    %2193 = vrot.lane.b32.xlu0 %v1697, 109
    %v2194 = vpop.permute.xlu0 %2193
    %2195 = vrot.lane.b32.xlu0 %v1698, 109
    %v2196 = vpop.permute.xlu0 %2195
    %2197 = vrot.lane.b32.xlu0 %v1700, 109
    %v2198 = vpop.permute.xlu0 %2197
    %2199 = vrot.lane.b32.xlu0 %v1702, 109
    %v2200 = vpop.permute.xlu0 %2199
    %2201 = vrot.lane.b32.xlu0 %v1704, 109
    %v2202 = vpop.permute.xlu0 %2201
    %2203 = vrot.lane.b32.xlu0 %v1706, 109
    %v2204 = vpop.permute.xlu0 %2203
    %v2205 = vsel %vm924, %v2194, %v2196
    %v2206 = vsel %vm924, %v2198, %v2200
    %v2207 = vsel %vm924, %v2202, %v2204
    %2214 = vst [vmem:[#allocation2 + $0x5f0] sm:$0xf0] %v2205
    %2215 = vst.msk [vmem:[#allocation2 + $0x5f8] sm:$0xf0] %vm430, %v2196
    %2216 = vst [vmem:[#allocation2 + $0x610] sm:$0xff] %v2206
    %2217 = vst.msk [vmem:[#allocation2 + $0x618] sm:$0xff] %vm383, %v2200
    %2218 = vst [vmem:[#allocation2 + $0x630] sm:$0xff] %v2207
    %2219 = vst.msk [vmem:[#allocation2 + $0x638] sm:$0xff] %vm383, %v2204
    %2220 = vrot.lane.b32.xlu0 %v1679, 108
    %v2221 = vpop.permute.xlu0 %2220
    %2222 = vrot.lane.b32.xlu0 %v1680, 108
    %v2223 = vpop.permute.xlu0 %2222
    %2224 = vrot.lane.b32.xlu0 %v1681, 108
    %v2225 = vpop.permute.xlu0 %2224
    %2226 = vrot.lane.b32.xlu0 %v1682, 108
    %v2227 = vpop.permute.xlu0 %2226
    %2228 = vrot.lane.b32.xlu0 %v1683, 108
    %v2229 = vpop.permute.xlu0 %2228
    %2230 = vrot.lane.b32.xlu0 %v1684, 108
    %v2231 = vpop.permute.xlu0 %2230
    %v2232 = vsel %vm952, %v2221, %v2223
    %v2233 = vsel %vm952, %v2225, %v2227
    %v2234 = vsel %vm952, %v2229, %v2231
    %2241 = vst [vmem:[#allocation2 + $0x650] sm:$0xff] %v2232
    %2242 = vst.msk [vmem:[#allocation2 + $0x658] sm:$0xff] %vm383, %v2223
    %2243 = vst [vmem:[#allocation2 + $0x670] sm:$0xff] %v2233
    %2244 = vst.msk [vmem:[#allocation2 + $0x678] sm:$0xff] %vm383, %v2227
    %2245 = vst [vmem:[#allocation2 + $0x690] sm:$0xf] %v2234
    %2246 = vst.msk [vmem:[#allocation2 + $0x698] sm:$0xf] %vm388, %v2231
    %2247 = vrot.lane.b32.xlu0 %v1697, 107
    %v2248 = vpop.permute.xlu0 %2247
    %2249 = vrot.lane.b32.xlu0 %v1698, 107
    %v2250 = vpop.permute.xlu0 %2249
    %2251 = vrot.lane.b32.xlu0 %v1700, 107
    %v2252 = vpop.permute.xlu0 %2251
    %2253 = vrot.lane.b32.xlu0 %v1702, 107
    %v2254 = vpop.permute.xlu0 %2253
    %2255 = vrot.lane.b32.xlu0 %v1704, 107
    %v2256 = vpop.permute.xlu0 %2255
    %2257 = vrot.lane.b32.xlu0 %v1706, 107
    %v2258 = vpop.permute.xlu0 %2257
    %v2259 = vsel %vm980, %v2248, %v2250
    %v2260 = vsel %vm980, %v2252, %v2254
    %v2261 = vsel %vm980, %v2256, %v2258
    %2268 = vst [vmem:[#allocation2 + $0x690] sm:$0xf0] %v2259
    %2269 = vst.msk [vmem:[#allocation2 + $0x698] sm:$0xf0] %vm430, %v2250
    %2270 = vst [vmem:[#allocation2 + $0x6b0] sm:$0xff] %v2260
    %2271 = vst.msk [vmem:[#allocation2 + $0x6b8] sm:$0xff] %vm383, %v2254
    %2272 = vst [vmem:[#allocation2 + $0x6d0] sm:$0xff] %v2261
    %2273 = vst.msk [vmem:[#allocation2 + $0x6d8] sm:$0xff] %vm383, %v2258
    %2274 = vrot.lane.b32.xlu0 %v1679, 106
    %v2275 = vpop.permute.xlu0 %2274
    %2276 = vrot.lane.b32.xlu0 %v1680, 106
    %v2277 = vpop.permute.xlu0 %2276
    %2278 = vrot.lane.b32.xlu0 %v1681, 106
    %v2279 = vpop.permute.xlu0 %2278
    %2280 = vrot.lane.b32.xlu0 %v1682, 106
    %v2281 = vpop.permute.xlu0 %2280
    %2282 = vrot.lane.b32.xlu0 %v1683, 106
    %v2283 = vpop.permute.xlu0 %2282
    %2284 = vrot.lane.b32.xlu0 %v1684, 106
    %v2285 = vpop.permute.xlu0 %2284
    %v2286 = vsel %vm1008, %v2275, %v2277
    %v2287 = vsel %vm1008, %v2279, %v2281
    %v2288 = vsel %vm1008, %v2283, %v2285
    %2295 = vst [vmem:[#allocation2 + $0x6f0] sm:$0xff] %v2286
    %2296 = vst.msk [vmem:[#allocation2 + $0x6f8] sm:$0xff] %vm383, %v2277
    %2297 = vst [vmem:[#allocation2 + $0x710] sm:$0xff] %v2287
    %2298 = vst.msk [vmem:[#allocation2 + $0x718] sm:$0xff] %vm383, %v2281
    %2299 = vst [vmem:[#allocation2 + $0x730] sm:$0xf] %v2288
    %2300 = vst.msk [vmem:[#allocation2 + $0x738] sm:$0xf] %vm388, %v2285
    %2301 = vrot.lane.b32.xlu0 %v1697, 105
    %v2302 = vpop.permute.xlu0 %2301
    %2303 = vrot.lane.b32.xlu0 %v1698, 105
    %v2304 = vpop.permute.xlu0 %2303
    %2305 = vrot.lane.b32.xlu0 %v1700, 105
    %v2306 = vpop.permute.xlu0 %2305
    %2307 = vrot.lane.b32.xlu0 %v1702, 105
    %v2308 = vpop.permute.xlu0 %2307
    %2309 = vrot.lane.b32.xlu0 %v1704, 105
    %v2310 = vpop.permute.xlu0 %2309
    %2311 = vrot.lane.b32.xlu0 %v1706, 105
    %v2312 = vpop.permute.xlu0 %2311
    %v2313 = vsel %vm1036, %v2302, %v2304
    %v2314 = vsel %vm1036, %v2306, %v2308
    %v2315 = vsel %vm1036, %v2310, %v2312
    %2322 = vst [vmem:[#allocation2 + $0x730] sm:$0xf0] %v2313
    %2323 = vst.msk [vmem:[#allocation2 + $0x738] sm:$0xf0] %vm430, %v2304
    %2324 = vst [vmem:[#allocation2 + $0x750] sm:$0xff] %v2314
    %2325 = vst.msk [vmem:[#allocation2 + $0x758] sm:$0xff] %vm383, %v2308
    %2326 = vst [vmem:[#allocation2 + $0x770] sm:$0xff] %v2315
    %2327 = vst.msk [vmem:[#allocation2 + $0x778] sm:$0xff] %vm383, %v2312
    %2328 = vrot.lane.b32.xlu0 %v1679, 104
    %v2329 = vpop.permute.xlu0 %2328
    %2330 = vrot.lane.b32.xlu0 %v1680, 104
    %v2331 = vpop.permute.xlu0 %2330
    %2332 = vrot.lane.b32.xlu0 %v1681, 104
    %v2333 = vpop.permute.xlu0 %2332
    %2334 = vrot.lane.b32.xlu0 %v1682, 104
    %v2335 = vpop.permute.xlu0 %2334
    %2336 = vrot.lane.b32.xlu0 %v1683, 104
    %v2337 = vpop.permute.xlu0 %2336
    %2338 = vrot.lane.b32.xlu0 %v1684, 104
    %v2339 = vpop.permute.xlu0 %2338
    %v2340 = vsel %vm1064, %v2329, %v2331
    %v2341 = vsel %vm1064, %v2333, %v2335
    %v2342 = vsel %vm1064, %v2337, %v2339
    %2349 = vst [vmem:[#allocation2 + $0x790] sm:$0xff] %v2340
    %2350 = vst.msk [vmem:[#allocation2 + $0x798] sm:$0xff] %vm383, %v2331
    %2351 = vst [vmem:[#allocation2 + $0x7b0] sm:$0xff] %v2341
    %2352 = vst.msk [vmem:[#allocation2 + $0x7b8] sm:$0xff] %vm383, %v2335
    %2353 = vst [vmem:[#allocation2 + $0x7d0] sm:$0xf] %v2342
    %2354 = vst.msk [vmem:[#allocation2 + $0x7d8] sm:$0xf] %vm388, %v2339
    %2355 = vrot.lane.b32.xlu0 %v1697, 103
    %v2356 = vpop.permute.xlu0 %2355
    %2357 = vrot.lane.b32.xlu0 %v1698, 103
    %v2358 = vpop.permute.xlu0 %2357
    %2359 = vrot.lane.b32.xlu0 %v1700, 103
    %v2360 = vpop.permute.xlu0 %2359
    %2361 = vrot.lane.b32.xlu0 %v1702, 103
    %v2362 = vpop.permute.xlu0 %2361
    %2363 = vrot.lane.b32.xlu0 %v1704, 103
    %v2364 = vpop.permute.xlu0 %2363
    %2365 = vrot.lane.b32.xlu0 %v1706, 103
    %v2366 = vpop.permute.xlu0 %2365
    %v2367 = vsel %vm1092, %v2356, %v2358
    %v2368 = vsel %vm1092, %v2360, %v2362
    %v2369 = vsel %vm1092, %v2364, %v2366
    %2376 = vst [vmem:[#allocation2 + $0x7d0] sm:$0xf0] %v2367
    %2377 = vst.msk [vmem:[#allocation2 + $0x7d8] sm:$0xf0] %vm430, %v2358
    %2378 = vst [vmem:[#allocation2 + $0x7f0] sm:$0xff] %v2368
    %2379 = vst.msk [vmem:[#allocation2 + $0x7f8] sm:$0xff] %vm383, %v2362
    %2380 = vst [vmem:[#allocation2 + $0x810] sm:$0xff] %v2369
    %2381 = vst.msk [vmem:[#allocation2 + $0x818] sm:$0xff] %vm383, %v2366
    %2382 = vrot.lane.b32.xlu0 %v1679, 102
    %v2383 = vpop.permute.xlu0 %2382
    %2384 = vrot.lane.b32.xlu0 %v1680, 102
    %v2385 = vpop.permute.xlu0 %2384
    %2386 = vrot.lane.b32.xlu0 %v1681, 102
    %v2387 = vpop.permute.xlu0 %2386
    %2388 = vrot.lane.b32.xlu0 %v1682, 102
    %v2389 = vpop.permute.xlu0 %2388
    %2390 = vrot.lane.b32.xlu0 %v1683, 102
    %v2391 = vpop.permute.xlu0 %2390
    %2392 = vrot.lane.b32.xlu0 %v1684, 102
    %v2393 = vpop.permute.xlu0 %2392
    %v2394 = vsel %vm1120, %v2383, %v2385
    %v2395 = vsel %vm1120, %v2387, %v2389
    %v2396 = vsel %vm1120, %v2391, %v2393
    %2403 = vst [vmem:[#allocation2 + $0x830] sm:$0xff] %v2394
    %2404 = vst.msk [vmem:[#allocation2 + $0x838] sm:$0xff] %vm383, %v2385
    %2405 = vst [vmem:[#allocation2 + $0x850] sm:$0xff] %v2395
    %2406 = vst.msk [vmem:[#allocation2 + $0x858] sm:$0xff] %vm383, %v2389
    %2407 = vst [vmem:[#allocation2 + $0x870] sm:$0xf] %v2396
    %2408 = vst.msk [vmem:[#allocation2 + $0x878] sm:$0xf] %vm388, %v2393
    %2409 = vrot.lane.b32.xlu0 %v1697, 101
    %v2410 = vpop.permute.xlu0 %2409
    %2411 = vrot.lane.b32.xlu0 %v1698, 101
    %v2412 = vpop.permute.xlu0 %2411
    %2413 = vrot.lane.b32.xlu0 %v1700, 101
    %v2414 = vpop.permute.xlu0 %2413
    %2415 = vrot.lane.b32.xlu0 %v1702, 101
    %v2416 = vpop.permute.xlu0 %2415
    %2417 = vrot.lane.b32.xlu0 %v1704, 101
    %v2418 = vpop.permute.xlu0 %2417
    %2419 = vrot.lane.b32.xlu0 %v1706, 101
    %v2420 = vpop.permute.xlu0 %2419
    %v2421 = vsel %vm1148, %v2410, %v2412
    %v2422 = vsel %vm1148, %v2414, %v2416
    %v2423 = vsel %vm1148, %v2418, %v2420
    %2430 = vst [vmem:[#allocation2 + $0x870] sm:$0xf0] %v2421
    %2431 = vst.msk [vmem:[#allocation2 + $0x878] sm:$0xf0] %vm430, %v2412
    %2432 = vst [vmem:[#allocation2 + $0x890] sm:$0xff] %v2422
    %2433 = vst.msk [vmem:[#allocation2 + $0x898] sm:$0xff] %vm383, %v2416
    %2434 = vst [vmem:[#allocation2 + $0x8b0] sm:$0xff] %v2423
    %2435 = vst.msk [vmem:[#allocation2 + $0x8b8] sm:$0xff] %vm383, %v2420
    %2436 = vrot.lane.b32.xlu0 %v1679, 100
    %v2437 = vpop.permute.xlu0 %2436
    %2438 = vrot.lane.b32.xlu0 %v1680, 100
    %v2439 = vpop.permute.xlu0 %2438
    %2440 = vrot.lane.b32.xlu0 %v1681, 100
    %v2441 = vpop.permute.xlu0 %2440
    %2442 = vrot.lane.b32.xlu0 %v1682, 100
    %v2443 = vpop.permute.xlu0 %2442
    %2444 = vrot.lane.b32.xlu0 %v1683, 100
    %v2445 = vpop.permute.xlu0 %2444
    %2446 = vrot.lane.b32.xlu0 %v1684, 100
    %v2447 = vpop.permute.xlu0 %2446
    %v2448 = vsel %vm1176, %v2437, %v2439
    %v2449 = vsel %vm1176, %v2441, %v2443
    %v2450 = vsel %vm1176, %v2445, %v2447
    %2457 = vst [vmem:[#allocation2 + $0x8d0] sm:$0xff] %v2448
    %2458 = vst.msk [vmem:[#allocation2 + $0x8d8] sm:$0xff] %vm383, %v2439
    %2459 = vst [vmem:[#allocation2 + $0x8f0] sm:$0xff] %v2449
    %2460 = vst.msk [vmem:[#allocation2 + $0x8f8] sm:$0xff] %vm383, %v2443
    %2461 = vst [vmem:[#allocation2 + $0x910] sm:$0xf] %v2450
    %2462 = vst.msk [vmem:[#allocation2 + $0x918] sm:$0xf] %vm388, %v2447
    %2463 = vrot.lane.b32.xlu0 %v1697, 99
    %v2464 = vpop.permute.xlu0 %2463
    %2465 = vrot.lane.b32.xlu0 %v1698, 99
    %v2466 = vpop.permute.xlu0 %2465
    %2467 = vrot.lane.b32.xlu0 %v1700, 99
    %v2468 = vpop.permute.xlu0 %2467
    %2469 = vrot.lane.b32.xlu0 %v1702, 99
    %v2470 = vpop.permute.xlu0 %2469
    %2471 = vrot.lane.b32.xlu0 %v1704, 99
    %v2472 = vpop.permute.xlu0 %2471
    %2473 = vrot.lane.b32.xlu0 %v1706, 99
    %v2474 = vpop.permute.xlu0 %2473
    %v2475 = vsel %vm1204, %v2464, %v2466
    %v2476 = vsel %vm1204, %v2468, %v2470
    %v2477 = vsel %vm1204, %v2472, %v2474
    %2484 = vst [vmem:[#allocation2 + $0x910] sm:$0xf0] %v2475
    %2485 = vst.msk [vmem:[#allocation2 + $0x918] sm:$0xf0] %vm430, %v2466
    %2486 = vst [vmem:[#allocation2 + $0x930] sm:$0xff] %v2476
    %2487 = vst.msk [vmem:[#allocation2 + $0x938] sm:$0xff] %vm383, %v2470
    %2488 = vst [vmem:[#allocation2 + $0x950] sm:$0xff] %v2477
    %2489 = vst.msk [vmem:[#allocation2 + $0x958] sm:$0xff] %vm383, %v2474
    %2490 = vrot.lane.b32.xlu0 %v1679, 98
    %v2491 = vpop.permute.xlu0 %2490
    %2492 = vrot.lane.b32.xlu0 %v1680, 98
    %v2493 = vpop.permute.xlu0 %2492
    %2494 = vrot.lane.b32.xlu0 %v1681, 98
    %v2495 = vpop.permute.xlu0 %2494
    %2496 = vrot.lane.b32.xlu0 %v1682, 98
    %v2497 = vpop.permute.xlu0 %2496
    %2498 = vrot.lane.b32.xlu0 %v1683, 98
    %v2499 = vpop.permute.xlu0 %2498
    %2500 = vrot.lane.b32.xlu0 %v1684, 98
    %v2501 = vpop.permute.xlu0 %2500
    %v2502 = vsel %vm1232, %v2491, %v2493
    %v2503 = vsel %vm1232, %v2495, %v2497
    %v2504 = vsel %vm1232, %v2499, %v2501
    %2511 = vst [vmem:[#allocation2 + $0x970] sm:$0xff] %v2502
    %2512 = vst.msk [vmem:[#allocation2 + $0x978] sm:$0xff] %vm383, %v2493
    %2513 = vst [vmem:[#allocation2 + $0x990] sm:$0xff] %v2503
    %2514 = vst.msk [vmem:[#allocation2 + $0x998] sm:$0xff] %vm383, %v2497
    %2515 = vst [vmem:[#allocation2 + $0x9b0] sm:$0xf] %v2504
    %2516 = vst.msk [vmem:[#allocation2 + $0x9b8] sm:$0xf] %vm388, %v2501
    %2517 = vrot.lane.b32.xlu0 %v1697, 97
    %v2518 = vpop.permute.xlu0 %2517
    %2519 = vrot.lane.b32.xlu0 %v1698, 97
    %v2520 = vpop.permute.xlu0 %2519
    %2521 = vrot.lane.b32.xlu0 %v1700, 97
    %v2522 = vpop.permute.xlu0 %2521
    %2523 = vrot.lane.b32.xlu0 %v1702, 97
    %v2524 = vpop.permute.xlu0 %2523
    %2525 = vrot.lane.b32.xlu0 %v1704, 97
    %v2526 = vpop.permute.xlu0 %2525
    %2527 = vrot.lane.b32.xlu0 %v1706, 97
    %v2528 = vpop.permute.xlu0 %2527
    %v2529 = vsel %vm1260, %v2518, %v2520
    %v2530 = vsel %vm1260, %v2522, %v2524
    %v2531 = vsel %vm1260, %v2526, %v2528
    %2538 = vst [vmem:[#allocation2 + $0x9b0] sm:$0xf0] %v2529
    %2539 = vst.msk [vmem:[#allocation2 + $0x9b8] sm:$0xf0] %vm430, %v2520
    %2540 = vst [vmem:[#allocation2 + $0x9d0] sm:$0xff] %v2530
    %2541 = vst.msk [vmem:[#allocation2 + $0x9d8] sm:$0xff] %vm383, %v2524
    %2542 = vst [vmem:[#allocation2 + $0x9f0] sm:$0xff] %v2531
    %2543 = vst.msk [vmem:[#allocation2 + $0x9f8] sm:$0xff] %vm383, %v2528
    %2544 = vrot.lane.b32.xlu0 %v1679, 96
    %v2545 = vpop.permute.xlu0 %2544
    %2546 = vrot.lane.b32.xlu0 %v1680, 96
    %v2547 = vpop.permute.xlu0 %2546
    %2548 = vrot.lane.b32.xlu0 %v1681, 96
    %v2549 = vpop.permute.xlu0 %2548
    %2550 = vrot.lane.b32.xlu0 %v1682, 96
    %v2551 = vpop.permute.xlu0 %2550
    %2552 = vrot.lane.b32.xlu0 %v1683, 96
    %v2553 = vpop.permute.xlu0 %2552
    %2554 = vrot.lane.b32.xlu0 %v1684, 96
    %v2555 = vpop.permute.xlu0 %2554
    %v2556 = vsel %vm1288, %v2545, %v2547
    %v2557 = vsel %vm1288, %v2549, %v2551
    %v2558 = vsel %vm1288, %v2553, %v2555
    %2565 = vst [vmem:[#allocation2 + $0xa10] sm:$0xff] %v2556
    %2566 = vst.msk [vmem:[#allocation2 + $0xa18] sm:$0xff] %vm383, %v2547
    %2567 = vst [vmem:[#allocation2 + $0xa30] sm:$0xff] %v2557
    %2568 = vst.msk [vmem:[#allocation2 + $0xa38] sm:$0xff] %vm383, %v2551
    %2569 = vst [vmem:[#allocation2 + $0xa50] sm:$0xf] %v2558
    %2570 = vst.msk [vmem:[#allocation2 + $0xa58] sm:$0xf] %vm388, %v2555
    %2571 = vrot.lane.b32.xlu0 %v1697, 95
    %v2572 = vpop.permute.xlu0 %2571
    %2573 = vrot.lane.b32.xlu0 %v1698, 95
    %v2574 = vpop.permute.xlu0 %2573
    %2575 = vrot.lane.b32.xlu0 %v1700, 95
    %v2576 = vpop.permute.xlu0 %2575
    %2577 = vrot.lane.b32.xlu0 %v1702, 95
    %v2578 = vpop.permute.xlu0 %2577
    %2579 = vrot.lane.b32.xlu0 %v1704, 95
    %v2580 = vpop.permute.xlu0 %2579
    %2581 = vrot.lane.b32.xlu0 %v1706, 95
    %v2582 = vpop.permute.xlu0 %2581
    %v2583 = vsel %vm1316, %v2572, %v2574
    %v2584 = vsel %vm1316, %v2576, %v2578
    %v2585 = vsel %vm1316, %v2580, %v2582
    %2592 = vst [vmem:[#allocation2 + $0xa50] sm:$0xf0] %v2583
    %2593 = vst.msk [vmem:[#allocation2 + $0xa58] sm:$0xf0] %vm430, %v2574
    %2594 = vst [vmem:[#allocation2 + $0xa70] sm:$0xff] %v2584
    %2595 = vst.msk [vmem:[#allocation2 + $0xa78] sm:$0xff] %vm383, %v2578
    %2596 = vst [vmem:[#allocation2 + $0xa90] sm:$0xff] %v2585
    %2597 = vst.msk [vmem:[#allocation2 + $0xa98] sm:$0xff] %vm383, %v2582
    %v2598 = vld [vmem:[%s2] sm:$0xff]
    %v2599 = vld [vmem:[%s2 + $0x8] sm:$0xff]
    %v2600 = vld [vmem:[%s2 + $0x10] sm:$0xff]
    %v2601 = vld [vmem:[%s2 + $0x18] sm:$0xff]
    %v2602 = vld [vmem:[%s2 + $0x20] sm:$0xff]
    %v2603 = vld [vmem:[%s2 + $0x28] sm:$0xff]
    %v2604 = vld [vmem:[%s2 + $0x30] sm:$0x3]
    %v2605 = vld [vmem:[%s2 + $0x38] sm:$0x3]
    %v2606 = vld [vmem:[%s2 + $0x40] sm:$0x3]
    %v2607 = vld [vmem:[%s2 + $0x48] sm:$0x3]
    %v2608 = vld [vmem:[%s2 + $0x50] sm:$0x3]
    %v2609 = vld [vmem:[%s2 + $0x58] sm:$0x3]
    %v2610 = vld [vmem:[#allocation2] sm:$0xff]
    %v2611 = vld [vmem:[#allocation2 + $0x8] sm:$0xff]
    %v2612 = vld [vmem:[#allocation2 + $0x10] sm:$0xff]
    %v2613 = vld [vmem:[#allocation2 + $0x18] sm:$0xff]
    %v2614 = vld [vmem:[#allocation2 + $0x20] sm:$0xff]
    %v2615 = vld [vmem:[#allocation2 + $0x28] sm:$0xff]
    %v2616 = vld [vmem:[#allocation2 + $0x30] sm:$0xff]
    %v2617 = vld [vmem:[#allocation2 + $0x38] sm:$0xff]
    %v2618 = vld [vmem:[#allocation2 + $0x40] sm:$0xff]
    %v2619 = vld [vmem:[#allocation2 + $0x48] sm:$0xff]
    %v2620 = vld [vmem:[#allocation2 + $0x50] sm:$0xff]
    %v2621 = vld [vmem:[#allocation2 + $0x58] sm:$0xff]
    %v2622 = vld [vmem:[#allocation2 + $0x60] sm:$0xff]
    %v2623 = vld [vmem:[#allocation2 + $0x68] sm:$0xff]
    %v2624 = vld [vmem:[#allocation2 + $0x70] sm:$0xff]
    %v2625 = vld [vmem:[#allocation2 + $0x78] sm:$0xff]
    %v2626 = vld [vmem:[#allocation2 + $0x80] sm:$0xff]
    %v2627 = vld [vmem:[#allocation2 + $0x88] sm:$0xff]
    %v2628 = vld [vmem:[#allocation2 + $0x90] sm:$0xff]
    %v2629 = vld [vmem:[#allocation2 + $0x98] sm:$0xff]
    %v2630 = vld [vmem:[#allocation2 + $0xa0] sm:$0xff]
    %v2631 = vld [vmem:[#allocation2 + $0xa8] sm:$0xff]
    %v2632 = vld [vmem:[#allocation2 + $0xb0] sm:$0xff]
    %v2633 = vld [vmem:[#allocation2 + $0xb8] sm:$0xff]
    %v2634 = vld [vmem:[#allocation2 + $0xc0] sm:$0xff]
    %v2635 = vld [vmem:[#allocation2 + $0xc8] sm:$0xff]
    %v2636 = vld [vmem:[#allocation2 + $0xd0] sm:$0xff]
    %v2637 = vld [vmem:[#allocation2 + $0xd8] sm:$0xff]
    %v2638 = vld [vmem:[#allocation2 + $0xe0] sm:$0xff]
    %v2639 = vld [vmem:[#allocation2 + $0xe8] sm:$0xff]
    %v2640 = vld [vmem:[#allocation2 + $0xf0] sm:$0xff]
    %v2641 = vld [vmem:[#allocation2 + $0xf8] sm:$0xff]
    %v2642 = vld [vmem:[#allocation2 + $0x100] sm:$0xff]
    %v2643 = vld [vmem:[#allocation2 + $0x108] sm:$0xff]
    %v2644 = vld [vmem:[#allocation2 + $0x110] sm:$0xff]
    %v2645 = vld [vmem:[#allocation2 + $0x118] sm:$0xff]
    %v2646 = vld [vmem:[#allocation2 + $0x120] sm:$0xff]
    %v2647 = vld [vmem:[#allocation2 + $0x128] sm:$0xff]
    %v2648 = vld [vmem:[#allocation2 + $0x130] sm:$0xff]
    %v2649 = vld [vmem:[#allocation2 + $0x138] sm:$0xff]
    %v2650 = vld [vmem:[#allocation2 + $0x140] sm:$0xff]
    %v2651 = vld [vmem:[#allocation2 + $0x148] sm:$0xff]
    %v2652 = vld [vmem:[#allocation2 + $0x150] sm:$0xff]
    %v2653 = vld [vmem:[#allocation2 + $0x158] sm:$0xff]
    %v2654 = vld [vmem:[#allocation2 + $0x160] sm:$0xff]
    %v2655 = vld [vmem:[#allocation2 + $0x168] sm:$0xff]
    %v2656 = vld [vmem:[#allocation2 + $0x170] sm:$0xff]
    %v2657 = vld [vmem:[#allocation2 + $0x178] sm:$0xff]
    %v2658 = vld [vmem:[#allocation2 + $0x180] sm:$0xff]
    %v2659 = vld [vmem:[#allocation2 + $0x188] sm:$0xff]
    %v2660 = vld [vmem:[#allocation2 + $0x190] sm:$0xff]
    %v2661 = vld [vmem:[#allocation2 + $0x198] sm:$0xff]
    %v2662 = vld [vmem:[#allocation2 + $0x1a0] sm:$0xff]
    %v2663 = vld [vmem:[#allocation2 + $0x1a8] sm:$0xff]
    %v2664 = vld [vmem:[#allocation2 + $0x1b0] sm:$0xff]
    %v2665 = vld [vmem:[#allocation2 + $0x1b8] sm:$0xff]
    %v2666 = vld [vmem:[#allocation2 + $0x1c0] sm:$0xff]
    %v2667 = vld [vmem:[#allocation2 + $0x1c8] sm:$0xff]
    %v2668 = vld [vmem:[#allocation2 + $0x1d0] sm:$0xff]
    %v2669 = vld [vmem:[#allocation2 + $0x1d8] sm:$0xff]
    %v2670 = vld [vmem:[#allocation2 + $0x1e0] sm:$0xff]
    %v2671 = vld [vmem:[#allocation2 + $0x1e8] sm:$0xff]
    %v2672 = vld [vmem:[#allocation2 + $0x1f0] sm:$0xff]
    %v2673 = vld [vmem:[#allocation2 + $0x1f8] sm:$0xff]
    %v2674 = vld [vmem:[#allocation2 + $0x200] sm:$0xff]
    %v2675 = vld [vmem:[#allocation2 + $0x208] sm:$0xff]
    %v2676 = vld [vmem:[#allocation2 + $0x210] sm:$0xff]
    %v2677 = vld [vmem:[#allocation2 + $0x218] sm:$0xff]
    %v2678 = vld [vmem:[#allocation2 + $0x220] sm:$0xff]
    %v2679 = vld [vmem:[#allocation2 + $0x228] sm:$0xff]
    %v2680 = vld [vmem:[#allocation2 + $0x230] sm:$0xff]
    %v2681 = vld [vmem:[#allocation2 + $0x238] sm:$0xff]
    %v2682 = vld [vmem:[#allocation2 + $0x240] sm:$0xff]
    %v2683 = vld [vmem:[#allocation2 + $0x248] sm:$0xff]
    %v2684 = vld [vmem:[#allocation2 + $0x250] sm:$0xff]
    %v2685 = vld [vmem:[#allocation2 + $0x258] sm:$0xff]
    %v2686 = vld [vmem:[#allocation2 + $0x260] sm:$0xff]
    %v2687 = vld [vmem:[#allocation2 + $0x268] sm:$0xff]
    %v2688 = vld [vmem:[#allocation2 + $0x270] sm:$0xff]
    %v2689 = vld [vmem:[#allocation2 + $0x278] sm:$0xff]
    %v2690 = vld [vmem:[#allocation2 + $0x280] sm:$0xff]
    %v2691 = vld [vmem:[#allocation2 + $0x288] sm:$0xff]
    %v2692 = vld [vmem:[#allocation2 + $0x290] sm:$0xff]
    %v2693 = vld [vmem:[#allocation2 + $0x298] sm:$0xff]
    %v2694 = vld [vmem:[#allocation2 + $0x2a0] sm:$0xff]
    %v2695 = vld [vmem:[#allocation2 + $0x2a8] sm:$0xff]
    %v2696 = vld [vmem:[#allocation2 + $0x2b0] sm:$0xff]
    %v2697 = vld [vmem:[#allocation2 + $0x2b8] sm:$0xff]
    %v2698 = vld [vmem:[#allocation2 + $0x2c0] sm:$0xff]
    %v2699 = vld [vmem:[#allocation2 + $0x2c8] sm:$0xff]
    %v2700 = vld [vmem:[#allocation2 + $0x2d0] sm:$0xff]
    %v2701 = vld [vmem:[#allocation2 + $0x2d8] sm:$0xff]
    %v2702 = vld [vmem:[#allocation2 + $0x2e0] sm:$0xff]
    %v2703 = vld [vmem:[#allocation2 + $0x2e8] sm:$0xff]
    %v2704 = vld [vmem:[#allocation2 + $0x2f0] sm:$0xff]
    %v2705 = vld [vmem:[#allocation2 + $0x2f8] sm:$0xff]
    %v2706 = vld [vmem:[#allocation2 + $0x300] sm:$0xff]
    %v2707 = vld [vmem:[#allocation2 + $0x308] sm:$0xff]
    %v2708 = vld [vmem:[#allocation2 + $0x310] sm:$0xff]
    %v2709 = vld [vmem:[#allocation2 + $0x318] sm:$0xff]
    %v2710 = vld [vmem:[#allocation2 + $0x320] sm:$0xff]
    %v2711 = vld [vmem:[#allocation2 + $0x328] sm:$0xff]
    %v2712 = vld [vmem:[#allocation2 + $0x330] sm:$0xff]
    %v2713 = vld [vmem:[#allocation2 + $0x338] sm:$0xff]
    %v2714 = vld [vmem:[#allocation2 + $0x340] sm:$0xff]
    %v2715 = vld [vmem:[#allocation2 + $0x348] sm:$0xff]
    %v2716 = vld [vmem:[#allocation2 + $0x350] sm:$0xff]
    %v2717 = vld [vmem:[#allocation2 + $0x358] sm:$0xff]
    %v2718 = vld [vmem:[#allocation2 + $0x360] sm:$0xff]
    %v2719 = vld [vmem:[#allocation2 + $0x368] sm:$0xff]
    %v2720 = vld [vmem:[#allocation2 + $0x370] sm:$0xff]
    %v2721 = vld [vmem:[#allocation2 + $0x378] sm:$0xff]
    %v2722 = vld [vmem:[#allocation2 + $0x380] sm:$0xff]
    %v2723 = vld [vmem:[#allocation2 + $0x388] sm:$0xff]
    %v2724 = vld [vmem:[#allocation2 + $0x390] sm:$0xff]
    %v2725 = vld [vmem:[#allocation2 + $0x398] sm:$0xff]
    %v2726 = vld [vmem:[#allocation2 + $0x3a0] sm:$0xff]
    %v2727 = vld [vmem:[#allocation2 + $0x3a8] sm:$0xff]
    %v2728 = vld [vmem:[#allocation2 + $0x3b0] sm:$0xff]
    %v2729 = vld [vmem:[#allocation2 + $0x3b8] sm:$0xff]
    %v2730 = vld [vmem:[#allocation2 + $0x3c0] sm:$0xff]
    %v2731 = vld [vmem:[#allocation2 + $0x3c8] sm:$0xff]
    %v2732 = vld [vmem:[#allocation2 + $0x3d0] sm:$0xff]
    %v2733 = vld [vmem:[#allocation2 + $0x3d8] sm:$0xff]
    %v2734 = vld [vmem:[#allocation2 + $0x3e0] sm:$0xff]
    %v2735 = vld [vmem:[#allocation2 + $0x3e8] sm:$0xff]
    %v2736 = vld [vmem:[#allocation2 + $0x3f0] sm:$0xff]
    %v2737 = vld [vmem:[#allocation2 + $0x3f8] sm:$0xff]
    %v2738 = vld [vmem:[#allocation2 + $0x400] sm:$0xff]
    %v2739 = vld [vmem:[#allocation2 + $0x408] sm:$0xff]
    %v2740 = vld [vmem:[#allocation2 + $0x410] sm:$0xff]
    %v2741 = vld [vmem:[#allocation2 + $0x418] sm:$0xff]
    %v2742 = vld [vmem:[#allocation2 + $0x420] sm:$0xff]
    %v2743 = vld [vmem:[#allocation2 + $0x428] sm:$0xff]
    %v2744 = vld [vmem:[#allocation2 + $0x430] sm:$0xff]
    %v2745 = vld [vmem:[#allocation2 + $0x438] sm:$0xff]
    %v2746 = vld [vmem:[#allocation2 + $0x440] sm:$0xff]
    %v2747 = vld [vmem:[#allocation2 + $0x448] sm:$0xff]
    %v2748 = vld [vmem:[#allocation2 + $0x450] sm:$0xff]
    %v2749 = vld [vmem:[#allocation2 + $0x458] sm:$0xff]
    %v2750 = vld [vmem:[#allocation2 + $0x460] sm:$0xff]
    %v2751 = vld [vmem:[#allocation2 + $0x468] sm:$0xff]
    %v2752 = vld [vmem:[#allocation2 + $0x470] sm:$0xff]
    %v2753 = vld [vmem:[#allocation2 + $0x478] sm:$0xff]
    %v2754 = vld [vmem:[#allocation2 + $0x480] sm:$0xff]
    %v2755 = vld [vmem:[#allocation2 + $0x488] sm:$0xff]
    %v2756 = vld [vmem:[#allocation2 + $0x490] sm:$0xff]
    %v2757 = vld [vmem:[#allocation2 + $0x498] sm:$0xff]
    %v2758 = vld [vmem:[#allocation2 + $0x4a0] sm:$0xff]
    %v2759 = vld [vmem:[#allocation2 + $0x4a8] sm:$0xff]
    %v2760 = vld [vmem:[#allocation2 + $0x4b0] sm:$0xff]
    %v2761 = vld [vmem:[#allocation2 + $0x4b8] sm:$0xff]
    %v2762 = vld [vmem:[#allocation2 + $0x4c0] sm:$0xff]
    %v2763 = vld [vmem:[#allocation2 + $0x4c8] sm:$0xff]
    %v2764 = vld [vmem:[#allocation2 + $0x4d0] sm:$0xff]
    %v2765 = vld [vmem:[#allocation2 + $0x4d8] sm:$0xff]
    %v2766 = vld [vmem:[#allocation2 + $0x4e0] sm:$0xff]
    %v2767 = vld [vmem:[#allocation2 + $0x4e8] sm:$0xff]
    %v2768 = vld [vmem:[#allocation2 + $0x4f0] sm:$0xff]
    %v2769 = vld [vmem:[#allocation2 + $0x4f8] sm:$0xff]
    %v2770 = vld [vmem:[#allocation2 + $0x500] sm:$0xff]
    %v2771 = vld [vmem:[#allocation2 + $0x508] sm:$0xff]
    %v2772 = vld [vmem:[#allocation2 + $0x510] sm:$0xff]
    %v2773 = vld [vmem:[#allocation2 + $0x518] sm:$0xff]
    %v2774 = vld [vmem:[#allocation2 + $0x520] sm:$0xff]
    %v2775 = vld [vmem:[#allocation2 + $0x528] sm:$0xff]
    %v2776 = vld [vmem:[#allocation2 + $0x530] sm:$0xff]
    %v2777 = vld [vmem:[#allocation2 + $0x538] sm:$0xff]
    %v2778 = vld [vmem:[#allocation2 + $0x540] sm:$0xff]
    %v2779 = vld [vmem:[#allocation2 + $0x548] sm:$0xff]
    %v2780 = vld [vmem:[#allocation2 + $0x550] sm:$0xff]
    %v2781 = vld [vmem:[#allocation2 + $0x558] sm:$0xff]
    %v2782 = vld [vmem:[#allocation2 + $0x560] sm:$0xff]
    %v2783 = vld [vmem:[#allocation2 + $0x568] sm:$0xff]
    %v2784 = vld [vmem:[#allocation2 + $0x570] sm:$0xff]
    %v2785 = vld [vmem:[#allocation2 + $0x578] sm:$0xff]
    %v2786 = vld [vmem:[#allocation2 + $0x580] sm:$0xff]
    %v2787 = vld [vmem:[#allocation2 + $0x588] sm:$0xff]
    %v2788 = vld [vmem:[#allocation2 + $0x590] sm:$0xff]
    %v2789 = vld [vmem:[#allocation2 + $0x598] sm:$0xff]
    %v2790 = vld [vmem:[#allocation2 + $0x5a0] sm:$0xff]
    %v2791 = vld [vmem:[#allocation2 + $0x5a8] sm:$0xff]
    %v2792 = vld [vmem:[#allocation2 + $0x5b0] sm:$0xff]
    %v2793 = vld [vmem:[#allocation2 + $0x5b8] sm:$0xff]
    %v2794 = vld [vmem:[#allocation2 + $0x5c0] sm:$0xff]
    %v2795 = vld [vmem:[#allocation2 + $0x5c8] sm:$0xff]
    %v2796 = vld [vmem:[#allocation2 + $0x5d0] sm:$0xff]
    %v2797 = vld [vmem:[#allocation2 + $0x5d8] sm:$0xff]
    %v2798 = vld [vmem:[#allocation2 + $0x5e0] sm:$0xff]
    %v2799 = vld [vmem:[#allocation2 + $0x5e8] sm:$0xff]
    %v2800 = vld [vmem:[#allocation2 + $0x5f0] sm:$0xff]
    %v2801 = vld [vmem:[#allocation2 + $0x5f8] sm:$0xff]
    %v2802 = vld [vmem:[#allocation2 + $0x600] sm:$0xff]
    %v2803 = vld [vmem:[#allocation2 + $0x608] sm:$0xff]
    %v2804 = vld [vmem:[#allocation2 + $0x610] sm:$0xff]
    %v2805 = vld [vmem:[#allocation2 + $0x618] sm:$0xff]
    %v2806 = vld [vmem:[#allocation2 + $0x620] sm:$0xff]
    %v2807 = vld [vmem:[#allocation2 + $0x628] sm:$0xff]
    %v2808 = vld [vmem:[#allocation2 + $0x630] sm:$0xff]
    %v2809 = vld [vmem:[#allocation2 + $0x638] sm:$0xff]
    %v2810 = vld [vmem:[#allocation2 + $0x640] sm:$0xff]
    %v2811 = vld [vmem:[#allocation2 + $0x648] sm:$0xff]
    %v2812 = vld [vmem:[#allocation2 + $0x650] sm:$0xff]
    %v2813 = vld [vmem:[#allocation2 + $0x658] sm:$0xff]
    %v2814 = vld [vmem:[#allocation2 + $0x660] sm:$0xff]
    %v2815 = vld [vmem:[#allocation2 + $0x668] sm:$0xff]
    %v2816 = vld [vmem:[#allocation2 + $0x670] sm:$0xff]
    %v2817 = vld [vmem:[#allocation2 + $0x678] sm:$0xff]
    %v2818 = vld [vmem:[#allocation2 + $0x680] sm:$0xff]
    %v2819 = vld [vmem:[#allocation2 + $0x688] sm:$0xff]
    %v2820 = vld [vmem:[#allocation2 + $0x690] sm:$0xff]
    %v2821 = vld [vmem:[#allocation2 + $0x698] sm:$0xff]
    %v2822 = vld [vmem:[#allocation2 + $0x6a0] sm:$0xff]
    %v2823 = vld [vmem:[#allocation2 + $0x6a8] sm:$0xff]
    %v2824 = vld [vmem:[#allocation2 + $0x6b0] sm:$0xff]
    %v2825 = vld [vmem:[#allocation2 + $0x6b8] sm:$0xff]
    %v2826 = vld [vmem:[#allocation2 + $0x6c0] sm:$0xff]
    %v2827 = vld [vmem:[#allocation2 + $0x6c8] sm:$0xff]
    %v2828 = vld [vmem:[#allocation2 + $0x6d0] sm:$0xff]
    %v2829 = vld [vmem:[#allocation2 + $0x6d8] sm:$0xff]
    %v2830 = vld [vmem:[#allocation2 + $0x6e0] sm:$0xff]
    %v2831 = vld [vmem:[#allocation2 + $0x6e8] sm:$0xff]
    %v2832 = vld [vmem:[#allocation2 + $0x6f0] sm:$0xff]
    %v2833 = vld [vmem:[#allocation2 + $0x6f8] sm:$0xff]
    %v2834 = vld [vmem:[#allocation2 + $0x700] sm:$0xff]
    %v2835 = vld [vmem:[#allocation2 + $0x708] sm:$0xff]
    %v2836 = vld [vmem:[#allocation2 + $0x710] sm:$0xff]
    %v2837 = vld [vmem:[#allocation2 + $0x718] sm:$0xff]
    %v2838 = vld [vmem:[#allocation2 + $0x720] sm:$0xff]
    %v2839 = vld [vmem:[#allocation2 + $0x728] sm:$0xff]
    %v2840 = vld [vmem:[#allocation2 + $0x730] sm:$0xff]
    %v2841 = vld [vmem:[#allocation2 + $0x738] sm:$0xff]
    %v2842 = vld [vmem:[#allocation2 + $0x740] sm:$0xff]
    %v2843 = vld [vmem:[#allocation2 + $0x748] sm:$0xff]
    %v2844 = vld [vmem:[#allocation2 + $0x750] sm:$0xff]
    %v2845 = vld [vmem:[#allocation2 + $0x758] sm:$0xff]
    %v2846 = vld [vmem:[#allocation2 + $0x760] sm:$0xff]
    %v2847 = vld [vmem:[#allocation2 + $0x768] sm:$0xff]
    %v2848 = vld [vmem:[#allocation2 + $0x770] sm:$0xff]
    %v2849 = vld [vmem:[#allocation2 + $0x778] sm:$0xff]
    %v2850 = vld [vmem:[#allocation2 + $0x780] sm:$0xff]
    %v2851 = vld [vmem:[#allocation2 + $0x788] sm:$0xff]
    %v2852 = vld [vmem:[#allocation2 + $0x790] sm:$0xff]
    %v2853 = vld [vmem:[#allocation2 + $0x798] sm:$0xff]
    %v2854 = vld [vmem:[#allocation2 + $0x7a0] sm:$0xff]
    %v2855 = vld [vmem:[#allocation2 + $0x7a8] sm:$0xff]
    %v2856 = vld [vmem:[#allocation2 + $0x7b0] sm:$0xff]
    %v2857 = vld [vmem:[#allocation2 + $0x7b8] sm:$0xff]
    %v2858 = vld [vmem:[#allocation2 + $0x7c0] sm:$0xff]
    %v2859 = vld [vmem:[#allocation2 + $0x7c8] sm:$0xff]
    %v2860 = vld [vmem:[#allocation2 + $0x7d0] sm:$0xff]
    %v2861 = vld [vmem:[#allocation2 + $0x7d8] sm:$0xff]
    %v2862 = vld [vmem:[#allocation2 + $0x7e0] sm:$0xff]
    %v2863 = vld [vmem:[#allocation2 + $0x7e8] sm:$0xff]
    %v2864 = vld [vmem:[#allocation2 + $0x7f0] sm:$0xff]
    %v2865 = vld [vmem:[#allocation2 + $0x7f8] sm:$0xff]
    %v2866 = vld [vmem:[#allocation2 + $0x800] sm:$0xff]
    %v2867 = vld [vmem:[#allocation2 + $0x808] sm:$0xff]
    %v2868 = vld [vmem:[#allocation2 + $0x810] sm:$0xff]
    %v2869 = vld [vmem:[#allocation2 + $0x818] sm:$0xff]
    %v2870 = vld [vmem:[#allocation2 + $0x820] sm:$0xff]
    %v2871 = vld [vmem:[#allocation2 + $0x828] sm:$0xff]
    %v2872 = vld [vmem:[#allocation2 + $0x830] sm:$0xff]
    %v2873 = vld [vmem:[#allocation2 + $0x838] sm:$0xff]
    %v2874 = vld [vmem:[#allocation2 + $0x840] sm:$0xff]
    %v2875 = vld [vmem:[#allocation2 + $0x848] sm:$0xff]
    %v2876 = vld [vmem:[#allocation2 + $0x850] sm:$0xff]
    %v2877 = vld [vmem:[#allocation2 + $0x858] sm:$0xff]
    %v2878 = vld [vmem:[#allocation2 + $0x860] sm:$0xff]
    %v2879 = vld [vmem:[#allocation2 + $0x868] sm:$0xff]
    %v2880 = vld [vmem:[#allocation2 + $0x870] sm:$0xff]
    %v2881 = vld [vmem:[#allocation2 + $0x878] sm:$0xff]
    %v2882 = vld [vmem:[#allocation2 + $0x880] sm:$0xff]
    %v2883 = vld [vmem:[#allocation2 + $0x888] sm:$0xff]
    %v2884 = vld [vmem:[#allocation2 + $0x890] sm:$0xff]
    %v2885 = vld [vmem:[#allocation2 + $0x898] sm:$0xff]
    %v2886 = vld [vmem:[#allocation2 + $0x8a0] sm:$0xff]
    %v2887 = vld [vmem:[#allocation2 + $0x8a8] sm:$0xff]
    %v2888 = vld [vmem:[#allocation2 + $0x8b0] sm:$0xff]
    %v2889 = vld [vmem:[#allocation2 + $0x8b8] sm:$0xff]
    %v2890 = vld [vmem:[#allocation2 + $0x8c0] sm:$0xff]
    %v2891 = vld [vmem:[#allocation2 + $0x8c8] sm:$0xff]
    %v2892 = vld [vmem:[#allocation2 + $0x8d0] sm:$0xff]
    %v2893 = vld [vmem:[#allocation2 + $0x8d8] sm:$0xff]
    %v2894 = vld [vmem:[#allocation2 + $0x8e0] sm:$0xff]
    %v2895 = vld [vmem:[#allocation2 + $0x8e8] sm:$0xff]
    %v2896 = vld [vmem:[#allocation2 + $0x8f0] sm:$0xff]
    %v2897 = vld [vmem:[#allocation2 + $0x8f8] sm:$0xff]
    %v2898 = vld [vmem:[#allocation2 + $0x900] sm:$0xff]
    %v2899 = vld [vmem:[#allocation2 + $0x908] sm:$0xff]
    %v2900 = vld [vmem:[#allocation2 + $0x910] sm:$0xff]
    %v2901 = vld [vmem:[#allocation2 + $0x918] sm:$0xff]
    %v2902 = vld [vmem:[#allocation2 + $0x920] sm:$0xff]
    %v2903 = vld [vmem:[#allocation2 + $0x928] sm:$0xff]
    %v2904 = vld [vmem:[#allocation2 + $0x930] sm:$0xff]
    %v2905 = vld [vmem:[#allocation2 + $0x938] sm:$0xff]
    %v2906 = vld [vmem:[#allocation2 + $0x940] sm:$0xff]
    %v2907 = vld [vmem:[#allocation2 + $0x948] sm:$0xff]
    %v2908 = vld [vmem:[#allocation2 + $0x950] sm:$0xff]
    %v2909 = vld [vmem:[#allocation2 + $0x958] sm:$0xff]
    %v2910 = vld [vmem:[#allocation2 + $0x960] sm:$0xff]
    %v2911 = vld [vmem:[#allocation2 + $0x968] sm:$0xff]
    %v2912 = vld [vmem:[#allocation2 + $0x970] sm:$0xff]
    %v2913 = vld [vmem:[#allocation2 + $0x978] sm:$0xff]
    %v2914 = vld [vmem:[#allocation2 + $0x980] sm:$0xff]
    %v2915 = vld [vmem:[#allocation2 + $0x988] sm:$0xff]
    %v2916 = vld [vmem:[#allocation2 + $0x990] sm:$0xff]
    %v2917 = vld [vmem:[#allocation2 + $0x998] sm:$0xff]
    %v2918 = vld [vmem:[#allocation2 + $0x9a0] sm:$0xff]
    %v2919 = vld [vmem:[#allocation2 + $0x9a8] sm:$0xff]
    %v2920 = vld [vmem:[#allocation2 + $0x9b0] sm:$0xff]
    %v2921 = vld [vmem:[#allocation2 + $0x9b8] sm:$0xff]
    %v2922 = vld [vmem:[#allocation2 + $0x9c0] sm:$0xff]
    %v2923 = vld [vmem:[#allocation2 + $0x9c8] sm:$0xff]
    %v2924 = vld [vmem:[#allocation2 + $0x9d0] sm:$0xff]
    %v2925 = vld [vmem:[#allocation2 + $0x9d8] sm:$0xff]
    %v2926 = vld [vmem:[#allocation2 + $0x9e0] sm:$0xff]
    %v2927 = vld [vmem:[#allocation2 + $0x9e8] sm:$0xff]
    %v2928 = vld [vmem:[#allocation2 + $0x9f0] sm:$0xff]
    %v2929 = vld [vmem:[#allocation2 + $0x9f8] sm:$0xff]
    %v2930 = vld [vmem:[#allocation2 + $0xa00] sm:$0xff]
    %v2931 = vld [vmem:[#allocation2 + $0xa08] sm:$0xff]
    %v2932 = vld [vmem:[#allocation2 + $0xa10] sm:$0xff]
    %v2933 = vld [vmem:[#allocation2 + $0xa18] sm:$0xff]
    %v2934 = vld [vmem:[#allocation2 + $0xa20] sm:$0xff]
    %v2935 = vld [vmem:[#allocation2 + $0xa28] sm:$0xff]
    %v2936 = vld [vmem:[#allocation2 + $0xa30] sm:$0xff]
    %v2937 = vld [vmem:[#allocation2 + $0xa38] sm:$0xff]
    %v2938 = vld [vmem:[#allocation2 + $0xa40] sm:$0xff]
    %v2939 = vld [vmem:[#allocation2 + $0xa48] sm:$0xff]
    %v2940 = vld [vmem:[#allocation2 + $0xa50] sm:$0xff]
    %v2941 = vld [vmem:[#allocation2 + $0xa58] sm:$0xff]
    %v2942 = vld [vmem:[#allocation2 + $0xa60] sm:$0xff]
    %v2943 = vld [vmem:[#allocation2 + $0xa68] sm:$0xff]
    %v2944 = vld [vmem:[#allocation2 + $0xa70] sm:$0xff]
    %v2945 = vld [vmem:[#allocation2 + $0xa78] sm:$0xff]
    %v2946 = vld [vmem:[#allocation2 + $0xa80] sm:$0xff]
    %v2947 = vld [vmem:[#allocation2 + $0xa88] sm:$0xff]
    %v2948 = vld [vmem:[#allocation2 + $0xa90] sm:$0xff]
    %v2949 = vld [vmem:[#allocation2 + $0xa98] sm:$0xff]
    %v2950 = vld [vmem:[%s3] sm:$0xff]
    %v2951 = vld [vmem:[%s3 + $0x10] sm:$0x3]
    %2953 = vset.pattern.permute.xlu0 52
    %2954 = vperm.xlu0 %2953, %v2950
    %v2955 = vpop.permute.xlu0 %2954
    %2958 = vset.pattern.permute.xlu0 52
    %2959 = vperm.xlu0 %2958, %v2951
    %v2960 = vpop.permute.xlu0 %2959
    %vm2962 = vcmask 326656
    %v2964 = vsel %vm2962, %v2603, 0
    %v2967 = vsel %vm2962, %v2609, 0
    %2969 = vmatpush.msra.mxu0 %v2670
    %2970 = vmatpush.msra.mxu0 %v2666
    %2971 = vmatpush.msra.mxu0 %v2662
    %2972 = vmatpush.msra.mxu0 %v2658
    %2973 = vmatpush.msra.mxu0 %v2654
    %2974 = vmatpush.msra.mxu0 %v2650
    %2975 = vmatpush.msra.mxu0 %v2646
    %2976 = vmatpush.msra.mxu0 %v2642
    %2977 = vmatpush.msra.mxu0 %v2638
    %2978 = vmatpush.msra.mxu0 %v2634
    %2979 = vmatpush.msra.mxu0 %v2630
    %2980 = vmatpush.msra.mxu0 %v2626
    %2981 = vmatpush.msra.mxu0 %v2622
    %2982 = vmatpush.msra.mxu0 %v2618
    %2983 = vmatpush.msra.mxu0 %v2614
    %2984 = vmatpush.msra.mxu0 %v2610
    %2985 = vmatmul.f32.gmra.mxu0 %v2598
    %v2986 = vpop.f32.mrf.mxu0
    %v2987 = vadd.f32 %v2955, %v2986
    %2988 = vmatmul.f32.gmra.mxu0 %v2604
    %v2989 = vpop.f32.mrf.mxu0
    %v2990 = vadd.f32 %v2960, %v2989
    %2991 = vdwg.mxu0
    %2992 = vmatpush.msra.mxu0 %v2734
    %2993 = vmatpush.msra.mxu0 %v2730
    %2994 = vmatpush.msra.mxu0 %v2726
    %2995 = vmatpush.msra.mxu0 %v2722
    %2996 = vmatpush.msra.mxu0 %v2718
    %2997 = vmatpush.msra.mxu0 %v2714
    %2998 = vmatpush.msra.mxu0 %v2710
    %2999 = vmatpush.msra.mxu0 %v2706
    %3000 = vmatpush.msra.mxu0 %v2702
    %3001 = vmatpush.msra.mxu0 %v2698
    %3002 = vmatpush.msra.mxu0 %v2694
    %3003 = vmatpush.msra.mxu0 %v2690
    %3004 = vmatpush.msra.mxu0 %v2686
    %3005 = vmatpush.msra.mxu0 %v2682
    %3006 = vmatpush.msra.mxu0 %v2678
    %3007 = vmatpush.msra.mxu0 %v2674
    %3008 = vmatmul.f32.gmra.mxu0 %v2599
    %v3009 = vpop.f32.mrf.mxu0
    %v3010 = vadd.f32 %v2987, %v3009
    %3011 = vmatmul.f32.gmra.mxu0 %v2605
    %v3012 = vpop.f32.mrf.mxu0
    %v3013 = vadd.f32 %v2990, %v3012
    %3014 = vdwg.mxu0
    %3015 = vmatpush.msra.mxu0 %v2798
    %3016 = vmatpush.msra.mxu0 %v2794
    %3017 = vmatpush.msra.mxu0 %v2790
    %3018 = vmatpush.msra.mxu0 %v2786
    %3019 = vmatpush.msra.mxu0 %v2782
    %3020 = vmatpush.msra.mxu0 %v2778
    %3021 = vmatpush.msra.mxu0 %v2774
    %3022 = vmatpush.msra.mxu0 %v2770
    %3023 = vmatpush.msra.mxu0 %v2766
    %3024 = vmatpush.msra.mxu0 %v2762
    %3025 = vmatpush.msra.mxu0 %v2758
    %3026 = vmatpush.msra.mxu0 %v2754
    %3027 = vmatpush.msra.mxu0 %v2750
    %3028 = vmatpush.msra.mxu0 %v2746
    %3029 = vmatpush.msra.mxu0 %v2742
    %3030 = vmatpush.msra.mxu0 %v2738
    %3031 = vmatmul.f32.gmra.mxu0 %v2600
    %v3032 = vpop.f32.mrf.mxu0
    %v3033 = vadd.f32 %v3010, %v3032
    %3034 = vmatmul.f32.gmra.mxu0 %v2606
    %v3035 = vpop.f32.mrf.mxu0
    %v3036 = vadd.f32 %v3013, %v3035
    %3037 = vdwg.mxu0
    %3038 = vmatpush.msra.mxu0 %v2862
    %3039 = vmatpush.msra.mxu0 %v2858
    %3040 = vmatpush.msra.mxu0 %v2854
    %3041 = vmatpush.msra.mxu0 %v2850
    %3042 = vmatpush.msra.mxu0 %v2846
    %3043 = vmatpush.msra.mxu0 %v2842
    %3044 = vmatpush.msra.mxu0 %v2838
    %3045 = vmatpush.msra.mxu0 %v2834
    %3046 = vmatpush.msra.mxu0 %v2830
    %3047 = vmatpush.msra.mxu0 %v2826
    %3048 = vmatpush.msra.mxu0 %v2822
    %3049 = vmatpush.msra.mxu0 %v2818
    %3050 = vmatpush.msra.mxu0 %v2814
    %3051 = vmatpush.msra.mxu0 %v2810
    %3052 = vmatpush.msra.mxu0 %v2806
    %3053 = vmatpush.msra.mxu0 %v2802
    %3054 = vmatmul.f32.gmra.mxu0 %v2601
    %v3055 = vpop.f32.mrf.mxu0
    %v3056 = vadd.f32 %v3033, %v3055
    %3057 = vmatmul.f32.gmra.mxu0 %v2607
    %v3058 = vpop.f32.mrf.mxu0
    %v3059 = vadd.f32 %v3036, %v3058
    %3060 = vdwg.mxu0
    %3061 = vmatpush.msra.mxu0 %v2926
    %3062 = vmatpush.msra.mxu0 %v2922
    %3063 = vmatpush.msra.mxu0 %v2918
    %3064 = vmatpush.msra.mxu0 %v2914
    %3065 = vmatpush.msra.mxu0 %v2910
    %3066 = vmatpush.msra.mxu0 %v2906
    %3067 = vmatpush.msra.mxu0 %v2902
    %3068 = vmatpush.msra.mxu0 %v2898
    %3069 = vmatpush.msra.mxu0 %v2894
    %3070 = vmatpush.msra.mxu0 %v2890
    %3071 = vmatpush.msra.mxu0 %v2886
    %3072 = vmatpush.msra.mxu0 %v2882
    %3073 = vmatpush.msra.mxu0 %v2878
    %3074 = vmatpush.msra.mxu0 %v2874
    %3075 = vmatpush.msra.mxu0 %v2870
    %3076 = vmatpush.msra.mxu0 %v2866
    %3077 = vmatmul.f32.gmra.mxu0 %v2602
    %v3078 = vpop.f32.mrf.mxu0
    %v3079 = vadd.f32 %v3056, %v3078
    %3080 = vmatmul.f32.gmra.mxu0 %v2608
    %v3081 = vpop.f32.mrf.mxu0
    %v3082 = vadd.f32 %v3059, %v3081
    %3083 = vdwg.mxu0
    %3084 = vmatpush.msra.mxu0 0.0
    %3085 = vmatpush.msra.mxu0 0.0
    %3086 = vmatpush.msra.mxu0 0.0
    %3087 = vmatpush.msra.mxu0 0.0
    %3088 = vmatpush.msra.mxu0 0.0
    %3089 = vmatpush.msra.mxu0 0.0
    %3090 = vmatpush.msra.mxu0 0.0
    %3091 = vmatpush.msra.mxu0 0.0
    %3092 = vmatpush.msra.mxu0 0.0
    %3093 = vmatpush.msra.mxu0 0.0
    %3094 = vmatpush.msra.mxu0 0.0
    %3095 = vmatpush.msra.mxu0 %v2946
    %3096 = vmatpush.msra.mxu0 %v2942
    %3097 = vmatpush.msra.mxu0 %v2938
    %3098 = vmatpush.msra.mxu0 %v2934
    %3099 = vmatpush.msra.mxu0 %v2930
    %3100 = vmatmul.f32.gmra.mxu0 %v2964
    %v3101 = vpop.f32.mrf.mxu0
    %v3102 = vadd.f32 %v3079, %v3101
    %3103 = vmatmul.f32.gmra.mxu0 %v2967
    %v3104 = vpop.f32.mrf.mxu0
    %v3105 = vadd.f32 %v3082, %v3104
    %3106 = vdwg.mxu0
    %3107 = vmatpush.msra.mxu0 %v2671
    %3108 = vmatpush.msra.mxu0 %v2667
    %3109 = vmatpush.msra.mxu0 %v2663
    %3110 = vmatpush.msra.mxu0 %v2659
    %3111 = vmatpush.msra.mxu0 %v2655
    %3112 = vmatpush.msra.mxu0 %v2651
    %3113 = vmatpush.msra.mxu0 %v2647
    %3114 = vmatpush.msra.mxu0 %v2643
    %3115 = vmatpush.msra.mxu0 %v2639
    %3116 = vmatpush.msra.mxu0 %v2635
    %3117 = vmatpush.msra.mxu0 %v2631
    %3118 = vmatpush.msra.mxu0 %v2627
    %3119 = vmatpush.msra.mxu0 %v2623
    %3120 = vmatpush.msra.mxu0 %v2619
    %3121 = vmatpush.msra.mxu0 %v2615
    %3122 = vmatpush.msra.mxu0 %v2611
    %3123 = vmatmul.f32.gmra.mxu0 %v2598
    %v3124 = vpop.f32.mrf.mxu0
    %v3125 = vadd.f32 %v2955, %v3124
    %3126 = vmatmul.f32.gmra.mxu0 %v2604
    %v3127 = vpop.f32.mrf.mxu0
    %v3128 = vadd.f32 %v2960, %v3127
    %3129 = vdwg.mxu0
    %3130 = vmatpush.msra.mxu0 %v2735
    %3131 = vmatpush.msra.mxu0 %v2731
    %3132 = vmatpush.msra.mxu0 %v2727
    %3133 = vmatpush.msra.mxu0 %v2723
    %3134 = vmatpush.msra.mxu0 %v2719
    %3135 = vmatpush.msra.mxu0 %v2715
    %3136 = vmatpush.msra.mxu0 %v2711
    %3137 = vmatpush.msra.mxu0 %v2707
    %3138 = vmatpush.msra.mxu0 %v2703
    %3139 = vmatpush.msra.mxu0 %v2699
    %3140 = vmatpush.msra.mxu0 %v2695
    %3141 = vmatpush.msra.mxu0 %v2691
    %3142 = vmatpush.msra.mxu0 %v2687
    %3143 = vmatpush.msra.mxu0 %v2683
    %3144 = vmatpush.msra.mxu0 %v2679
    %3145 = vmatpush.msra.mxu0 %v2675
    %3146 = vmatmul.f32.gmra.mxu0 %v2599
    %v3147 = vpop.f32.mrf.mxu0
    %v3148 = vadd.f32 %v3125, %v3147
    %3149 = vmatmul.f32.gmra.mxu0 %v2605
    %v3150 = vpop.f32.mrf.mxu0
    %v3151 = vadd.f32 %v3128, %v3150
    %3152 = vdwg.mxu0
    %3153 = vmatpush.msra.mxu0 %v2799
    %3154 = vmatpush.msra.mxu0 %v2795
    %3155 = vmatpush.msra.mxu0 %v2791
    %3156 = vmatpush.msra.mxu0 %v2787
    %3157 = vmatpush.msra.mxu0 %v2783
    %3158 = vmatpush.msra.mxu0 %v2779
    %3159 = vmatpush.msra.mxu0 %v2775
    %3160 = vmatpush.msra.mxu0 %v2771
    %3161 = vmatpush.msra.mxu0 %v2767
    %3162 = vmatpush.msra.mxu0 %v2763
    %3163 = vmatpush.msra.mxu0 %v2759
    %3164 = vmatpush.msra.mxu0 %v2755
    %3165 = vmatpush.msra.mxu0 %v2751
    %3166 = vmatpush.msra.mxu0 %v2747
    %3167 = vmatpush.msra.mxu0 %v2743
    %3168 = vmatpush.msra.mxu0 %v2739
    %3169 = vmatmul.f32.gmra.mxu0 %v2600
    %v3170 = vpop.f32.mrf.mxu0
    %v3171 = vadd.f32 %v3148, %v3170
    %3172 = vmatmul.f32.gmra.mxu0 %v2606
    %v3173 = vpop.f32.mrf.mxu0
    %v3174 = vadd.f32 %v3151, %v3173
    %3175 = vdwg.mxu0
    %3176 = vmatpush.msra.mxu0 %v2863
    %3177 = vmatpush.msra.mxu0 %v2859
    %3178 = vmatpush.msra.mxu0 %v2855
    %3179 = vmatpush.msra.mxu0 %v2851
    %3180 = vmatpush.msra.mxu0 %v2847
    %3181 = vmatpush.msra.mxu0 %v2843
    %3182 = vmatpush.msra.mxu0 %v2839
    %3183 = vmatpush.msra.mxu0 %v2835
    %3184 = vmatpush.msra.mxu0 %v2831
    %3185 = vmatpush.msra.mxu0 %v2827
    %3186 = vmatpush.msra.mxu0 %v2823
    %3187 = vmatpush.msra.mxu0 %v2819
    %3188 = vmatpush.msra.mxu0 %v2815
    %3189 = vmatpush.msra.mxu0 %v2811
    %3190 = vmatpush.msra.mxu0 %v2807
    %3191 = vmatpush.msra.mxu0 %v2803
    %3192 = vmatmul.f32.gmra.mxu0 %v2601
    %v3193 = vpop.f32.mrf.mxu0
    %v3194 = vadd.f32 %v3171, %v3193
    %3195 = vmatmul.f32.gmra.mxu0 %v2607
    %v3196 = vpop.f32.mrf.mxu0
    %v3197 = vadd.f32 %v3174, %v3196
    %3198 = vdwg.mxu0
    %3199 = vmatpush.msra.mxu0 %v2927
    %3200 = vmatpush.msra.mxu0 %v2923
    %3201 = vmatpush.msra.mxu0 %v2919
    %3202 = vmatpush.msra.mxu0 %v2915
    %3203 = vmatpush.msra.mxu0 %v2911
    %3204 = vmatpush.msra.mxu0 %v2907
    %3205 = vmatpush.msra.mxu0 %v2903
    %3206 = vmatpush.msra.mxu0 %v2899
    %3207 = vmatpush.msra.mxu0 %v2895
    %3208 = vmatpush.msra.mxu0 %v2891
    %3209 = vmatpush.msra.mxu0 %v2887
    %3210 = vmatpush.msra.mxu0 %v2883
    %3211 = vmatpush.msra.mxu0 %v2879
    %3212 = vmatpush.msra.mxu0 %v2875
    %3213 = vmatpush.msra.mxu0 %v2871
    %3214 = vmatpush.msra.mxu0 %v2867
    %3215 = vmatmul.f32.gmra.mxu0 %v2602
    %v3216 = vpop.f32.mrf.mxu0
    %v3217 = vadd.f32 %v3194, %v3216
    %3218 = vmatmul.f32.gmra.mxu0 %v2608
    %v3219 = vpop.f32.mrf.mxu0
    %v3220 = vadd.f32 %v3197, %v3219
    %3221 = vdwg.mxu0
    %3222 = vmatpush.msra.mxu0 0.0
    %3223 = vmatpush.msra.mxu0 0.0
    %3224 = vmatpush.msra.mxu0 0.0
    %3225 = vmatpush.msra.mxu0 0.0
    %3226 = vmatpush.msra.mxu0 0.0
    %3227 = vmatpush.msra.mxu0 0.0
    %3228 = vmatpush.msra.mxu0 0.0
    %3229 = vmatpush.msra.mxu0 0.0
    %3230 = vmatpush.msra.mxu0 0.0
    %3231 = vmatpush.msra.mxu0 0.0
    %3232 = vmatpush.msra.mxu0 0.0
    %3233 = vmatpush.msra.mxu0 %v2947
    %3234 = vmatpush.msra.mxu0 %v2943
    %3235 = vmatpush.msra.mxu0 %v2939
    %3236 = vmatpush.msra.mxu0 %v2935
    %3237 = vmatpush.msra.mxu0 %v2931
    %3238 = vmatmul.f32.gmra.mxu0 %v2964
    %v3239 = vpop.f32.mrf.mxu0
    %v3240 = vadd.f32 %v3217, %v3239
    %3241 = vmatmul.f32.gmra.mxu0 %v2967
    %v3242 = vpop.f32.mrf.mxu0
    %v3243 = vadd.f32 %v3220, %v3242
    %3244 = vdwg.mxu0
    %3245 = vmatpush.msra.mxu0 %v2672
    %3246 = vmatpush.msra.mxu0 %v2668
    %3247 = vmatpush.msra.mxu0 %v2664
    %3248 = vmatpush.msra.mxu0 %v2660
    %3249 = vmatpush.msra.mxu0 %v2656
    %3250 = vmatpush.msra.mxu0 %v2652
    %3251 = vmatpush.msra.mxu0 %v2648
    %3252 = vmatpush.msra.mxu0 %v2644
    %3253 = vmatpush.msra.mxu0 %v2640
    %3254 = vmatpush.msra.mxu0 %v2636
    %3255 = vmatpush.msra.mxu0 %v2632
    %3256 = vmatpush.msra.mxu0 %v2628
    %3257 = vmatpush.msra.mxu0 %v2624
    %3258 = vmatpush.msra.mxu0 %v2620
    %3259 = vmatpush.msra.mxu0 %v2616
    %3260 = vmatpush.msra.mxu0 %v2612
    %3261 = vmatmul.f32.gmra.mxu0 %v2598
    %v3262 = vpop.f32.mrf.mxu0
    %v3263 = vadd.f32 %v2955, %v3262
    %3264 = vmatmul.f32.gmra.mxu0 %v2604
    %v3265 = vpop.f32.mrf.mxu0
    %v3266 = vadd.f32 %v2960, %v3265
    %3267 = vdwg.mxu0
    %3268 = vmatpush.msra.mxu0 %v2736
    %3269 = vmatpush.msra.mxu0 %v2732
    %3270 = vmatpush.msra.mxu0 %v2728
    %3271 = vmatpush.msra.mxu0 %v2724
    %3272 = vmatpush.msra.mxu0 %v2720
    %3273 = vmatpush.msra.mxu0 %v2716
    %3274 = vmatpush.msra.mxu0 %v2712
    %3275 = vmatpush.msra.mxu0 %v2708
    %3276 = vmatpush.msra.mxu0 %v2704
    %3277 = vmatpush.msra.mxu0 %v2700
    %3278 = vmatpush.msra.mxu0 %v2696
    %3279 = vmatpush.msra.mxu0 %v2692
    %3280 = vmatpush.msra.mxu0 %v2688
    %3281 = vmatpush.msra.mxu0 %v2684
    %3282 = vmatpush.msra.mxu0 %v2680
    %3283 = vmatpush.msra.mxu0 %v2676
    %3284 = vmatmul.f32.gmra.mxu0 %v2599
    %v3285 = vpop.f32.mrf.mxu0
    %v3286 = vadd.f32 %v3263, %v3285
    %3287 = vmatmul.f32.gmra.mxu0 %v2605
    %v3288 = vpop.f32.mrf.mxu0
    %v3289 = vadd.f32 %v3266, %v3288
    %3290 = vdwg.mxu0
    %3291 = vmatpush.msra.mxu0 %v2800
    %3292 = vmatpush.msra.mxu0 %v2796
    %3293 = vmatpush.msra.mxu0 %v2792
    %3294 = vmatpush.msra.mxu0 %v2788
    %3295 = vmatpush.msra.mxu0 %v2784
    %3296 = vmatpush.msra.mxu0 %v2780
    %3297 = vmatpush.msra.mxu0 %v2776
    %3298 = vmatpush.msra.mxu0 %v2772
    %3299 = vmatpush.msra.mxu0 %v2768
    %3300 = vmatpush.msra.mxu0 %v2764
    %3301 = vmatpush.msra.mxu0 %v2760
    %3302 = vmatpush.msra.mxu0 %v2756
    %3303 = vmatpush.msra.mxu0 %v2752
    %3304 = vmatpush.msra.mxu0 %v2748
    %3305 = vmatpush.msra.mxu0 %v2744
    %3306 = vmatpush.msra.mxu0 %v2740
    %3307 = vmatmul.f32.gmra.mxu0 %v2600
    %v3308 = vpop.f32.mrf.mxu0
    %v3309 = vadd.f32 %v3286, %v3308
    %3310 = vmatmul.f32.gmra.mxu0 %v2606
    %v3311 = vpop.f32.mrf.mxu0
    %v3312 = vadd.f32 %v3289, %v3311
    %3313 = vdwg.mxu0
    %3314 = vmatpush.msra.mxu0 %v2864
    %3315 = vmatpush.msra.mxu0 %v2860
    %3316 = vmatpush.msra.mxu0 %v2856
    %3317 = vmatpush.msra.mxu0 %v2852
    %3318 = vmatpush.msra.mxu0 %v2848
    %3319 = vmatpush.msra.mxu0 %v2844
    %3320 = vmatpush.msra.mxu0 %v2840
    %3321 = vmatpush.msra.mxu0 %v2836
    %3322 = vmatpush.msra.mxu0 %v2832
    %3323 = vmatpush.msra.mxu0 %v2828
    %3324 = vmatpush.msra.mxu0 %v2824
    %3325 = vmatpush.msra.mxu0 %v2820
    %3326 = vmatpush.msra.mxu0 %v2816
    %3327 = vmatpush.msra.mxu0 %v2812
    %3328 = vmatpush.msra.mxu0 %v2808
    %3329 = vmatpush.msra.mxu0 %v2804
    %3330 = vmatmul.f32.gmra.mxu0 %v2601
    %v3331 = vpop.f32.mrf.mxu0
    %v3332 = vadd.f32 %v3309, %v3331
    %3333 = vmatmul.f32.gmra.mxu0 %v2607
    %v3334 = vpop.f32.mrf.mxu0
    %v3335 = vadd.f32 %v3312, %v3334
    %3336 = vdwg.mxu0
    %3337 = vmatpush.msra.mxu0 %v2928
    %3338 = vmatpush.msra.mxu0 %v2924
    %3339 = vmatpush.msra.mxu0 %v2920
    %3340 = vmatpush.msra.mxu0 %v2916
    %3341 = vmatpush.msra.mxu0 %v2912
    %3342 = vmatpush.msra.mxu0 %v2908
    %3343 = vmatpush.msra.mxu0 %v2904
    %3344 = vmatpush.msra.mxu0 %v2900
    %3345 = vmatpush.msra.mxu0 %v2896
    %3346 = vmatpush.msra.mxu0 %v2892
    %3347 = vmatpush.msra.mxu0 %v2888
    %3348 = vmatpush.msra.mxu0 %v2884
    %3349 = vmatpush.msra.mxu0 %v2880
    %3350 = vmatpush.msra.mxu0 %v2876
    %3351 = vmatpush.msra.mxu0 %v2872
    %3352 = vmatpush.msra.mxu0 %v2868
    %3353 = vmatmul.f32.gmra.mxu0 %v2602
    %v3354 = vpop.f32.mrf.mxu0
    %v3355 = vadd.f32 %v3332, %v3354
    %3356 = vmatmul.f32.gmra.mxu0 %v2608
    %v3357 = vpop.f32.mrf.mxu0
    %v3358 = vadd.f32 %v3335, %v3357
    %3359 = vdwg.mxu0
    %3360 = vmatpush.msra.mxu0 0.0
    %3361 = vmatpush.msra.mxu0 0.0
    %3362 = vmatpush.msra.mxu0 0.0
    %3363 = vmatpush.msra.mxu0 0.0
    %3364 = vmatpush.msra.mxu0 0.0
    %3365 = vmatpush.msra.mxu0 0.0
    %3366 = vmatpush.msra.mxu0 0.0
    %3367 = vmatpush.msra.mxu0 0.0
    %3368 = vmatpush.msra.mxu0 0.0
    %3369 = vmatpush.msra.mxu0 0.0
    %3370 = vmatpush.msra.mxu0 0.0
    %3371 = vmatpush.msra.mxu0 %v2948
    %3372 = vmatpush.msra.mxu0 %v2944
    %3373 = vmatpush.msra.mxu0 %v2940
    %3374 = vmatpush.msra.mxu0 %v2936
    %3375 = vmatpush.msra.mxu0 %v2932
    %3376 = vmatmul.f32.gmra.mxu0 %v2964
    %v3377 = vpop.f32.mrf.mxu0
    %v3378 = vadd.f32 %v3355, %v3377
    %3379 = vmatmul.f32.gmra.mxu0 %v2967
    %v3380 = vpop.f32.mrf.mxu0
    %v3381 = vadd.f32 %v3358, %v3380
    %3382 = vdwg.mxu0
    %3383 = vmatpush.msra.mxu0 %v2673
    %3384 = vmatpush.msra.mxu0 %v2669
    %3385 = vmatpush.msra.mxu0 %v2665
    %3386 = vmatpush.msra.mxu0 %v2661
    %3387 = vmatpush.msra.mxu0 %v2657
    %3388 = vmatpush.msra.mxu0 %v2653
    %3389 = vmatpush.msra.mxu0 %v2649
    %3390 = vmatpush.msra.mxu0 %v2645
    %3391 = vmatpush.msra.mxu0 %v2641
    %3392 = vmatpush.msra.mxu0 %v2637
    %3393 = vmatpush.msra.mxu0 %v2633
    %3394 = vmatpush.msra.mxu0 %v2629
    %3395 = vmatpush.msra.mxu0 %v2625
    %3396 = vmatpush.msra.mxu0 %v2621
    %3397 = vmatpush.msra.mxu0 %v2617
    %3398 = vmatpush.msra.mxu0 %v2613
    %3399 = vmatmul.f32.gmra.mxu0 %v2598
    %v3400 = vpop.f32.mrf.mxu0
    %v3401 = vadd.f32 %v2955, %v3400
    %3402 = vmatmul.f32.gmra.mxu0 %v2604
    %v3403 = vpop.f32.mrf.mxu0
    %v3404 = vadd.f32 %v2960, %v3403
    %3405 = vdwg.mxu0
    %3406 = vmatpush.msra.mxu0 %v2737
    %3407 = vmatpush.msra.mxu0 %v2733
    %3408 = vmatpush.msra.mxu0 %v2729
    %3409 = vmatpush.msra.mxu0 %v2725
    %3410 = vmatpush.msra.mxu0 %v2721
    %3411 = vmatpush.msra.mxu0 %v2717
    %3412 = vmatpush.msra.mxu0 %v2713
    %3413 = vmatpush.msra.mxu0 %v2709
    %3414 = vmatpush.msra.mxu0 %v2705
    %3415 = vmatpush.msra.mxu0 %v2701
    %3416 = vmatpush.msra.mxu0 %v2697
    %3417 = vmatpush.msra.mxu0 %v2693
    %3418 = vmatpush.msra.mxu0 %v2689
    %3419 = vmatpush.msra.mxu0 %v2685
    %3420 = vmatpush.msra.mxu0 %v2681
    %3421 = vmatpush.msra.mxu0 %v2677
    %3422 = vmatmul.f32.gmra.mxu0 %v2599
    %v3423 = vpop.f32.mrf.mxu0
    %v3424 = vadd.f32 %v3401, %v3423
    %3425 = vmatmul.f32.gmra.mxu0 %v2605
    %v3426 = vpop.f32.mrf.mxu0
    %v3427 = vadd.f32 %v3404, %v3426
    %3428 = vdwg.mxu0
    %3429 = vmatpush.msra.mxu0 %v2801
    %3430 = vmatpush.msra.mxu0 %v2797
    %3431 = vmatpush.msra.mxu0 %v2793
    %3432 = vmatpush.msra.mxu0 %v2789
    %3433 = vmatpush.msra.mxu0 %v2785
    %3434 = vmatpush.msra.mxu0 %v2781
    %3435 = vmatpush.msra.mxu0 %v2777
    %3436 = vmatpush.msra.mxu0 %v2773
    %3437 = vmatpush.msra.mxu0 %v2769
    %3438 = vmatpush.msra.mxu0 %v2765
    %3439 = vmatpush.msra.mxu0 %v2761
    %3440 = vmatpush.msra.mxu0 %v2757
    %3441 = vmatpush.msra.mxu0 %v2753
    %3442 = vmatpush.msra.mxu0 %v2749
    %3443 = vmatpush.msra.mxu0 %v2745
    %3444 = vmatpush.msra.mxu0 %v2741
    %3445 = vmatmul.f32.gmra.mxu0 %v2600
    %v3446 = vpop.f32.mrf.mxu0
    %v3447 = vadd.f32 %v3424, %v3446
    %3448 = vmatmul.f32.gmra.mxu0 %v2606
    %v3449 = vpop.f32.mrf.mxu0
    %v3450 = vadd.f32 %v3427, %v3449
    %3451 = vdwg.mxu0
    %3452 = vmatpush.msra.mxu0 %v2865
    %3453 = vmatpush.msra.mxu0 %v2861
    %3454 = vmatpush.msra.mxu0 %v2857
    %3455 = vmatpush.msra.mxu0 %v2853
    %3456 = vmatpush.msra.mxu0 %v2849
    %3457 = vmatpush.msra.mxu0 %v2845
    %3458 = vmatpush.msra.mxu0 %v2841
    %3459 = vmatpush.msra.mxu0 %v2837
    %3460 = vmatpush.msra.mxu0 %v2833
    %3461 = vmatpush.msra.mxu0 %v2829
    %3462 = vmatpush.msra.mxu0 %v2825
    %3463 = vmatpush.msra.mxu0 %v2821
    %3464 = vmatpush.msra.mxu0 %v2817
    %3465 = vmatpush.msra.mxu0 %v2813
    %3466 = vmatpush.msra.mxu0 %v2809
    %3467 = vmatpush.msra.mxu0 %v2805
    %3468 = vmatmul.f32.gmra.mxu0 %v2601
    %v3469 = vpop.f32.mrf.mxu0
    %v3470 = vadd.f32 %v3447, %v3469
    %3471 = vmatmul.f32.gmra.mxu0 %v2607
    %v3472 = vpop.f32.mrf.mxu0
    %v3473 = vadd.f32 %v3450, %v3472
    %3474 = vdwg.mxu0
    %3475 = vmatpush.msra.mxu0 %v2929
    %3476 = vmatpush.msra.mxu0 %v2925
    %3477 = vmatpush.msra.mxu0 %v2921
    %3478 = vmatpush.msra.mxu0 %v2917
    %3479 = vmatpush.msra.mxu0 %v2913
    %3480 = vmatpush.msra.mxu0 %v2909
    %3481 = vmatpush.msra.mxu0 %v2905
    %3482 = vmatpush.msra.mxu0 %v2901
    %3483 = vmatpush.msra.mxu0 %v2897
    %3484 = vmatpush.msra.mxu0 %v2893
    %3485 = vmatpush.msra.mxu0 %v2889
    %3486 = vmatpush.msra.mxu0 %v2885
    %3487 = vmatpush.msra.mxu0 %v2881
    %3488 = vmatpush.msra.mxu0 %v2877
    %3489 = vmatpush.msra.mxu0 %v2873
    %3490 = vmatpush.msra.mxu0 %v2869
    %3491 = vmatmul.f32.gmra.mxu0 %v2602
    %v3492 = vpop.f32.mrf.mxu0
    %v3493 = vadd.f32 %v3470, %v3492
    %3494 = vmatmul.f32.gmra.mxu0 %v2608
    %v3495 = vpop.f32.mrf.mxu0
    %v3496 = vadd.f32 %v3473, %v3495
    %3497 = vdwg.mxu0
    %3498 = vmatpush.msra.mxu0 0.0
    %3499 = vmatpush.msra.mxu0 0.0
    %3500 = vmatpush.msra.mxu0 0.0
    %3501 = vmatpush.msra.mxu0 0.0
    %3502 = vmatpush.msra.mxu0 0.0
    %3503 = vmatpush.msra.mxu0 0.0
    %3504 = vmatpush.msra.mxu0 0.0
    %3505 = vmatpush.msra.mxu0 0.0
    %3506 = vmatpush.msra.mxu0 0.0
    %3507 = vmatpush.msra.mxu0 0.0
    %3508 = vmatpush.msra.mxu0 0.0
    %3509 = vmatpush.msra.mxu0 %v2949
    %3510 = vmatpush.msra.mxu0 %v2945
    %3511 = vmatpush.msra.mxu0 %v2941
    %3512 = vmatpush.msra.mxu0 %v2937
    %3513 = vmatpush.msra.mxu0 %v2933
    %3514 = vmatmul.f32.gmra.mxu0 %v2964
    %v3515 = vpop.f32.mrf.mxu0
    %v3516 = vadd.f32 %v3493, %v3515
    %3517 = vmatmul.f32.gmra.mxu0 %v2967
    %v3518 = vpop.f32.mrf.mxu0
    %v3519 = vadd.f32 %v3496, %v3518
    %3520 = vdwg.mxu0
    %v3521 = vmul.f32 %v3102, %v3102
    %v3522 = vmul.f32 %v3240, %v3240
    %v3523 = vmul.f32 %v3378, %v3378
    %v3524 = vmul.f32 %v3516, %v3516
    %v3525 = vmul.f32 %v3105, %v3105
    %v3526 = vmul.f32 %v3243, %v3243
    %v3527 = vmul.f32 %v3381, %v3381
    %v3528 = vmul.f32 %v3519, %v3519
    %v3529 = vld [vmem:[%s3] sm:$0xff]
    %v3530 = vld [vmem:[%s3 + $0x10] sm:$0xff]
    %v3531 = vld [vmem:[%s3 + $0x20] sm:$0xff]
    %v3532 = vld [vmem:[%s3 + $0x30] sm:$0xff]
    %v3533 = vld [vmem:[%s3 + $0x40] sm:$0xff]
    %v3534 = vld [vmem:[%s3 + $0x50] sm:$0xff]
    %v3535 = vld [vmem:[%s3 + $0x60] sm:$0xff]
    %v3536 = vld [vmem:[%s3 + $0x70] sm:$0xff]
    %v3537 = vld [vmem:[%s3 + $0x80] sm:$0xff]
    %v3538 = vld [vmem:[%s3 + $0x90] sm:$0xff]
    %v3539 = vld [vmem:[%s3 + $0xa0] sm:$0xff]
    %v3540 = vld [vmem:[%s3 + $0xb0] sm:$0xff]
    %v3541 = vld [vmem:[%s3 + $0xc0] sm:$0xff]
    %v3542 = vld [vmem:[%s3 + $0xd0] sm:$0xff]
    %v3543 = vld [vmem:[%s3 + $0xe0] sm:$0xff]
    %v3544 = vld [vmem:[%s3 + $0xf0] sm:$0xff]
    %v3545 = vld [vmem:[%s3 + $0x100] sm:$0xff]
    %v3546 = vld [vmem:[%s3 + $0x110] sm:$0xff]
    %v3547 = vld [vmem:[%s3 + $0x120] sm:$0xff]
    %v3548 = vld [vmem:[%s3 + $0x130] sm:$0xff]
    %v3549 = vld [vmem:[%s3 + $0x140] sm:$0xff]
    %v3550 = vld [vmem:[%s3 + $0x150] sm:$0xff]
    %v3551 = vld [vmem:[%s3 + $0x160] sm:$0xff]
    %v3552 = vld [vmem:[%s3 + $0x170] sm:$0xff]
    %v3553 = vld [vmem:[%s3 + $0x180] sm:$0xff]
    %v3554 = vld [vmem:[%s3 + $0x190] sm:$0xff]
    %v3555 = vld [vmem:[%s3 + $0x1a0] sm:$0x3]
    %v3556 = vld [vmem:[%s3 + $0x8] sm:$0xff]
    %v3557 = vld [vmem:[%s3 + $0x10] sm:$0x3]
    %v3558 = vld [vmem:[%s3 + $0x18] sm:$0x3]
    %v3559 = vld [vmem:[%s3 + $0x31] ss:$0 sm:$0xff]
    %v3560 = vld [vmem:[%s3 + $0x20] sm:$0xf0]
    %v3561 = vld [vmem:[%s3 + $0x30] sm:$0x1]
    %v3562 = vld [vmem:[%s3] sm:$0x1f]
    %v3563 = vld [vmem:[%s3 + $0x32] ss:$0 sm:$0xff]
    %v3565 = vsel %vm383, %v3522, 0
    %v3568 = vsel %vm383, %v3526, 0
    %vm3570 = vcmask 1041408
    %v3572 = vsel %vm3570, %v3555, 0
    %3574 = vmatpush.msra.mxu0 %v3544
    %3575 = vmatpush.msra.mxu0 %v3543
    %3576 = vmatpush.msra.mxu0 %v3542
    %3577 = vmatpush.msra.mxu0 %v3541
    %3578 = vmatpush.msra.mxu0 %v3540
    %3579 = vmatpush.msra.mxu0 %v3539
    %3580 = vmatpush.msra.mxu0 %v3538
    %3581 = vmatpush.msra.mxu0 %v3537
    %3582 = vmatpush.msra.mxu0 %v3536
    %3583 = vmatpush.msra.mxu0 %v3535
    %3584 = vmatpush.msra.mxu0 %v3534
    %3585 = vmatpush.msra.mxu0 %v3533
    %3586 = vmatpush.msra.mxu0 %v3532
    %3587 = vmatpush.msra.mxu0 %v3531
    %3588 = vmatpush.msra.mxu0 %v3530
    %3589 = vmatpush.msra.mxu0 %v3529
    %3590 = vmatmul.f32.gmra.mxu0 %v3521
    %v3591 = vpop.f32.mrf.mxu0
    %v3592 = vadd.f32 0.0, %v3591
    %3593 = vmatmul.f32.gmra.mxu0 %v3525
    %v3594 = vpop.f32.mrf.mxu0
    %v3595 = vadd.f32 0.0, %v3594
    %3596 = vdwg.mxu0
    %3597 = vmatpush.msra.mxu0 0.0
    %3598 = vmatpush.msra.mxu0 0.0
    %3599 = vmatpush.msra.mxu0 0.0
    %3600 = vmatpush.msra.mxu0 0.0
    %3601 = vmatpush.msra.mxu0 0.0
    %3602 = vmatpush.msra.mxu0 %v3572
    %3603 = vmatpush.msra.mxu0 %v3554
    %3604 = vmatpush.msra.mxu0 %v3553
    %3605 = vmatpush.msra.mxu0 %v3552
    %3606 = vmatpush.msra.mxu0 %v3551
    %3607 = vmatpush.msra.mxu0 %v3550
    %3608 = vmatpush.msra.mxu0 %v3549
    %3609 = vmatpush.msra.mxu0 %v3548
    %3610 = vmatpush.msra.mxu0 %v3547
    %3611 = vmatpush.msra.mxu0 %v3546
    %3612 = vmatpush.msra.mxu0 %v3545
    %3613 = vmatmul.f32.gmra.mxu0 %v3565
    %v3614 = vpop.f32.mrf.mxu0
    %v3615 = vadd.f32 %v3592, %v3614
    %3616 = vmatmul.f32.gmra.mxu0 %v3568
    %v3617 = vpop.f32.mrf.mxu0
    %v3618 = vadd.f32 %v3595, %v3617
    %3619 = vdwg.mxu0
    %v3620 = vmax.f32 %v3615, 1e-06
    %v3621 = vmax.f32 %v3618, 1e-06
    %v3622 = vlog2.pop %v3620
    %v3623 = vmul.f32 %v3622, 0.6931472
    %v3624 = vlog2.pop %v3621
    %v3625 = vmul.f32 %v3624, 0.6931472
    %3627 = vset.pattern.permute.xlu0 0
    %3628 = vperm.xlu0 %3627, %v3623
    %v3629 = vpop.permute.xlu0 %3628
    %3632 = vset.pattern.permute.xlu0 0
    %3633 = vperm.xlu0 %3632, %v3625
    %v3634 = vpop.permute.xlu0 %3633
    %v3636 = vmul.f32 %v3629, %v3529
    %v3637 = vmul.f32 %v3634, %v3557
    %3638 = vset.pattern.permute.xlu0 1
    %3639 = vperm.xlu0 %3638, %v3623
    %v3640 = vpop.permute.xlu0 %3639
    %3642 = vset.pattern.permute.xlu0 1
    %3643 = vperm.xlu0 %3642, %v3625
    %v3644 = vpop.permute.xlu0 %3643
    %v3646 = vmul.f32 %v3640, %v3529
    %v3647 = vmul.f32 %v3644, %v3557
    %3650 = vrot.lane.b32.xlu0 %v3646, 118
    %v3651 = vpop.permute.xlu0 %3650
    %3652 = vrot.lane.b32.xlu0 %v3647, 118
    %v3653 = vpop.permute.xlu0 %3652
    %v3656 = vadd.f32 %v3636, %v3651
    %v3657 = vadd.f32 %v3637, %v3653
    %3658 = vset.pattern.permute.xlu0 2
    %3659 = vperm.xlu0 %3658, %v3623
    %v3660 = vpop.permute.xlu0 %3659
    %3662 = vset.pattern.permute.xlu0 2
    %3663 = vperm.xlu0 %3662, %v3625
    %v3664 = vpop.permute.xlu0 %3663
    %v3666 = vmul.f32 %v3660, %v3529
    %v3667 = vmul.f32 %v3664, %v3557
    %3670 = vrot.lane.b32.xlu0 %v3666, 108
    %v3671 = vpop.permute.xlu0 %3670
    %3672 = vrot.lane.b32.xlu0 %v3667, 108
    %v3673 = vpop.permute.xlu0 %3672
    %v3676 = vadd.f32 %v3656, %v3671
    %v3677 = vadd.f32 %v3657, %v3673
    %3678 = vset.pattern.permute.xlu0 3
    %3679 = vperm.xlu0 %3678, %v3623
    %v3680 = vpop.permute.xlu0 %3679
    %3682 = vset.pattern.permute.xlu0 3
    %3683 = vperm.xlu0 %3682, %v3625
    %v3684 = vpop.permute.xlu0 %3683
    %v3686 = vmul.f32 %v3680, %v3529
    %v3687 = vmul.f32 %v3684, %v3557
    %3690 = vrot.lane.b32.xlu0 %v3686, 98
    %v3691 = vpop.permute.xlu0 %3690
    %3692 = vrot.lane.b32.xlu0 %v3687, 98
    %v3693 = vpop.permute.xlu0 %3692
    %v3696 = vadd.f32 %v3676, %v3691
    %v3697 = vadd.f32 %v3677, %v3693
    %3698 = vset.pattern.permute.xlu0 4
    %3699 = vperm.xlu0 %3698, %v3623
    %v3700 = vpop.permute.xlu0 %3699
    %3702 = vset.pattern.permute.xlu0 4
    %3703 = vperm.xlu0 %3702, %v3625
    %v3704 = vpop.permute.xlu0 %3703
    %v3706 = vmul.f32 %v3700, %v3529
    %v3707 = vmul.f32 %v3704, %v3557
    %3710 = vrot.lane.b32.xlu0 %v3706, 88
    %v3711 = vpop.permute.xlu0 %3710
    %3712 = vrot.lane.b32.xlu0 %v3707, 88
    %v3713 = vpop.permute.xlu0 %3712
    %v3716 = vadd.f32 %v3696, %v3711
    %v3717 = vadd.f32 %v3697, %v3713
    %3718 = vset.pattern.permute.xlu0 5
    %3719 = vperm.xlu0 %3718, %v3623
    %v3720 = vpop.permute.xlu0 %3719
    %3722 = vset.pattern.permute.xlu0 5
    %3723 = vperm.xlu0 %3722, %v3625
    %v3724 = vpop.permute.xlu0 %3723
    %v3726 = vmul.f32 %v3720, %v3529
    %v3727 = vmul.f32 %v3724, %v3557
    %3730 = vrot.lane.b32.xlu0 %v3726, 78
    %v3731 = vpop.permute.xlu0 %3730
    %3732 = vrot.lane.b32.xlu0 %v3727, 78
    %v3733 = vpop.permute.xlu0 %3732
    %v3736 = vadd.f32 %v3716, %v3731
    %v3737 = vadd.f32 %v3717, %v3733
    %3738 = vset.pattern.permute.xlu0 6
    %3739 = vperm.xlu0 %3738, %v3623
    %v3740 = vpop.permute.xlu0 %3739
    %3742 = vset.pattern.permute.xlu0 6
    %3743 = vperm.xlu0 %3742, %v3625
    %v3744 = vpop.permute.xlu0 %3743
    %v3746 = vmul.f32 %v3740, %v3529
    %v3747 = vmul.f32 %v3740, %v3556
    %v3748 = vmul.f32 %v3744, %v3557
    %v3749 = vmul.f32 %v3744, %v3558
    %3754 = vrot.lane.b32.xlu0 %v3746, 68
    %v3755 = vpop.permute.xlu0 %3754
    %3756 = vrot.lane.b32.xlu0 %v3747, 68
    %v3757 = vpop.permute.xlu0 %3756
    %3758 = vrot.lane.b32.xlu0 %v3748, 68
    %v3759 = vpop.permute.xlu0 %3758
    %3760 = vrot.lane.b32.xlu0 %v3749, 68
    %v3761 = vpop.permute.xlu0 %3760
    %vm3762 = vcmask 556032
    %v3763 = vsel %vm3762, %v3755, %v3757
    %v3764 = vsel %vm3762, %v3759, %v3761
    %v3767 = vadd.f32 %v3736, %v3763
    %v3768 = vadd.f32 %v3737, %v3764
    %3769 = vset.pattern.permute.xlu0 7
    %3770 = vperm.xlu0 %3769, %v3623
    %v3771 = vpop.permute.xlu0 %3770
    %3773 = vset.pattern.permute.xlu0 7
    %3774 = vperm.xlu0 %3773, %v3625
    %v3775 = vpop.permute.xlu0 %3774
    %v3777 = vmul.f32 %v3771, %v3556
    %v3778 = vmul.f32 %v3775, %v3558
    %3781 = vrot.lane.b32.xlu0 %v3777, 58
    %v3782 = vpop.permute.xlu0 %3781
    %3783 = vrot.lane.b32.xlu0 %v3778, 58
    %v3784 = vpop.permute.xlu0 %3783
    %v3787 = vadd.f32 %v3767, %v3782
    %v3788 = vadd.f32 %v3768, %v3784
    %3789 = vset.pattern.permute.xlu0 8
    %3790 = vperm.xlu0 %3789, %v3623
    %v3791 = vpop.permute.xlu0 %3790
    %3793 = vset.pattern.permute.xlu0 8
    %3794 = vperm.xlu0 %3793, %v3625
    %v3795 = vpop.permute.xlu0 %3794
    %v3797 = vmul.f32 %v3791, %v3556
    %v3798 = vmul.f32 %v3795, %v3558
    %3801 = vrot.lane.b32.xlu0 %v3797, 48
    %v3802 = vpop.permute.xlu0 %3801
    %3803 = vrot.lane.b32.xlu0 %v3798, 48
    %v3804 = vpop.permute.xlu0 %3803
    %v3807 = vadd.f32 %v3787, %v3802
    %v3808 = vadd.f32 %v3788, %v3804
    %3809 = vset.pattern.permute.xlu0 9
    %3810 = vperm.xlu0 %3809, %v3623
    %v3811 = vpop.permute.xlu0 %3810
    %3813 = vset.pattern.permute.xlu0 9
    %3814 = vperm.xlu0 %3813, %v3625
    %v3815 = vpop.permute.xlu0 %3814
    %v3817 = vmul.f32 %v3811, %v3556
    %v3818 = vmul.f32 %v3815, %v3558
    %3821 = vrot.lane.b32.xlu0 %v3817, 38
    %v3822 = vpop.permute.xlu0 %3821
    %3823 = vrot.lane.b32.xlu0 %v3818, 38
    %v3824 = vpop.permute.xlu0 %3823
    %v3827 = vadd.f32 %v3807, %v3822
    %v3828 = vadd.f32 %v3808, %v3824
    %vm3829 = vcmask 572896
    %v3830 = vsel %vm3829, %v3827, 0.0
    %vm3831 = vcmask 566752
    %v3832 = vsel %vm3831, %v3828, 0.0
    %v3833 = vadd.f32 %v3830, %v3832
    %v3834 = vrot.slane %v3833, 4
    %v3835 = vadd.f32 %v3833, %v3834
    %v3836 = vrot.slane %v3835, 2
    %v3837 = vadd.f32 %v3835, %v3836
    %v3838 = vrot.slane %v3837, 1
    %v3839 = vadd.f32 %v3837, %v3838
    %3841 = vrot.lane.b32.xlu0 %v3559, 50
    %v3842 = vpop.permute.xlu0 %3841
    %v3844 = vadd.f32 %v3839, %v3842
    %v3845 = vperm.slane %v3844, 0
    %3847 = vrot.lane.b32.xlu0 %v3845, 78
    %v3848 = vpop.permute.xlu0 %3847
    %v3850 = vmul.f32 %v3560, %v3848
    %v3851 = vmul.f32 %v3561, %v3848
    %3854 = vrot.lane.b32.xlu0 %v3850, 118
    %v3855 = vpop.permute.xlu0 %3854
    %3856 = vrot.lane.b32.xlu0 %v3851, 118
    %v3857 = vpop.permute.xlu0 %3856
    %vm3860 = vcmask 80900
    %v3861 = vsel %vm3860, %v3855, 0.0
    %3862 = vadd.xlane.f32.xlu0 %v3861
    %v3863 = vpop.xlane.xlu0 %3862
    %vm3864 = vcmask 73728
    %v3865 = vsel %vm3864, %v3857, 0.0
    %3866 = vadd.xlane.f32.xlu0 %v3865
    %v3867 = vpop.xlane.xlu0 %3866
    %v3869 = vrot.slane %v3562, 4
    %3870 = vrot.lane.b32.xlu0 %v3869, 75
    %v3871 = vpop.permute.xlu0 %3870
    %v3873 = vadd.f32 %v3863, %v3871
    %v3874 = vadd.f32 %v3867, %v3871
    %v3875 = vtanh.pop %v3873
    %v3876 = vtanh.pop %v3874
    %3878 = vset.pattern.permute.xlu0 0
    %3879 = vperm.xlu0 %3878, %v3875
    %v3880 = vpop.permute.xlu0 %3879
    %3883 = vset.pattern.permute.xlu0 0
    %3884 = vperm.xlu0 %3883, %v3876
    %v3885 = vpop.permute.xlu0 %3884
    %v3887 = vmul.f32 %v3560, %v3880
    %v3888 = vmul.f32 %v3561, %v3885
    %v3891 = vrot.slane %v3887, 4
    %v3892 = vrot.slane %v3888, 4
    %v3893 = vsel %vm396, %v3891, %v3892
    %vm3895 = vcmask 184480
    %v3896 = vsel %vm3895, %v3893, 0.0
    %v3897 = vrot.slane %v3896, 4
    %v3898 = vadd.f32 %v3896, %v3897
    %v3899 = vrot.slane %v3898, 2
    %v3900 = vadd.f32 %v3898, %v3899
    %v3901 = vrot.slane %v3900, 1
    %v3902 = vadd.f32 %v3900, %v3901
    %3904 = vrot.lane.b32.xlu0 %v3563, 10
    %v3905 = vpop.permute.xlu0 %3904
    %v3907 = vadd.f32 %v3902, %v3905
    %v3909 = vsel %vm383, %v3524, 0
    %v3912 = vsel %vm383, %v3528, 0
    %3914 = vmatpush.msra.mxu0 %v3544
    %3915 = vmatpush.msra.mxu0 %v3543
    %3916 = vmatpush.msra.mxu0 %v3542
    %3917 = vmatpush.msra.mxu0 %v3541
    %3918 = vmatpush.msra.mxu0 %v3540
    %3919 = vmatpush.msra.mxu0 %v3539
    %3920 = vmatpush.msra.mxu0 %v3538
    %3921 = vmatpush.msra.mxu0 %v3537
    %3922 = vmatpush.msra.mxu0 %v3536
    %3923 = vmatpush.msra.mxu0 %v3535
    %3924 = vmatpush.msra.mxu0 %v3534
    %3925 = vmatpush.msra.mxu0 %v3533
    %3926 = vmatpush.msra.mxu0 %v3532
    %3927 = vmatpush.msra.mxu0 %v3531
    %3928 = vmatpush.msra.mxu0 %v3530
    %3929 = vmatpush.msra.mxu0 %v3529
    %3930 = vmatmul.f32.gmra.mxu0 %v3523
    %v3931 = vpop.f32.mrf.mxu0
    %v3932 = vadd.f32 0.0, %v3931
    %3933 = vmatmul.f32.gmra.mxu0 %v3527
    %v3934 = vpop.f32.mrf.mxu0
    %v3935 = vadd.f32 0.0, %v3934
    %3936 = vdwg.mxu0
    %3937 = vmatpush.msra.mxu0 0.0
    %3938 = vmatpush.msra.mxu0 0.0
    %3939 = vmatpush.msra.mxu0 0.0
    %3940 = vmatpush.msra.mxu0 0.0
    %3941 = vmatpush.msra.mxu0 0.0
    %3942 = vmatpush.msra.mxu0 %v3572
    %3943 = vmatpush.msra.mxu0 %v3554
    %3944 = vmatpush.msra.mxu0 %v3553
    %3945 = vmatpush.msra.mxu0 %v3552
    %3946 = vmatpush.msra.mxu0 %v3551
    %3947 = vmatpush.msra.mxu0 %v3550
    %3948 = vmatpush.msra.mxu0 %v3549
    %3949 = vmatpush.msra.mxu0 %v3548
    %3950 = vmatpush.msra.mxu0 %v3547
    %3951 = vmatpush.msra.mxu0 %v3546
    %3952 = vmatpush.msra.mxu0 %v3545
    %3953 = vmatmul.f32.gmra.mxu0 %v3909
    %v3954 = vpop.f32.mrf.mxu0
    %v3955 = vadd.f32 %v3932, %v3954
    %3956 = vmatmul.f32.gmra.mxu0 %v3912
    %v3957 = vpop.f32.mrf.mxu0
    %v3958 = vadd.f32 %v3935, %v3957
    %3959 = vdwg.mxu0
    %v3960 = vmax.f32 %v3955, 1e-06
    %v3961 = vmax.f32 %v3958, 1e-06
    %v3962 = vlog2.pop %v3960
    %v3963 = vmul.f32 %v3962, 0.6931472
    %v3964 = vlog2.pop %v3961
    %v3965 = vmul.f32 %v3964, 0.6931472
    %3967 = vset.pattern.permute.xlu0 0
    %3968 = vperm.xlu0 %3967, %v3963
    %v3969 = vpop.permute.xlu0 %3968
    %3972 = vset.pattern.permute.xlu0 0
    %3973 = vperm.xlu0 %3972, %v3965
    %v3974 = vpop.permute.xlu0 %3973
    %v3976 = vmul.f32 %v3969, %v3529
    %v3977 = vmul.f32 %v3974, %v3557
    %3978 = vset.pattern.permute.xlu0 1
    %3979 = vperm.xlu0 %3978, %v3963
    %v3980 = vpop.permute.xlu0 %3979
    %3982 = vset.pattern.permute.xlu0 1
    %3983 = vperm.xlu0 %3982, %v3965
    %v3984 = vpop.permute.xlu0 %3983
    %v3986 = vmul.f32 %v3980, %v3529
    %v3987 = vmul.f32 %v3984, %v3557
    %3990 = vrot.lane.b32.xlu0 %v3986, 118
    %v3991 = vpop.permute.xlu0 %3990
    %3992 = vrot.lane.b32.xlu0 %v3987, 118
    %v3993 = vpop.permute.xlu0 %3992
    %v3996 = vadd.f32 %v3976, %v3991
    %v3997 = vadd.f32 %v3977, %v3993
    %3998 = vset.pattern.permute.xlu0 2
    %3999 = vperm.xlu0 %3998, %v3963
    %v4000 = vpop.permute.xlu0 %3999
    %4002 = vset.pattern.permute.xlu0 2
    %4003 = vperm.xlu0 %4002, %v3965
    %v4004 = vpop.permute.xlu0 %4003
    %v4006 = vmul.f32 %v4000, %v3529
    %v4007 = vmul.f32 %v4004, %v3557
    %4010 = vrot.lane.b32.xlu0 %v4006, 108
    %v4011 = vpop.permute.xlu0 %4010
    %4012 = vrot.lane.b32.xlu0 %v4007, 108
    %v4013 = vpop.permute.xlu0 %4012
    %v4016 = vadd.f32 %v3996, %v4011
    %v4017 = vadd.f32 %v3997, %v4013
    %4018 = vset.pattern.permute.xlu0 3
    %4019 = vperm.xlu0 %4018, %v3963
    %v4020 = vpop.permute.xlu0 %4019
    %4022 = vset.pattern.permute.xlu0 3
    %4023 = vperm.xlu0 %4022, %v3965
    %v4024 = vpop.permute.xlu0 %4023
    %v4026 = vmul.f32 %v4020, %v3529
    %v4027 = vmul.f32 %v4024, %v3557
    %4030 = vrot.lane.b32.xlu0 %v4026, 98
    %v4031 = vpop.permute.xlu0 %4030
    %4032 = vrot.lane.b32.xlu0 %v4027, 98
    %v4033 = vpop.permute.xlu0 %4032
    %v4036 = vadd.f32 %v4016, %v4031
    %v4037 = vadd.f32 %v4017, %v4033
    %4038 = vset.pattern.permute.xlu0 4
    %4039 = vperm.xlu0 %4038, %v3963
    %v4040 = vpop.permute.xlu0 %4039
    %4042 = vset.pattern.permute.xlu0 4
    %4043 = vperm.xlu0 %4042, %v3965
    %v4044 = vpop.permute.xlu0 %4043
    %v4046 = vmul.f32 %v4040, %v3529
    %v4047 = vmul.f32 %v4044, %v3557
    %4050 = vrot.lane.b32.xlu0 %v4046, 88
    %v4051 = vpop.permute.xlu0 %4050
    %4052 = vrot.lane.b32.xlu0 %v4047, 88
    %v4053 = vpop.permute.xlu0 %4052
    %v4056 = vadd.f32 %v4036, %v4051
    %v4057 = vadd.f32 %v4037, %v4053
    %4058 = vset.pattern.permute.xlu0 5
    %4059 = vperm.xlu0 %4058, %v3963
    %v4060 = vpop.permute.xlu0 %4059
    %4062 = vset.pattern.permute.xlu0 5
    %4063 = vperm.xlu0 %4062, %v3965
    %v4064 = vpop.permute.xlu0 %4063
    %v4066 = vmul.f32 %v4060, %v3529
    %v4067 = vmul.f32 %v4064, %v3557
    %4070 = vrot.lane.b32.xlu0 %v4066, 78
    %v4071 = vpop.permute.xlu0 %4070
    %4072 = vrot.lane.b32.xlu0 %v4067, 78
    %v4073 = vpop.permute.xlu0 %4072
    %v4076 = vadd.f32 %v4056, %v4071
    %v4077 = vadd.f32 %v4057, %v4073
    %4078 = vset.pattern.permute.xlu0 6
    %4079 = vperm.xlu0 %4078, %v3963
    %v4080 = vpop.permute.xlu0 %4079
    %4082 = vset.pattern.permute.xlu0 6
    %4083 = vperm.xlu0 %4082, %v3965
    %v4084 = vpop.permute.xlu0 %4083
    %v4086 = vmul.f32 %v4080, %v3529
    %v4087 = vmul.f32 %v4080, %v3556
    %v4088 = vmul.f32 %v4084, %v3557
    %v4089 = vmul.f32 %v4084, %v3558
    %4094 = vrot.lane.b32.xlu0 %v4086, 68
    %v4095 = vpop.permute.xlu0 %4094
    %4096 = vrot.lane.b32.xlu0 %v4087, 68
    %v4097 = vpop.permute.xlu0 %4096
    %4098 = vrot.lane.b32.xlu0 %v4088, 68
    %v4099 = vpop.permute.xlu0 %4098
    %4100 = vrot.lane.b32.xlu0 %v4089, 68
    %v4101 = vpop.permute.xlu0 %4100
    %v4102 = vsel %vm3762, %v4095, %v4097
    %v4103 = vsel %vm3762, %v4099, %v4101
    %v4106 = vadd.f32 %v4076, %v4102
    %v4107 = vadd.f32 %v4077, %v4103
    %4108 = vset.pattern.permute.xlu0 7
    %4109 = vperm.xlu0 %4108, %v3963
    %v4110 = vpop.permute.xlu0 %4109
    %4112 = vset.pattern.permute.xlu0 7
    %4113 = vperm.xlu0 %4112, %v3965
    %v4114 = vpop.permute.xlu0 %4113
    %v4116 = vmul.f32 %v4110, %v3556
    %v4117 = vmul.f32 %v4114, %v3558
    %4120 = vrot.lane.b32.xlu0 %v4116, 58
    %v4121 = vpop.permute.xlu0 %4120
    %4122 = vrot.lane.b32.xlu0 %v4117, 58
    %v4123 = vpop.permute.xlu0 %4122
    %v4126 = vadd.f32 %v4106, %v4121
    %v4127 = vadd.f32 %v4107, %v4123
    %4128 = vset.pattern.permute.xlu0 8
    %4129 = vperm.xlu0 %4128, %v3963
    %v4130 = vpop.permute.xlu0 %4129
    %4132 = vset.pattern.permute.xlu0 8
    %4133 = vperm.xlu0 %4132, %v3965
    %v4134 = vpop.permute.xlu0 %4133
    %v4136 = vmul.f32 %v4130, %v3556
    %v4137 = vmul.f32 %v4134, %v3558
    %4140 = vrot.lane.b32.xlu0 %v4136, 48
    %v4141 = vpop.permute.xlu0 %4140
    %4142 = vrot.lane.b32.xlu0 %v4137, 48
    %v4143 = vpop.permute.xlu0 %4142
    %v4146 = vadd.f32 %v4126, %v4141
    %v4147 = vadd.f32 %v4127, %v4143
    %4148 = vset.pattern.permute.xlu0 9
    %4149 = vperm.xlu0 %4148, %v3963
    %v4150 = vpop.permute.xlu0 %4149
    %4152 = vset.pattern.permute.xlu0 9
    %4153 = vperm.xlu0 %4152, %v3965
    %v4154 = vpop.permute.xlu0 %4153
    %v4156 = vmul.f32 %v4150, %v3556
    %v4157 = vmul.f32 %v4154, %v3558
    %4160 = vrot.lane.b32.xlu0 %v4156, 38
    %v4161 = vpop.permute.xlu0 %4160
    %4162 = vrot.lane.b32.xlu0 %v4157, 38
    %v4163 = vpop.permute.xlu0 %4162
    %v4166 = vadd.f32 %v4146, %v4161
    %v4167 = vadd.f32 %v4147, %v4163
    %v4168 = vsel %vm3829, %v4166, 0.0
    %v4169 = vsel %vm3831, %v4167, 0.0
    %v4170 = vadd.f32 %v4168, %v4169
    %v4171 = vrot.slane %v4170, 4
    %v4172 = vadd.f32 %v4170, %v4171
    %v4173 = vrot.slane %v4172, 2
    %v4174 = vadd.f32 %v4172, %v4173
    %v4175 = vrot.slane %v4174, 1
    %v4176 = vadd.f32 %v4174, %v4175
    %v4177 = vadd.f32 %v4176, %v3842
    %v4178 = vperm.slane %v4177, 0
    %4180 = vrot.lane.b32.xlu0 %v4178, 78
    %v4181 = vpop.permute.xlu0 %4180
    %v4183 = vmul.f32 %v3560, %v4181
    %v4184 = vmul.f32 %v3561, %v4181
    %4187 = vrot.lane.b32.xlu0 %v4183, 118
    %v4188 = vpop.permute.xlu0 %4187
    %4189 = vrot.lane.b32.xlu0 %v4184, 118
    %v4190 = vpop.permute.xlu0 %4189
    %v4193 = vsel %vm3860, %v4188, 0.0
    %4194 = vadd.xlane.f32.xlu0 %v4193
    %v4195 = vpop.xlane.xlu0 %4194
    %v4196 = vsel %vm3864, %v4190, 0.0
    %4197 = vadd.xlane.f32.xlu0 %v4196
    %v4198 = vpop.xlane.xlu0 %4197
    %v4199 = vadd.f32 %v4195, %v3871
    %v4200 = vadd.f32 %v4198, %v3871
    %v4201 = vtanh.pop %v4199
    %v4202 = vtanh.pop %v4200
    %4204 = vset.pattern.permute.xlu0 0
    %4205 = vperm.xlu0 %4204, %v4201
    %v4206 = vpop.permute.xlu0 %4205
    %4209 = vset.pattern.permute.xlu0 0
    %4210 = vperm.xlu0 %4209, %v4202
    %v4211 = vpop.permute.xlu0 %4210
    %v4213 = vmul.f32 %v3560, %v4206
    %v4214 = vmul.f32 %v3561, %v4211
    %v4217 = vrot.slane %v4213, 4
    %v4218 = vrot.slane %v4214, 4
    %v4219 = vsel %vm396, %v4217, %v4218
    %v4221 = vsel %vm3895, %v4219, 0.0
    %v4222 = vrot.slane %v4221, 4
    %v4223 = vadd.f32 %v4221, %v4222
    %v4224 = vrot.slane %v4223, 2
    %v4225 = vadd.f32 %v4223, %v4224
    %v4226 = vrot.slane %v4225, 1
    %v4227 = vadd.f32 %v4225, %v4226
    %v4228 = vadd.f32 %v4227, %v3905
    %v4230 = vrot.slane %v4228, 7
    %vm4232 = vcmask 1040384
    %v4233 = vsel %vm4232, %v3907, %v4230
    %4235 = vrot.lane.b32.xlu0 %v4233, 108
    %v4236 = vpop.permute.xlu0 %4235
    %vm4238 = vcmask 17408
    %4239 = vst.msk [vmem:[#allocation3] sm:$0x3] %vm4238, %v4236
    // Predicated region
    $region18: #{fwd.1} parent=1 // pred_check
      _
    $region19: #{fwd.1} parent=1 // pred_check_branch
      %4241 = sbr.rel (0) target = $region21
    $region20: #{fwd.1} parent=1 // pred_region
      %4243 = vsyncadd [#allocation4], 0
      %s4245 = sshll.u32 [#allocation3], 4
      %s4246 = int_to_ptr.vmem [resolvable:$true] %s4245
      %s4247 = sshll.u32 %s4, 4
      %s4248 = int_to_ptr.hbm [resolvable:$true] %s4247
      %4250 = dma.vmem_to_hbm [thread:$0]  %s4246, 32, %s4248, [#allocation4]
    $region21: #{fwd.1} parent=1 // pred_fallthru
      _
    // Predicated region
    $region22: #{fwd.1} parent=1 // pred_check
      _
    $region23: #{fwd.1} parent=1 // pred_check_branch
      %4252 = sbr.rel (0) target = $region25
    $region24: #{fwd.1} parent=1 // pred_region
      %4254 = dma.done [#allocation4], 32
    $region25: #{fwd.1} parent=1 // pred_fallthru
      _
    %4255 = vsyncpa [#allocation4], 1

</llo_original>
